<compile_context>
chip_gen: v7x
topology: tpu7x:2x2x1
jax: 0.10.0
libtpu: 0.0.40
codegen_flags: <defaults>
</compile_context>

<pallas_src>
import numpy as np

import jax
import jax.numpy as jnp
from jax.experimental import pallas as pl
from jax.experimental.pallas import tpu as pltpu


_VMEM = pl.BlockSpec(memory_space=pltpu.MemorySpace.VMEM)


# ---------------------------------------------------------------------------
# Fused Pallas kernel: conv1+pool+relu -> conv2+pool+relu -> fc1+relu -> fc2 -> log_softmax
# ---------------------------------------------------------------------------
def letnet5_kernel(q_ref, w1_ref, b1_ref, w2_ref, b2_ref,
                   wf1_ref, bf1_ref, wf2_ref, bf2_ref, o_ref):
    """Whole LetNet5 forward in one kernel invocation.

    q_ref  : (4, 625, 160)  conv1 input patches replicated into conv2's im2col layout
                            rows = (k1, k2), cols = (t2_pool_offset, n, i2, j2)
    w1_ref : (150, 625)     replicated conv1 weight, rows (k2, ci), cols (k1, k2)
    b1_ref : (150, 1)       conv1 bias replicated per k2 group
    w2_ref : (16, 150)      conv2 weight, cols (k2, ci)
    b2_ref : (16, 1)
    wf1_ref: (120, 84)      fc1 weight (transposed), only the 120 real inputs
    bf1_ref: (1, 84)
    wf2_ref: (84, 10)
    bf2_ref: (1, 10)
    o_ref  : (N, 10)        log-probabilities
    """
    # ---- conv1 (in conv2-patch layout) + 2x2 max-pool + bias + ReLU -------------------
    w1 = w1_ref[...]
    z00 = jnp.dot(w1, q_ref[0], preferred_element_type=jnp.float32)
    z01 = jnp.dot(w1, q_ref[1], preferred_element_type=jnp.float32)
    z10 = jnp.dot(w1, q_ref[2], preferred_element_type=jnp.float32)
    z11 = jnp.dot(w1, q_ref[3], preferred_element_type=jnp.float32)
    # max tree over the 4 conv1 pool offsets; bias once after the max (exact).
    y1 = jnp.maximum(
        jnp.maximum(jnp.maximum(z00, z01), jnp.maximum(z10, z11)) + b1_ref[...], 0.0)

    # ---- conv2 as a SINGLE matmul; its 2x2 max-pool = max over 4 column groups --------
    z2 = jnp.dot(w2_ref[...], y1, preferred_element_type=jnp.float32)   # (16, 4*N*hw)
    m = z2.shape[1] // 4
    z2p = jnp.maximum(jnp.maximum(z2[:, 0:m], z2[:, m:2 * m]),
                      jnp.maximum(z2[:, 2 * m:3 * m], z2[:, 3 * m:4 * m]))
    y2 = jnp.maximum(z2p + b2_ref[...], 0.0)                            # (16, N*hw)

    # ---- flatten (NCHW order, first 120 features) -> ONE fc1 matmul --------------------
    n_img = o_ref.shape[0]
    hw = m // n_img
    c_used = wf1_ref.shape[0] // hw                                     # 120 // 20 = 6
    f = jnp.concatenate(
        [jnp.concatenate([y2[c:c + 1, n * hw:(n + 1) * hw] for c in range(c_used)],
                         axis=1)
         for n in range(n_img)], axis=0)                                # (N, 120)
    h = jnp.maximum(
        jnp.dot(f, wf1_ref[...], preferred_element_type=jnp.float32) + bf1_ref[...], 0.0)

    # TODO(synk): nn.Dropout2d / F.dropout are stochastic; inference-mode identity here.

    # ---- fc2 + log_softmax, batched over the whole (N, 84) block ----------------------
    logits = jnp.dot(h, wf2_ref[...], preferred_element_type=jnp.float32) + bf2_ref[...]
    zc = logits - jnp.max(logits, axis=-1, keepdims=True)
    o_ref[...] = (zc - jnp.log(jnp.sum(jnp.exp(zc), axis=-1, keepdims=True))
                  ).astype(o_ref.dtype)


# ---------------------------------------------------------------------------
# Host-side data plumbing
# ---------------------------------------------------------------------------
def _conv1_pool_patches(x, k=5, pool=2):
    """x: (N, 1, H, W) -> (4, k*k, N*Hp*Wp) transposed im2col slabs, one per conv1
    2x2-pool offset; columns ordered n*Hp*Wp + r*Wp + c over conv1's POOLED grid."""
    N, C, H, W = x.shape
    assert C == 1
    Ho, Wo = H - k + 1, W - k + 1
    Hp, Wp = Ho // pool, Wo // pool
    slabs = []
    for a in range(pool):
        for b in range(pool):
            cols = [x[:, 0, a + dy: a + dy + pool * Hp: pool,
                       b + dx: b + dx + pool * Wp: pool]            # (N, Hp, Wp)
                    for dy in range(k) for dx in range(k)]
            slabs.append(jnp.stack(cols, axis=0).reshape(k * k, N * Hp * Wp))
    return jnp.stack(slabs, axis=0), (Hp, Wp)


def _conv2_patch_colmap(N, Hp1, Wp1, Hp2, Wp2, k=5):
    """Static (k*k, 4*N*Hp2*Wp2) int32 map: for conv2 kernel-offset row k2 and fused
    column (t2, n, i2, j2), the conv1 pooled-grid column (n*Hp1*Wp1 + r*Wp1 + c) that
    conv2's im2col needs."""
    dy2 = np.repeat(np.arange(k), k)[:, None]          # (25, 1)
    dx2 = np.tile(np.arange(k), k)[:, None]
    a2 = np.repeat(np.arange(2), 2)                    # t2 = a2*2 + b2
    b2 = np.tile(np.arange(2), 2)
    nn, ii, jj = np.meshgrid(np.arange(N), np.arange(Hp2), np.arange(Wp2), indexing="ij")
    nn, ii, jj = nn.ravel(), ii.ravel(), jj.ravel()
    a2c = np.repeat(a2, nn.size)
    b2c = np.repeat(b2, nn.size)
    nc, ic, jc = (np.tile(v, 4) for v in (nn, ii, jj))
    r = 2 * ic[None, :] + a2c[None, :] + dy2           # (25, 4*N*Hp2*Wp2)
    c = 2 * jc[None, :] + b2c[None, :] + dx2
    return (nc[None, :] * (Hp1 * Wp1) + r * Wp1 + c).astype(np.int32)


def pack_params(params):
    """One-time weight packing (run OUTSIDE the jitted forward)."""
    (w_c1, b_c1, w_c2, b_c2, w_fc1, b_fc1, w_fc2, b_fc2) = params
    k = w_c1.shape[-1]
    kk = k * k
    c1 = w_c1.shape[0]
    c2 = w_c2.shape[0]

    w1m = w_c1.reshape(c1, kk).astype(jnp.float32)                      # (6, 25)
    # Replicated block-diagonal conv1 weight: rows (k2, ci), cols (k1, k2).
    w1bd = jnp.kron(jnp.eye(kk, dtype=jnp.float32), w1m)                # cols (k2, k1)
    w1bd = (w1bd.reshape(kk * c1, kk, kk).swapaxes(1, 2)                # -> cols (k1, k2)
            .reshape(kk * c1, kk * kk))
    b1bd = jnp.tile(b_c1.astype(jnp.float32), kk).reshape(kk * c1, 1)

    # conv2 weight as (16, 150), columns ordered (k2, ci) to match y1's rows.
    w2m = jnp.transpose(w_c2.astype(jnp.float32), (0, 2, 3, 1)).reshape(c2, kk * c1)
    b2c = b_c2.reshape(c2, 1).astype(jnp.float32)

    wf1 = w_fc1.T.astype(jnp.float32)                                   # (120, 84)
    bf1 = b_fc1.reshape(1, -1).astype(jnp.float32)
    wf2 = w_fc2.T.astype(jnp.float32)                                   # (84, 10)
    bf2 = b_fc2.reshape(1, -1).astype(jnp.float32)
    return (w1bd, b1bd, w2m, b2c, wf1, bf1, wf2, bf2)


@jax.jit
def letnet5_forward(x, packed):
    (w1bd, b1bd, w2m, b2c, wf1, bf1, wf2, bf2) = packed
    x = x.astype(jnp.float32)
    N = x.shape[0]
    k = 5
    kk = k * k

    # conv1 im2col over its pooled output grid (4 pool-offset slabs).
    p1, (Hp1, Wp1) = _conv1_pool_patches(x, k)
    Hp2, Wp2 = (Hp1 - (k - 1)) // 2, (Wp1 - (k - 1)) // 2
    hw2 = Hp2 * Wp2
    assert wf1.shape[0] % hw2 == 0 and wf1.shape[0] // hw2 <= w2m.shape[0]

    # Expand conv1's patches into conv2's im2col layout (rows (k1, k2), cols (t2, n, i2, j2))
    # with a single lane-axis gather; the kernel then needs NO in-kernel gathers/reshapes.
    colmap = _conv2_patch_colmap(N, Hp1, Wp1, Hp2, Wp2, k)              # np constant
    m2 = colmap.shape[1]
    q = jnp.take(p1, jnp.asarray(colmap.reshape(-1)), axis=2)           # (4, 25, 25*m2)
    q = q.reshape(4, kk, kk, m2).reshape(4, kk * kk, m2)                # (4, 625, m2)

    return pl.pallas_call(
        letnet5_kernel,
        out_shape=jax.ShapeDtypeStruct((N, wf2.shape[1]), jnp.float32),
        in_specs=[_VMEM] * 9,
        out_specs=_VMEM,
    )(q, w1bd, b1bd, w2m, b2c, wf1, bf1, wf2, bf2)


# ---------------------------------------------------------------------------
# Pure-JAX reference (for correctness check)
# ---------------------------------------------------------------------------
def ref_forward(x, params):
    (w_c1, b_c1, w_c2, b_c2, w_fc1, b_fc1, w_fc2, b_fc2) = params

    def conv(h, w, b):
        y = jax.lax.conv_general_dilated(
            h, w, (1, 1), "VALID", dimension_numbers=("NCHW", "OIHW", "NCHW"))
        return y + b[None, :, None, None]

    def pool(h):
        N, C, H, W = h.shape
        return h.reshape(N, C, H // 2, 2, W // 2, 2).max(axis=(3, 5))

    h = jax.nn.relu(pool(conv(x, w_c1, b_c1)))
    h = jax.nn.relu(pool(conv(h, w_c2, b_c2)))
    f = h.reshape(h.shape[0], -1)                     # (N, 320) NCHW flatten
    hfc = jax.nn.relu(f[:, :120] @ w_fc1.T + b_fc1)   # zero-padded crossbar columns
    logits = hfc @ w_fc2.T + b_fc2
    return jax.nn.log_softmax(logits, axis=1)


# ---------------------------------------------------------------------------
if __name__ == "__main__":
    key = jax.random.PRNGKey(0)
    ks = jax.random.split(key, 9)

    # Deterministic synthetic parameters (shapes from the module's __init__).
    w_c1 = 0.1 * jax.random.normal(ks[0], (6, 1, 5, 5), jnp.float32)
    b_c1 = 0.1 * jax.random.normal(ks[1], (6,), jnp.float32)
    w_c2 = 0.1 * jax.random.normal(ks[2], (16, 6, 5, 5), jnp.float32)
    b_c2 = 0.1 * jax.random.normal(ks[3], (16,), jnp.float32)
    w_fc1 = 0.1 * jax.random.normal(ks[4], (84, 120), jnp.float32)
    b_fc1 = 0.1 * jax.random.normal(ks[5], (84,), jnp.float32)
    w_fc2 = 0.1 * jax.random.normal(ks[6], (10, 84), jnp.float32)
    b_fc2 = 0.1 * jax.random.normal(ks[7], (10,), jnp.float32)
    # (conv3 = crxb_Conv2d(16, 120, 5) is declared in __init__ but never used in forward.)

    # Input: NCHW, 1 channel; spatial (32, 28) so that after conv(5)/pool/conv(5)/pool the
    # flatten is exactly 16*5*4 = 320, matching x.view(-1, 320) with batch preserved.
    x = jax.random.normal(ks[8], (2, 1, 32, 28), jnp.float32)

    params = (w_c1, b_c1, w_c2, b_c2, w_fc1, b_fc1, w_fc2, b_fc2)
    packed = pack_params(params)          # weight packing once, outside the jitted forward

    out = jax.block_until_ready(letnet5_forward(x, packed))

    ref = ref_forward(x, params)
    assert out.shape == (2, 10), out.shape
    assert bool(jnp.allclose(out, ref, rtol=1e-3, atol=1e-3)), (out, ref)

    print("KERNEL_OK")
</pallas_src>

<mosaic_0001>
module attributes {stable_mosaic.version = 11 : i64} {
  func.func @letnet5_kernel(%arg0: memref<4x625x160xf32, #tpu.memory_space<vmem>>, %arg1: memref<150x625xf32, #tpu.memory_space<vmem>>, %arg2: memref<150x1xf32, #tpu.memory_space<vmem>>, %arg3: memref<16x150xf32, #tpu.memory_space<vmem>>, %arg4: memref<16x1xf32, #tpu.memory_space<vmem>>, %arg5: memref<120x84xf32, #tpu.memory_space<vmem>>, %arg6: memref<1x84xf32, #tpu.memory_space<vmem>>, %arg7: memref<84x10xf32, #tpu.memory_space<vmem>>, %arg8: memref<1x10xf32, #tpu.memory_space<vmem>>, %arg9: memref<2x10xf32, #tpu.memory_space<vmem>>) attributes {dimension_semantics = [], scalar_prefetch = 0 : i64, scratch_operands = 0 : i64, tpu.core_type = #tpu.core_type<tc>} {
    %c0 = arith.constant 0 : index
    %c0_0 = arith.constant 0 : index
    %0 = vector.load %arg1[%c0, %c0_0] : memref<150x625xf32, #tpu.memory_space<vmem>>, vector<150x625xf32>
    %c0_1 = arith.constant 0 : index
    %c0_2 = arith.constant 0 : index
    %c0_3 = arith.constant 0 : index
    %1 = vector.load %arg0[%c0_1, %c0_2, %c0_3] : memref<4x625x160xf32, #tpu.memory_space<vmem>>, vector<1x625x160xf32>
    %2 = vector.shape_cast %1 : vector<1x625x160xf32> to vector<625x160xf32>
    %cst = arith.constant dense<0.000000e+00> : vector<150x160xf32>
    %3 = tpu.matmul %0, %2, %cst {dimension_numbers = #tpu.dot_dimension_numbers<[1], [0], [0], [1], [0, 0, 1, 1], [], []>} : vector<150x625xf32>, vector<625x160xf32>, vector<150x160xf32> -> vector<150x160xf32>
    %c1 = arith.constant 1 : index
    %c0_4 = arith.constant 0 : index
    %c0_5 = arith.constant 0 : index
    %4 = vector.load %arg0[%c1, %c0_4, %c0_5] : memref<4x625x160xf32, #tpu.memory_space<vmem>>, vector<1x625x160xf32>
    %5 = vector.shape_cast %4 : vector<1x625x160xf32> to vector<625x160xf32>
    %cst_6 = arith.constant dense<0.000000e+00> : vector<150x160xf32>
    %6 = tpu.matmul %0, %5, %cst_6 {dimension_numbers = #tpu.dot_dimension_numbers<[1], [0], [0], [1], [0, 0, 1, 1], [], []>} : vector<150x625xf32>, vector<625x160xf32>, vector<150x160xf32> -> vector<150x160xf32>
    %c2 = arith.constant 2 : index
    %c0_7 = arith.constant 0 : index
    %c0_8 = arith.constant 0 : index
    %7 = vector.load %arg0[%c2, %c0_7, %c0_8] : memref<4x625x160xf32, #tpu.memory_space<vmem>>, vector<1x625x160xf32>
    %8 = vector.shape_cast %7 : vector<1x625x160xf32> to vector<625x160xf32>
    %cst_9 = arith.constant dense<0.000000e+00> : vector<150x160xf32>
    %9 = tpu.matmul %0, %8, %cst_9 {dimension_numbers = #tpu.dot_dimension_numbers<[1], [0], [0], [1], [0, 0, 1, 1], [], []>} : vector<150x625xf32>, vector<625x160xf32>, vector<150x160xf32> -> vector<150x160xf32>
    %c3 = arith.constant 3 : index
    %c0_10 = arith.constant 0 : index
    %c0_11 = arith.constant 0 : index
    %10 = vector.load %arg0[%c3, %c0_10, %c0_11] : memref<4x625x160xf32, #tpu.memory_space<vmem>>, vector<1x625x160xf32>
    %11 = vector.shape_cast %10 : vector<1x625x160xf32> to vector<625x160xf32>
    %cst_12 = arith.constant dense<0.000000e+00> : vector<150x160xf32>
    %12 = tpu.matmul %0, %11, %cst_12 {dimension_numbers = #tpu.dot_dimension_numbers<[1], [0], [0], [1], [0, 0, 1, 1], [], []>} : vector<150x625xf32>, vector<625x160xf32>, vector<150x160xf32> -> vector<150x160xf32>
    %13 = arith.maximumf %3, %6 : vector<150x160xf32>
    %14 = arith.maximumf %9, %12 : vector<150x160xf32>
    %15 = arith.maximumf %13, %14 : vector<150x160xf32>
    %c0_13 = arith.constant 0 : index
    %c0_14 = arith.constant 0 : index
    %16 = vector.load %arg2[%c0_13, %c0_14] : memref<150x1xf32, #tpu.memory_space<vmem>>, vector<150x1xf32>
    %17 = vector.broadcast %16 : vector<150x1xf32> to vector<150x160xf32>
    %18 = arith.addf %15, %17 : vector<150x160xf32>
    %cst_15 = arith.constant 0.000000e+00 : f32
    %19 = vector.broadcast %cst_15 : f32 to vector<150x160xf32>
    %20 = arith.maximumf %18, %19 : vector<150x160xf32>
    %c0_16 = arith.constant 0 : index
    %c0_17 = arith.constant 0 : index
    %21 = vector.load %arg3[%c0_16, %c0_17] : memref<16x150xf32, #tpu.memory_space<vmem>>, vector<16x150xf32>
    %cst_18 = arith.constant dense<0.000000e+00> : vector<16x160xf32>
    %22 = tpu.matmul %21, %20, %cst_18 {dimension_numbers = #tpu.dot_dimension_numbers<[1], [0], [0], [1], [0, 0, 1, 1], [], []>} : vector<16x150xf32>, vector<150x160xf32>, vector<16x160xf32> -> vector<16x160xf32>
    %23 = vector.extract_strided_slice %22 {offsets = [0, 0], sizes = [16, 40], strides = [1, 1]} : vector<16x160xf32> to vector<16x40xf32>
    %24 = vector.extract_strided_slice %22 {offsets = [0, 40], sizes = [16, 40], strides = [1, 1]} : vector<16x160xf32> to vector<16x40xf32>
    %25 = arith.maximumf %23, %24 : vector<16x40xf32>
    %26 = vector.extract_strided_slice %22 {offsets = [0, 80], sizes = [16, 40], strides = [1, 1]} : vector<16x160xf32> to vector<16x40xf32>
    %27 = vector.extract_strided_slice %22 {offsets = [0, 120], sizes = [16, 40], strides = [1, 1]} : vector<16x160xf32> to vector<16x40xf32>
    %28 = arith.maximumf %26, %27 : vector<16x40xf32>
    %29 = arith.maximumf %25, %28 : vector<16x40xf32>
    %c0_19 = arith.constant 0 : index
    %c0_20 = arith.constant 0 : index
    %30 = vector.load %arg4[%c0_19, %c0_20] : memref<16x1xf32, #tpu.memory_space<vmem>>, vector<16x1xf32>
    %31 = vector.broadcast %30 : vector<16x1xf32> to vector<16x40xf32>
    %32 = arith.addf %29, %31 : vector<16x40xf32>
    %cst_21 = arith.constant 0.000000e+00 : f32
    %33 = vector.broadcast %cst_21 : f32 to vector<16x40xf32>
    %34 = arith.maximumf %32, %33 : vector<16x40xf32>
    %35 = vector.extract_strided_slice %34 {offsets = [0, 0], sizes = [1, 20], strides = [1, 1]} : vector<16x40xf32> to vector<1x20xf32>
    %36 = vector.extract_strided_slice %34 {offsets = [1, 0], sizes = [1, 20], strides = [1, 1]} : vector<16x40xf32> to vector<1x20xf32>
    %37 = vector.extract_strided_slice %34 {offsets = [2, 0], sizes = [1, 20], strides = [1, 1]} : vector<16x40xf32> to vector<1x20xf32>
    %38 = vector.extract_strided_slice %34 {offsets = [3, 0], sizes = [1, 20], strides = [1, 1]} : vector<16x40xf32> to vector<1x20xf32>
    %39 = vector.extract_strided_slice %34 {offsets = [4, 0], sizes = [1, 20], strides = [1, 1]} : vector<16x40xf32> to vector<1x20xf32>
    %40 = vector.extract_strided_slice %34 {offsets = [5, 0], sizes = [1, 20], strides = [1, 1]} : vector<16x40xf32> to vector<1x20xf32>
    %41 = tpu.concatenate %35, %36, %37, %38, %39, %40 in 1 : vector<1x20xf32>, vector<1x20xf32>, vector<1x20xf32>, vector<1x20xf32>, vector<1x20xf32>, vector<1x20xf32> -> vector<1x120xf32>
    %42 = vector.extract_strided_slice %34 {offsets = [0, 20], sizes = [1, 20], strides = [1, 1]} : vector<16x40xf32> to vector<1x20xf32>
    %43 = vector.extract_strided_slice %34 {offsets = [1, 20], sizes = [1, 20], strides = [1, 1]} : vector<16x40xf32> to vector<1x20xf32>
    %44 = vector.extract_strided_slice %34 {offsets = [2, 20], sizes = [1, 20], strides = [1, 1]} : vector<16x40xf32> to vector<1x20xf32>
    %45 = vector.extract_strided_slice %34 {offsets = [3, 20], sizes = [1, 20], strides = [1, 1]} : vector<16x40xf32> to vector<1x20xf32>
    %46 = vector.extract_strided_slice %34 {offsets = [4, 20], sizes = [1, 20], strides = [1, 1]} : vector<16x40xf32> to vector<1x20xf32>
    %47 = vector.extract_strided_slice %34 {offsets = [5, 20], sizes = [1, 20], strides = [1, 1]} : vector<16x40xf32> to vector<1x20xf32>
    %48 = tpu.concatenate %42, %43, %44, %45, %46, %47 in 1 : vector<1x20xf32>, vector<1x20xf32>, vector<1x20xf32>, vector<1x20xf32>, vector<1x20xf32>, vector<1x20xf32> -> vector<1x120xf32>
    %49 = tpu.concatenate %41, %48 in 0 : vector<1x120xf32>, vector<1x120xf32> -> vector<2x120xf32>
    %c0_22 = arith.constant 0 : index
    %c0_23 = arith.constant 0 : index
    %50 = vector.load %arg5[%c0_22, %c0_23] : memref<120x84xf32, #tpu.memory_space<vmem>>, vector<120x84xf32>
    %cst_24 = arith.constant dense<0.000000e+00> : vector<2x84xf32>
    %51 = tpu.matmul %49, %50, %cst_24 {dimension_numbers = #tpu.dot_dimension_numbers<[1], [0], [0], [1], [0, 0, 1, 1], [], []>} : vector<2x120xf32>, vector<120x84xf32>, vector<2x84xf32> -> vector<2x84xf32>
    %c0_25 = arith.constant 0 : index
    %c0_26 = arith.constant 0 : index
    %52 = vector.load %arg6[%c0_25, %c0_26] : memref<1x84xf32, #tpu.memory_space<vmem>>, vector<1x84xf32>
    %53 = vector.broadcast %52 : vector<1x84xf32> to vector<2x84xf32>
    %54 = arith.addf %51, %53 : vector<2x84xf32>
    %cst_27 = arith.constant 0.000000e+00 : f32
    %55 = vector.broadcast %cst_27 : f32 to vector<2x84xf32>
    %56 = arith.maximumf %54, %55 : vector<2x84xf32>
    %c0_28 = arith.constant 0 : index
    %c0_29 = arith.constant 0 : index
    %57 = vector.load %arg7[%c0_28, %c0_29] : memref<84x10xf32, #tpu.memory_space<vmem>>, vector<84x10xf32>
    %cst_30 = arith.constant dense<0.000000e+00> : vector<2x10xf32>
    %58 = tpu.matmul %56, %57, %cst_30 {dimension_numbers = #tpu.dot_dimension_numbers<[1], [0], [0], [1], [0, 0, 1, 1], [], []>} : vector<2x84xf32>, vector<84x10xf32>, vector<2x10xf32> -> vector<2x10xf32>
    %c0_31 = arith.constant 0 : index
    %c0_32 = arith.constant 0 : index
    %59 = vector.load %arg8[%c0_31, %c0_32] : memref<1x10xf32, #tpu.memory_space<vmem>>, vector<1x10xf32>
    %60 = vector.broadcast %59 : vector<1x10xf32> to vector<2x10xf32>
    %61 = arith.addf %58, %60 : vector<2x10xf32>
    %cst_33 = arith.constant dense<0xFF800000> : vector<2xf32>
    %62 = vector.multi_reduction <maximumf>, %61, %cst_33 [1] : vector<2x10xf32> to vector<2xf32>
    %63 = vector.shape_cast %62 : vector<2xf32> to vector<2x1xf32>
    %64 = vector.broadcast %63 : vector<2x1xf32> to vector<2x10xf32>
    %65 = arith.subf %61, %64 : vector<2x10xf32>
    %66 = math.exp %65 : vector<2x10xf32>
    %cst_34 = arith.constant dense<0.000000e+00> : vector<2xf32>
    %67 = vector.multi_reduction <add>, %66, %cst_34 [1] : vector<2x10xf32> to vector<2xf32>
    %68 = vector.shape_cast %67 : vector<2xf32> to vector<2x1xf32>
    %69 = math.log %68 : vector<2x1xf32>
    %70 = vector.broadcast %69 : vector<2x1xf32> to vector<2x10xf32>
    %71 = arith.subf %65, %70 : vector<2x10xf32>
    %c0_35 = arith.constant 0 : index
    %c0_36 = arith.constant 0 : index
    %72 = vector.load %arg9[%c0_35, %c0_36] : memref<2x10xf32, #tpu.memory_space<vmem>>, vector<2x10xf32>
    tpu.vector_store %arg9[%c0_35, %c0_36], %71 {strides = array<i32>} : memref<2x10xf32, #tpu.memory_space<vmem>>, vector<2x10xf32>,
    return
  }
}

</mosaic_0001>

<llo_original>
// kernel: letnet5_forward.1
$region0: #{letnet5_forward.1}
  #allocation0 [shape = 'u32[]', space=smem, size = 0x4, offset = 0x4, fixed_abs, tag = 'smem constant byte address 0x4 - core index']
  #allocation1 [shape = 'u32[144,128]{1,0:T(1,128)}', space=vmem, size = 0x12000, scoped, tag = 'internal scratch']
  %s0 = inlined_call_operand.vmem [shape: f32[4,625,160], index: 0, kind: input, shape index: {}]
  %s1 = inlined_call_operand.vmem [shape: f32[150,625], index: 1, kind: input, shape index: {}]
  %s2 = inlined_call_operand.vmem [shape: f32[150,1], index: 2, kind: input, shape index: {}]
  %s3 = inlined_call_operand.vmem [shape: f32[16,150], index: 3, kind: input, shape index: {}]
  %s4 = inlined_call_operand.vmem [shape: f32[16,1], index: 4, kind: input, shape index: {}]
  %s5 = inlined_call_operand.vmem [shape: f32[120,84], index: 5, kind: input, shape index: {}]
  %s6 = inlined_call_operand.vmem [shape: f32[1,84], index: 6, kind: input, shape index: {}]
  %s7 = inlined_call_operand.vmem [shape: f32[84,10], index: 7, kind: input, shape index: {}]
  %s8 = inlined_call_operand.vmem [shape: f32[1,10], index: 8, kind: input, shape index: {}]
  %s9 = inlined_call_operand.hbm [shape: f32[2,10], index: 9, kind: output, shape index: {}]
  %s10 = sld [smem:[#allocation0]]
  $region46: #{letnet5_forward.1} parent=0
    _
  %s12 = ssub.s32 1, %s10
  %s13 = scalar_select 0, %s12, %s10
  $region1: #{letnet5_forward.1} parent=0
    #allocation2 [shape = 'u8[1024]{0}', space=vmem, size = 0x400, scoped, tag = 'output window, operand 0, single buffered']
    #allocation3 [shape = 's32[1]{0}', space=sflag, size = 0x4, scoped, tag = 'scoped memory for letnet5_forward.1']
    %14 = vsyncpa [#allocation3], 0
    // Predicated region
    $region2: #{letnet5_forward.1} parent=1 // pred_check
      _
    $region3: #{letnet5_forward.1} parent=1 // pred_check_branch
      %16 = sbr.rel (0) target = $region5
    $region4: #{letnet5_forward.1} parent=1 // pred_region
      _
    $region5: #{letnet5_forward.1} parent=1 // pred_fallthru
      _
    // Predicated region
    $region6: #{letnet5_forward.1} parent=1 // pred_check
      _
    $region7: #{letnet5_forward.1} parent=1 // pred_check_branch
      %18 = sbr.rel (0) target = $region9
    $region8: #{letnet5_forward.1} parent=1 // pred_region
      _
    $region9: #{letnet5_forward.1} parent=1 // pred_fallthru
      _
    // Predicated region
    $region10: #{letnet5_forward.1} parent=1 // pred_check
      _
    $region11: #{letnet5_forward.1} parent=1 // pred_check_branch
      %20 = sbr.rel (0) target = $region13
    $region12: #{letnet5_forward.1} parent=1 // pred_region
      _
    $region13: #{letnet5_forward.1} parent=1 // pred_fallthru
      _
    // Predicated region
    $region14: #{letnet5_forward.1} parent=1 // pred_check
      _
    $region15: #{letnet5_forward.1} parent=1 // pred_check_branch
      %22 = sbr.rel (0) target = $region17
    $region16: #{letnet5_forward.1} parent=1 // pred_region
      _
    $region17: #{letnet5_forward.1} parent=1 // pred_fallthru
      _
    // Predicated region
    $region18: #{letnet5_forward.1} parent=1 // pred_check
      _
    $region19: #{letnet5_forward.1} parent=1 // pred_check_branch
      %24 = sbr.rel (0) target = $region21
    $region20: #{letnet5_forward.1} parent=1 // pred_region
      _
    $region21: #{letnet5_forward.1} parent=1 // pred_fallthru
      _
    // Predicated region
    $region22: #{letnet5_forward.1} parent=1 // pred_check
      _
    $region23: #{letnet5_forward.1} parent=1 // pred_check_branch
      %26 = sbr.rel (0) target = $region25
    $region24: #{letnet5_forward.1} parent=1 // pred_region
      _
    $region25: #{letnet5_forward.1} parent=1 // pred_fallthru
      _
    // Predicated region
    $region26: #{letnet5_forward.1} parent=1 // pred_check
      _
    $region27: #{letnet5_forward.1} parent=1 // pred_check_branch
      %28 = sbr.rel (0) target = $region29
    $region28: #{letnet5_forward.1} parent=1 // pred_region
      _
    $region29: #{letnet5_forward.1} parent=1 // pred_fallthru
      _
    // Predicated region
    $region30: #{letnet5_forward.1} parent=1 // pred_check
      _
    $region31: #{letnet5_forward.1} parent=1 // pred_check_branch
      %30 = sbr.rel (0) target = $region33
    $region32: #{letnet5_forward.1} parent=1 // pred_region
      _
    $region33: #{letnet5_forward.1} parent=1 // pred_fallthru
      _
    // Predicated region
    $region34: #{letnet5_forward.1} parent=1 // pred_check
      _
    $region35: #{letnet5_forward.1} parent=1 // pred_check_branch
      %32 = sbr.rel (0) target = $region37
    $region36: #{letnet5_forward.1} parent=1 // pred_region
      _
    $region37: #{letnet5_forward.1} parent=1 // pred_fallthru
      _
    %v33 = vld [vmem:[%s1] sm:$0xff]
    %v34 = vld [vmem:[%s1 + $0x8] sm:$0xff]
    %v35 = vld [vmem:[%s1 + $0x10] sm:$0xff]
    %v36 = vld [vmem:[%s1 + $0x18] sm:$0xff]
    %v37 = vld [vmem:[%s1 + $0x20] sm:$0xff]
    %v38 = vld [vmem:[%s1 + $0x28] sm:$0xff]
    %v39 = vld [vmem:[%s1 + $0x30] sm:$0xff]
    %v40 = vld [vmem:[%s1 + $0x38] sm:$0xff]
    %v41 = vld [vmem:[%s1 + $0x40] sm:$0xff]
    %v42 = vld [vmem:[%s1 + $0x48] sm:$0xff]
    %v43 = vld [vmem:[%s1 + $0x50] sm:$0xff]
    %v44 = vld [vmem:[%s1 + $0x58] sm:$0xff]
    %v45 = vld [vmem:[%s1 + $0x60] sm:$0xff]
    %v46 = vld [vmem:[%s1 + $0x68] sm:$0xff]
    %v47 = vld [vmem:[%s1 + $0x70] sm:$0xff]
    %v48 = vld [vmem:[%s1 + $0x78] sm:$0xff]
    %v49 = vld [vmem:[%s1 + $0x80] sm:$0xff]
    %v50 = vld [vmem:[%s1 + $0x88] sm:$0xff]
    %v51 = vld [vmem:[%s1 + $0x90] sm:$0xff]
    %v52 = vld [vmem:[%s1 + $0x98] sm:$0xff]
    %v53 = vld [vmem:[%s1 + $0xa0] sm:$0xff]
    %v54 = vld [vmem:[%s1 + $0xa8] sm:$0xff]
    %v55 = vld [vmem:[%s1 + $0xb0] sm:$0xff]
    %v56 = vld [vmem:[%s1 + $0xb8] sm:$0xff]
    %v57 = vld [vmem:[%s1 + $0xc0] sm:$0xff]
    %v58 = vld [vmem:[%s1 + $0xc8] sm:$0xff]
    %v59 = vld [vmem:[%s1 + $0xd0] sm:$0xff]
    %v60 = vld [vmem:[%s1 + $0xd8] sm:$0xff]
    %v61 = vld [vmem:[%s1 + $0xe0] sm:$0xff]
    %v62 = vld [vmem:[%s1 + $0xe8] sm:$0xff]
    %v63 = vld [vmem:[%s1 + $0xf0] sm:$0xff]
    %v64 = vld [vmem:[%s1 + $0xf8] sm:$0xff]
    %v65 = vld [vmem:[%s1 + $0x100] sm:$0xff]
    %v66 = vld [vmem:[%s1 + $0x108] sm:$0xff]
    %v67 = vld [vmem:[%s1 + $0x110] sm:$0xff]
    %v68 = vld [vmem:[%s1 + $0x118] sm:$0xff]
    %v69 = vld [vmem:[%s1 + $0x120] sm:$0xff]
    %v70 = vld [vmem:[%s1 + $0x128] sm:$0xff]
    %v71 = vld [vmem:[%s1 + $0x130] sm:$0xff]
    %v72 = vld [vmem:[%s1 + $0x138] sm:$0xff]
    %v73 = vld [vmem:[%s1 + $0x140] sm:$0xff]
    %v74 = vld [vmem:[%s1 + $0x148] sm:$0xff]
    %v75 = vld [vmem:[%s1 + $0x150] sm:$0xff]
    %v76 = vld [vmem:[%s1 + $0x158] sm:$0xff]
    %v77 = vld [vmem:[%s1 + $0x160] sm:$0xff]
    %v78 = vld [vmem:[%s1 + $0x168] sm:$0xff]
    %v79 = vld [vmem:[%s1 + $0x170] sm:$0xff]
    %v80 = vld [vmem:[%s1 + $0x178] sm:$0xff]
    %v81 = vld [vmem:[%s1 + $0x180] sm:$0xff]
    %v82 = vld [vmem:[%s1 + $0x188] sm:$0xff]
    %v83 = vld [vmem:[%s1 + $0x190] sm:$0xff]
    %v84 = vld [vmem:[%s1 + $0x198] sm:$0xff]
    %v85 = vld [vmem:[%s1 + $0x1a0] sm:$0xff]
    %v86 = vld [vmem:[%s1 + $0x1a8] sm:$0xff]
    %v87 = vld [vmem:[%s1 + $0x1b0] sm:$0xff]
    %v88 = vld [vmem:[%s1 + $0x1b8] sm:$0xff]
    %v89 = vld [vmem:[%s1 + $0x1c0] sm:$0xff]
    %v90 = vld [vmem:[%s1 + $0x1c8] sm:$0xff]
    %v91 = vld [vmem:[%s1 + $0x1d0] sm:$0xff]
    %v92 = vld [vmem:[%s1 + $0x1d8] sm:$0xff]
    %v93 = vld [vmem:[%s1 + $0x1e0] sm:$0xff]
    %v94 = vld [vmem:[%s1 + $0x1e8] sm:$0xff]
    %v95 = vld [vmem:[%s1 + $0x1f0] sm:$0xff]
    %v96 = vld [vmem:[%s1 + $0x1f8] sm:$0xff]
    %v97 = vld [vmem:[%s1 + $0x200] sm:$0xff]
    %v98 = vld [vmem:[%s1 + $0x208] sm:$0xff]
    %v99 = vld [vmem:[%s1 + $0x210] sm:$0xff]
    %v100 = vld [vmem:[%s1 + $0x218] sm:$0xff]
    %v101 = vld [vmem:[%s1 + $0x220] sm:$0xff]
    %v102 = vld [vmem:[%s1 + $0x228] sm:$0xff]
    %v103 = vld [vmem:[%s1 + $0x230] sm:$0xff]
    %v104 = vld [vmem:[%s1 + $0x238] sm:$0xff]
    %v105 = vld [vmem:[%s1 + $0x240] sm:$0xff]
    %v106 = vld [vmem:[%s1 + $0x248] sm:$0xff]
    %v107 = vld [vmem:[%s1 + $0x250] sm:$0xff]
    %v108 = vld [vmem:[%s1 + $0x258] sm:$0xff]
    %v109 = vld [vmem:[%s1 + $0x260] sm:$0xff]
    %v110 = vld [vmem:[%s1 + $0x268] sm:$0xff]
    %v111 = vld [vmem:[%s1 + $0x270] sm:$0xff]
    %v112 = vld [vmem:[%s1 + $0x278] sm:$0xff]
    %v113 = vld [vmem:[%s1 + $0x280] sm:$0xff]
    %v114 = vld [vmem:[%s1 + $0x288] sm:$0xff]
    %v115 = vld [vmem:[%s1 + $0x290] sm:$0xff]
    %v116 = vld [vmem:[%s1 + $0x298] sm:$0xff]
    %v117 = vld [vmem:[%s1 + $0x2a0] sm:$0xff]
    %v118 = vld [vmem:[%s1 + $0x2a8] sm:$0xff]
    %v119 = vld [vmem:[%s1 + $0x2b0] sm:$0xff]
    %v120 = vld [vmem:[%s1 + $0x2b8] sm:$0xff]
    %v121 = vld [vmem:[%s1 + $0x2c0] sm:$0xff]
    %v122 = vld [vmem:[%s1 + $0x2c8] sm:$0xff]
    %v123 = vld [vmem:[%s1 + $0x2d0] sm:$0x3f]
    %v124 = vld [vmem:[%s1 + $0x2d8] sm:$0x3f]
    %v125 = vld [vmem:[%s1 + $0x2e0] sm:$0x3f]
    %v126 = vld [vmem:[%s1 + $0x2e8] sm:$0x3f]
    %v127 = vld [vmem:[%s1 + $0x2f0] sm:$0x3f]
    %v128 = vld [vmem:[%s0] sm:$0xff]
    %v129 = vld [vmem:[%s0 + $0x8] sm:$0xff]
    %v130 = vld [vmem:[%s0 + $0x10] sm:$0xff]
    %v131 = vld [vmem:[%s0 + $0x18] sm:$0xff]
    %v132 = vld [vmem:[%s0 + $0x20] sm:$0xff]
    %v133 = vld [vmem:[%s0 + $0x28] sm:$0xff]
    %v134 = vld [vmem:[%s0 + $0x30] sm:$0xff]
    %v135 = vld [vmem:[%s0 + $0x38] sm:$0xff]
    %v136 = vld [vmem:[%s0 + $0x40] sm:$0xff]
    %v137 = vld [vmem:[%s0 + $0x48] sm:$0xff]
    %v138 = vld [vmem:[%s0 + $0x50] sm:$0xff]
    %v139 = vld [vmem:[%s0 + $0x58] sm:$0xff]
    %v140 = vld [vmem:[%s0 + $0x60] sm:$0xff]
    %v141 = vld [vmem:[%s0 + $0x68] sm:$0xff]
    %v142 = vld [vmem:[%s0 + $0x70] sm:$0xff]
    %v143 = vld [vmem:[%s0 + $0x78] sm:$0xff]
    %v144 = vld [vmem:[%s0 + $0x80] sm:$0xff]
    %v145 = vld [vmem:[%s0 + $0x88] sm:$0xff]
    %v146 = vld [vmem:[%s0 + $0x90] sm:$0xff]
    %v147 = vld [vmem:[%s0 + $0x98] sm:$0xff]
    %v148 = vld [vmem:[%s0 + $0xa0] sm:$0xff]
    %v149 = vld [vmem:[%s0 + $0xa8] sm:$0xff]
    %v150 = vld [vmem:[%s0 + $0xb0] sm:$0xff]
    %v151 = vld [vmem:[%s0 + $0xb8] sm:$0xff]
    %v152 = vld [vmem:[%s0 + $0xc0] sm:$0xff]
    %v153 = vld [vmem:[%s0 + $0xc8] sm:$0xff]
    %v154 = vld [vmem:[%s0 + $0xd0] sm:$0xff]
    %v155 = vld [vmem:[%s0 + $0xd8] sm:$0xff]
    %v156 = vld [vmem:[%s0 + $0xe0] sm:$0xff]
    %v157 = vld [vmem:[%s0 + $0xe8] sm:$0xff]
    %v158 = vld [vmem:[%s0 + $0xf0] sm:$0xff]
    %v159 = vld [vmem:[%s0 + $0xf8] sm:$0xff]
    %v160 = vld [vmem:[%s0 + $0x100] sm:$0xff]
    %v161 = vld [vmem:[%s0 + $0x108] sm:$0xff]
    %v162 = vld [vmem:[%s0 + $0x110] sm:$0xff]
    %v163 = vld [vmem:[%s0 + $0x118] sm:$0xff]
    %v164 = vld [vmem:[%s0 + $0x120] sm:$0xff]
    %v165 = vld [vmem:[%s0 + $0x128] sm:$0xff]
    %v166 = vld [vmem:[%s0 + $0x130] sm:$0xff]
    %v167 = vld [vmem:[%s0 + $0x138] sm:$0xff]
    %v168 = vld [vmem:[%s0 + $0x140] sm:$0xff]
    %v169 = vld [vmem:[%s0 + $0x148] sm:$0xff]
    %v170 = vld [vmem:[%s0 + $0x150] sm:$0xff]
    %v171 = vld [vmem:[%s0 + $0x158] sm:$0xff]
    %v172 = vld [vmem:[%s0 + $0x160] sm:$0xff]
    %v173 = vld [vmem:[%s0 + $0x168] sm:$0xff]
    %v174 = vld [vmem:[%s0 + $0x170] sm:$0xff]
    %v175 = vld [vmem:[%s0 + $0x178] sm:$0xff]
    %v176 = vld [vmem:[%s0 + $0x180] sm:$0xff]
    %v177 = vld [vmem:[%s0 + $0x188] sm:$0xff]
    %v178 = vld [vmem:[%s0 + $0x190] sm:$0xff]
    %v179 = vld [vmem:[%s0 + $0x198] sm:$0xff]
    %v180 = vld [vmem:[%s0 + $0x1a0] sm:$0xff]
    %v181 = vld [vmem:[%s0 + $0x1a8] sm:$0xff]
    %v182 = vld [vmem:[%s0 + $0x1b0] sm:$0xff]
    %v183 = vld [vmem:[%s0 + $0x1b8] sm:$0xff]
    %v184 = vld [vmem:[%s0 + $0x1c0] sm:$0xff]
    %v185 = vld [vmem:[%s0 + $0x1c8] sm:$0xff]
    %v186 = vld [vmem:[%s0 + $0x1d0] sm:$0xff]
    %v187 = vld [vmem:[%s0 + $0x1d8] sm:$0xff]
    %v188 = vld [vmem:[%s0 + $0x1e0] sm:$0xff]
    %v189 = vld [vmem:[%s0 + $0x1e8] sm:$0xff]
    %v190 = vld [vmem:[%s0 + $0x1f0] sm:$0xff]
    %v191 = vld [vmem:[%s0 + $0x1f8] sm:$0xff]
    %v192 = vld [vmem:[%s0 + $0x200] sm:$0xff]
    %v193 = vld [vmem:[%s0 + $0x208] sm:$0xff]
    %v194 = vld [vmem:[%s0 + $0x210] sm:$0xff]
    %v195 = vld [vmem:[%s0 + $0x218] sm:$0xff]
    %v196 = vld [vmem:[%s0 + $0x220] sm:$0xff]
    %v197 = vld [vmem:[%s0 + $0x228] sm:$0xff]
    %v198 = vld [vmem:[%s0 + $0x230] sm:$0xff]
    %v199 = vld [vmem:[%s0 + $0x238] sm:$0xff]
    %v200 = vld [vmem:[%s0 + $0x240] sm:$0xff]
    %v201 = vld [vmem:[%s0 + $0x248] sm:$0xff]
    %v202 = vld [vmem:[%s0 + $0x250] sm:$0xff]
    %v203 = vld [vmem:[%s0 + $0x258] sm:$0xff]
    %v204 = vld [vmem:[%s0 + $0x260] sm:$0xff]
    %v205 = vld [vmem:[%s0 + $0x268] sm:$0xff]
    %v206 = vld [vmem:[%s0 + $0x270] sm:$0xff]
    %v207 = vld [vmem:[%s0 + $0x278] sm:$0xff]
    %v208 = vld [vmem:[%s0 + $0x280] sm:$0xff]
    %v209 = vld [vmem:[%s0 + $0x288] sm:$0xff]
    %v210 = vld [vmem:[%s0 + $0x290] sm:$0xff]
    %v211 = vld [vmem:[%s0 + $0x298] sm:$0xff]
    %v212 = vld [vmem:[%s0 + $0x2a0] sm:$0xff]
    %v213 = vld [vmem:[%s0 + $0x2a8] sm:$0xff]
    %v214 = vld [vmem:[%s0 + $0x2b0] sm:$0xff]
    %v215 = vld [vmem:[%s0 + $0x2b8] sm:$0xff]
    %v216 = vld [vmem:[%s0 + $0x2c0] sm:$0xff]
    %v217 = vld [vmem:[%s0 + $0x2c8] sm:$0xff]
    %v218 = vld [vmem:[%s0 + $0x2d0] sm:$0xff]
    %v219 = vld [vmem:[%s0 + $0x2d8] sm:$0xff]
    %v220 = vld [vmem:[%s0 + $0x2e0] sm:$0xff]
    %v221 = vld [vmem:[%s0 + $0x2e8] sm:$0xff]
    %v222 = vld [vmem:[%s0 + $0x2f0] sm:$0xff]
    %v223 = vld [vmem:[%s0 + $0x2f8] sm:$0xff]
    %v224 = vld [vmem:[%s0 + $0x300] sm:$0xff]
    %v225 = vld [vmem:[%s0 + $0x308] sm:$0xff]
    %v226 = vld [vmem:[%s0 + $0x310] sm:$0xff]
    %v227 = vld [vmem:[%s0 + $0x318] sm:$0xff]
    %v228 = vld [vmem:[%s0 + $0x320] sm:$0xff]
    %v229 = vld [vmem:[%s0 + $0x328] sm:$0xff]
    %v230 = vld [vmem:[%s0 + $0x330] sm:$0xff]
    %v231 = vld [vmem:[%s0 + $0x338] sm:$0xff]
    %v232 = vld [vmem:[%s0 + $0x340] sm:$0xff]
    %v233 = vld [vmem:[%s0 + $0x348] sm:$0xff]
    %v234 = vld [vmem:[%s0 + $0x350] sm:$0xff]
    %v235 = vld [vmem:[%s0 + $0x358] sm:$0xff]
    %v236 = vld [vmem:[%s0 + $0x360] sm:$0xff]
    %v237 = vld [vmem:[%s0 + $0x368] sm:$0xff]
    %v238 = vld [vmem:[%s0 + $0x370] sm:$0xff]
    %v239 = vld [vmem:[%s0 + $0x378] sm:$0xff]
    %v240 = vld [vmem:[%s0 + $0x380] sm:$0xff]
    %v241 = vld [vmem:[%s0 + $0x388] sm:$0xff]
    %v242 = vld [vmem:[%s0 + $0x390] sm:$0xff]
    %v243 = vld [vmem:[%s0 + $0x398] sm:$0xff]
    %v244 = vld [vmem:[%s0 + $0x3a0] sm:$0xff]
    %v245 = vld [vmem:[%s0 + $0x3a8] sm:$0xff]
    %v246 = vld [vmem:[%s0 + $0x3b0] sm:$0xff]
    %v247 = vld [vmem:[%s0 + $0x3b8] sm:$0xff]
    %v248 = vld [vmem:[%s0 + $0x3c0] sm:$0xff]
    %v249 = vld [vmem:[%s0 + $0x3c8] sm:$0xff]
    %v250 = vld [vmem:[%s0 + $0x3d0] sm:$0xff]
    %v251 = vld [vmem:[%s0 + $0x3d8] sm:$0xff]
    %v252 = vld [vmem:[%s0 + $0x3e0] sm:$0xff]
    %v253 = vld [vmem:[%s0 + $0x3e8] sm:$0xff]
    %v254 = vld [vmem:[%s0 + $0x3f0] sm:$0xff]
    %v255 = vld [vmem:[%s0 + $0x3f8] sm:$0xff]
    %v256 = vld [vmem:[%s0 + $0x400] sm:$0xff]
    %v257 = vld [vmem:[%s0 + $0x408] sm:$0xff]
    %v258 = vld [vmem:[%s0 + $0x410] sm:$0xff]
    %v259 = vld [vmem:[%s0 + $0x418] sm:$0xff]
    %v260 = vld [vmem:[%s0 + $0x420] sm:$0xff]
    %v261 = vld [vmem:[%s0 + $0x428] sm:$0xff]
    %v262 = vld [vmem:[%s0 + $0x430] sm:$0xff]
    %v263 = vld [vmem:[%s0 + $0x438] sm:$0xff]
    %v264 = vld [vmem:[%s0 + $0x440] sm:$0xff]
    %v265 = vld [vmem:[%s0 + $0x448] sm:$0xff]
    %v266 = vld [vmem:[%s0 + $0x450] sm:$0xff]
    %v267 = vld [vmem:[%s0 + $0x458] sm:$0xff]
    %v268 = vld [vmem:[%s0 + $0x460] sm:$0xff]
    %v269 = vld [vmem:[%s0 + $0x468] sm:$0xff]
    %v270 = vld [vmem:[%s0 + $0x470] sm:$0xff]
    %v271 = vld [vmem:[%s0 + $0x478] sm:$0xff]
    %v272 = vld [vmem:[%s0 + $0x480] sm:$0xff]
    %v273 = vld [vmem:[%s0 + $0x488] sm:$0xff]
    %v274 = vld [vmem:[%s0 + $0x490] sm:$0xff]
    %v275 = vld [vmem:[%s0 + $0x498] sm:$0xff]
    %v276 = vld [vmem:[%s0 + $0x4a0] sm:$0xff]
    %v277 = vld [vmem:[%s0 + $0x4a8] sm:$0xff]
    %v278 = vld [vmem:[%s0 + $0x4b0] sm:$0xff]
    %v279 = vld [vmem:[%s0 + $0x4b8] sm:$0xff]
    %v280 = vld [vmem:[%s0 + $0x4c0] sm:$0xff]
    %v281 = vld [vmem:[%s0 + $0x4c8] sm:$0xff]
    %v282 = vld [vmem:[%s0 + $0x4d0] sm:$0xff]
    %v283 = vld [vmem:[%s0 + $0x4d8] sm:$0xff]
    %v284 = vld [vmem:[%s0 + $0x4e0] sm:$0x1]
    %v285 = vld [vmem:[%s0 + $0x4e8] sm:$0x1]
    %vm286 = vcmask 924672
    %v288 = vsel %vm286, %v37, 0
    %v291 = vsel %vm286, %v42, 0
    %v294 = vsel %vm286, %v47, 0
    %v297 = vsel %vm286, %v52, 0
    %v300 = vsel %vm286, %v57, 0
    %v303 = vsel %vm286, %v62, 0
    %v306 = vsel %vm286, %v67, 0
    %v309 = vsel %vm286, %v72, 0
    %v312 = vsel %vm286, %v77, 0
    %v315 = vsel %vm286, %v82, 0
    %v318 = vsel %vm286, %v87, 0
    %v321 = vsel %vm286, %v92, 0
    %v324 = vsel %vm286, %v97, 0
    %v327 = vsel %vm286, %v102, 0
    %v330 = vsel %vm286, %v107, 0
    %v333 = vsel %vm286, %v112, 0
    %v336 = vsel %vm286, %v117, 0
    %v339 = vsel %vm286, %v122, 0
    %v342 = vsel %vm286, %v127, 0
    %vm344 = vcmask 1040384
    %v346 = vsel %vm344, %v284, 0
    %v349 = vsel %vm344, %v285, 0
    %351 = vmatprep.subr.mxu0 %v129
    %352 = vmatpush1.msra.mxu0 %v128
    %353 = vmatprep.subr.mxu0 %v131
    %354 = vmatpush1.msra.mxu0 %v130
    %355 = vmatprep.subr.mxu0 %v133
    %356 = vmatpush1.msra.mxu0 %v132
    %357 = vmatprep.subr.mxu0 %v135
    %358 = vmatpush1.msra.mxu0 %v134
    %359 = vmatprep.subr.mxu0 %v137
    %360 = vmatpush1.msra.mxu0 %v136
    %361 = vmatprep.subr.mxu0 %v139
    %362 = vmatpush1.msra.mxu0 %v138
    %363 = vmatprep.subr.mxu0 %v141
    %364 = vmatpush1.msra.mxu0 %v140
    %365 = vmatprep.subr.mxu0 %v143
    %366 = vmatpush1.msra.mxu0 %v142
    %367 = vmatprep.subr.mxu0 %v145
    %368 = vmatpush1.msra.mxu0 %v144
    %369 = vmatprep.subr.mxu0 %v147
    %370 = vmatpush1.msra.mxu0 %v146
    %371 = vmatprep.subr.mxu0 %v149
    %372 = vmatpush1.msra.mxu0 %v148
    %373 = vmatprep.subr.mxu0 %v151
    %374 = vmatpush1.msra.mxu0 %v150
    %375 = vmatprep.subr.mxu0 %v153
    %376 = vmatpush1.msra.mxu0 %v152
    %377 = vmatprep.subr.mxu0 %v155
    %378 = vmatpush1.msra.mxu0 %v154
    %379 = vmatprep.subr.mxu0 %v157
    %380 = vmatpush1.msra.mxu0 %v156
    %381 = vmatprep.subr.mxu0 %v159
    %382 = vmatpush1.msra.mxu0 %v158
    %383 = vmatprep.subr.mxu0 %v161
    %384 = vmatpush1.msra.mxu0 %v160
    %385 = vmatprep.subr.mxu0 %v163
    %386 = vmatpush1.msra.mxu0 %v162
    %387 = vmatprep.subr.mxu0 %v165
    %388 = vmatpush1.msra.mxu0 %v164
    %389 = vmatprep.subr.mxu0 %v167
    %390 = vmatpush1.msra.mxu0 %v166
    %391 = vmatprep.subr.mxu0 %v169
    %392 = vmatpush1.msra.mxu0 %v168
    %393 = vmatprep.subr.mxu0 %v171
    %394 = vmatpush1.msra.mxu0 %v170
    %395 = vmatprep.subr.mxu0 %v173
    %396 = vmatpush1.msra.mxu0 %v172
    %397 = vmatprep.subr.mxu0 %v175
    %398 = vmatpush1.msra.mxu0 %v174
    %399 = vmatprep.subr.mxu0 %v177
    %400 = vmatpush1.msra.mxu0 %v176
    %401 = vmatprep.subr.mxu0 %v179
    %402 = vmatpush1.msra.mxu0 %v178
    %403 = vmatprep.subr.mxu0 %v181
    %404 = vmatpush1.msra.mxu0 %v180
    %405 = vmatprep.subr.mxu0 %v183
    %406 = vmatpush1.msra.mxu0 %v182
    %407 = vmatprep.subr.mxu0 %v185
    %408 = vmatpush1.msra.mxu0 %v184
    %409 = vmatprep.subr.mxu0 %v187
    %410 = vmatpush1.msra.mxu0 %v186
    %411 = vmatprep.subr.mxu0 %v189
    %412 = vmatpush1.msra.mxu0 %v188
    %413 = vmatprep.subr.mxu0 %v191
    %414 = vmatpush1.msra.mxu0 %v190
    %415 = vmatprep.mubr.f32.mxu0 %v34
    %416 = vmatmul.mubr.f32.gmra.mrb[0].mxu0 %v33
    %v417 = vpop.f32.mrb[0].mxu0
    %v418 = vadd.f32 0.0, %v417
    %v419 = vpop.f32.mrb[0].mxu0
    %v420 = vadd.f32 0.0, %v419
    %421 = vmatprep.mubr.f32.mxu0 %v39
    %422 = vmatmul.mubr.f32.gmra.mrb[0].mxu0 %v38
    %v423 = vpop.f32.mrb[0].mxu0
    %v424 = vadd.f32 0.0, %v423
    %v425 = vpop.f32.mrb[0].mxu0
    %v426 = vadd.f32 0.0, %v425
    %427 = vmatprep.mubr.f32.mxu0 %v44
    %428 = vmatmul.mubr.f32.gmra.mrb[0].mxu0 %v43
    %v429 = vpop.f32.mrb[0].mxu0
    %v430 = vadd.f32 0.0, %v429
    %v431 = vpop.f32.mrb[0].mxu0
    %v432 = vadd.f32 0.0, %v431
    %433 = vmatprep.mubr.f32.mxu0 %v49
    %434 = vmatmul.mubr.f32.gmra.mrb[0].mxu0 %v48
    %v435 = vpop.f32.mrb[0].mxu0
    %v436 = vadd.f32 0.0, %v435
    %v437 = vpop.f32.mrb[0].mxu0
    %v438 = vadd.f32 0.0, %v437
    %439 = vmatprep.mubr.f32.mxu0 %v54
    %440 = vmatmul.mubr.f32.gmra.mrb[0].mxu0 %v53
    %v441 = vpop.f32.mrb[0].mxu0
    %v442 = vadd.f32 0.0, %v441
    %v443 = vpop.f32.mrb[0].mxu0
    %v444 = vadd.f32 0.0, %v443
    %445 = vmatprep.mubr.f32.mxu0 %v59
    %446 = vmatmul.mubr.f32.gmra.mrb[0].mxu0 %v58
    %v447 = vpop.f32.mrb[0].mxu0
    %v448 = vadd.f32 0.0, %v447
    %v449 = vpop.f32.mrb[0].mxu0
    %v450 = vadd.f32 0.0, %v449
    %451 = vmatprep.mubr.f32.mxu0 %v64
    %452 = vmatmul.mubr.f32.gmra.mrb[0].mxu0 %v63
    %v453 = vpop.f32.mrb[0].mxu0
    %v454 = vadd.f32 0.0, %v453
    %v455 = vpop.f32.mrb[0].mxu0
    %v456 = vadd.f32 0.0, %v455
    %457 = vmatprep.mubr.f32.mxu0 %v69
    %458 = vmatmul.mubr.f32.gmra.mrb[0].mxu0 %v68
    %v459 = vpop.f32.mrb[0].mxu0
    %v460 = vadd.f32 0.0, %v459
    %v461 = vpop.f32.mrb[0].mxu0
    %v462 = vadd.f32 0.0, %v461
    %463 = vmatprep.mubr.f32.mxu0 %v74
    %464 = vmatmul.mubr.f32.gmra.mrb[0].mxu0 %v73
    %v465 = vpop.f32.mrb[0].mxu0
    %v466 = vadd.f32 0.0, %v465
    %v467 = vpop.f32.mrb[0].mxu0
    %v468 = vadd.f32 0.0, %v467
    %469 = vmatprep.mubr.f32.mxu0 %v79
    %470 = vmatmul.mubr.f32.gmra.mrb[0].mxu0 %v78
    %v471 = vpop.f32.mrb[0].mxu0
    %v472 = vadd.f32 0.0, %v471
    %v473 = vpop.f32.mrb[0].mxu0
    %v474 = vadd.f32 0.0, %v473
    %475 = vmatprep.mubr.f32.mxu0 %v84
    %476 = vmatmul.mubr.f32.gmra.mrb[0].mxu0 %v83
    %v477 = vpop.f32.mrb[0].mxu0
    %v478 = vadd.f32 0.0, %v477
    %v479 = vpop.f32.mrb[0].mxu0
    %v480 = vadd.f32 0.0, %v479
    %481 = vmatprep.mubr.f32.mxu0 %v89
    %482 = vmatmul.mubr.f32.gmra.mrb[0].mxu0 %v88
    %v483 = vpop.f32.mrb[0].mxu0
    %v484 = vadd.f32 0.0, %v483
    %v485 = vpop.f32.mrb[0].mxu0
    %v486 = vadd.f32 0.0, %v485
    %487 = vmatprep.mubr.f32.mxu0 %v94
    %488 = vmatmul.mubr.f32.gmra.mrb[0].mxu0 %v93
    %v489 = vpop.f32.mrb[0].mxu0
    %v490 = vadd.f32 0.0, %v489
    %v491 = vpop.f32.mrb[0].mxu0
    %v492 = vadd.f32 0.0, %v491
    %493 = vmatprep.mubr.f32.mxu0 %v99
    %494 = vmatmul.mubr.f32.gmra.mrb[0].mxu0 %v98
    %v495 = vpop.f32.mrb[0].mxu0
    %v496 = vadd.f32 0.0, %v495
    %v497 = vpop.f32.mrb[0].mxu0
    %v498 = vadd.f32 0.0, %v497
    %499 = vmatprep.mubr.f32.mxu0 %v104
    %500 = vmatmul.mubr.f32.gmra.mrb[0].mxu0 %v103
    %v501 = vpop.f32.mrb[0].mxu0
    %v502 = vadd.f32 0.0, %v501
    %v503 = vpop.f32.mrb[0].mxu0
    %v504 = vadd.f32 0.0, %v503
    %505 = vmatprep.mubr.f32.mxu0 %v109
    %506 = vmatmul.mubr.f32.gmra.mrb[0].mxu0 %v108
    %v507 = vpop.f32.mrb[0].mxu0
    %v508 = vadd.f32 0.0, %v507
    %v509 = vpop.f32.mrb[0].mxu0
    %v510 = vadd.f32 0.0, %v509
    %511 = vmatprep.mubr.f32.mxu0 %v114
    %512 = vmatmul.mubr.f32.gmra.mrb[0].mxu0 %v113
    %v513 = vpop.f32.mrb[0].mxu0
    %v514 = vadd.f32 0.0, %v513
    %v515 = vpop.f32.mrb[0].mxu0
    %v516 = vadd.f32 0.0, %v515
    %517 = vmatprep.mubr.f32.mxu0 %v119
    %518 = vmatmul.mubr.f32.gmra.mrb[0].mxu0 %v118
    %v519 = vpop.f32.mrb[0].mxu0
    %v520 = vadd.f32 0.0, %v519
    %v521 = vpop.f32.mrb[0].mxu0
    %v522 = vadd.f32 0.0, %v521
    %523 = vmatprep.mubr.f32.mxu0 %v124
    %524 = vmatmul.mubr.f32.gmra.mrb[0].mxu0 %v123
    %v525 = vpop.f32.mrb[0].mxu0
    %v526 = vadd.f32 0.0, %v525
    %v527 = vpop.f32.mrb[0].mxu0
    %v528 = vadd.f32 0.0, %v527
    %529 = vdwg.mxu0
    %530 = vmatprep.subr.mxu0 %v193
    %531 = vmatpush1.msra.mxu0 %v192
    %532 = vmatprep.subr.mxu0 %v195
    %533 = vmatpush1.msra.mxu0 %v194
    %534 = vmatprep.subr.mxu0 %v197
    %535 = vmatpush1.msra.mxu0 %v196
    %536 = vmatprep.subr.mxu0 %v199
    %537 = vmatpush1.msra.mxu0 %v198
    %538 = vmatprep.subr.mxu0 %v201
    %539 = vmatpush1.msra.mxu0 %v200
    %540 = vmatprep.subr.mxu0 %v203
    %541 = vmatpush1.msra.mxu0 %v202
    %542 = vmatprep.subr.mxu0 %v205
    %543 = vmatpush1.msra.mxu0 %v204
    %544 = vmatprep.subr.mxu0 %v207
    %545 = vmatpush1.msra.mxu0 %v206
    %546 = vmatprep.subr.mxu0 %v209
    %547 = vmatpush1.msra.mxu0 %v208
    %548 = vmatprep.subr.mxu0 %v211
    %549 = vmatpush1.msra.mxu0 %v210
    %550 = vmatprep.subr.mxu0 %v213
    %551 = vmatpush1.msra.mxu0 %v212
    %552 = vmatprep.subr.mxu0 %v215
    %553 = vmatpush1.msra.mxu0 %v214
    %554 = vmatprep.subr.mxu0 %v217
    %555 = vmatpush1.msra.mxu0 %v216
    %556 = vmatprep.subr.mxu0 %v219
    %557 = vmatpush1.msra.mxu0 %v218
    %558 = vmatprep.subr.mxu0 %v221
    %559 = vmatpush1.msra.mxu0 %v220
    %560 = vmatprep.subr.mxu0 %v223
    %561 = vmatpush1.msra.mxu0 %v222
    %562 = vmatprep.subr.mxu0 %v225
    %563 = vmatpush1.msra.mxu0 %v224
    %564 = vmatprep.subr.mxu0 %v227
    %565 = vmatpush1.msra.mxu0 %v226
    %566 = vmatprep.subr.mxu0 %v229
    %567 = vmatpush1.msra.mxu0 %v228
    %568 = vmatprep.subr.mxu0 %v231
    %569 = vmatpush1.msra.mxu0 %v230
    %570 = vmatprep.subr.mxu0 %v233
    %571 = vmatpush1.msra.mxu0 %v232
    %572 = vmatprep.subr.mxu0 %v235
    %573 = vmatpush1.msra.mxu0 %v234
    %574 = vmatprep.subr.mxu0 %v237
    %575 = vmatpush1.msra.mxu0 %v236
    %576 = vmatprep.subr.mxu0 %v239
    %577 = vmatpush1.msra.mxu0 %v238
    %578 = vmatprep.subr.mxu0 %v241
    %579 = vmatpush1.msra.mxu0 %v240
    %580 = vmatprep.subr.mxu0 %v243
    %581 = vmatpush1.msra.mxu0 %v242
    %582 = vmatprep.subr.mxu0 %v245
    %583 = vmatpush1.msra.mxu0 %v244
    %584 = vmatprep.subr.mxu0 %v247
    %585 = vmatpush1.msra.mxu0 %v246
    %586 = vmatprep.subr.mxu0 %v249
    %587 = vmatpush1.msra.mxu0 %v248
    %588 = vmatprep.subr.mxu0 %v251
    %589 = vmatpush1.msra.mxu0 %v250
    %590 = vmatprep.subr.mxu0 %v253
    %591 = vmatpush1.msra.mxu0 %v252
    %592 = vmatprep.subr.mxu0 %v255
    %593 = vmatpush1.msra.mxu0 %v254
    %594 = vmatprep.mubr.f32.mxu0 %v36
    %595 = vmatmul.mubr.f32.gmra.mrb[0].mxu0 %v35
    %v596 = vpop.f32.mrb[0].mxu0
    %v597 = vadd.f32 %v418, %v596
    %v598 = vpop.f32.mrb[0].mxu0
    %v599 = vadd.f32 %v420, %v598
    %600 = vmatprep.mubr.f32.mxu0 %v41
    %601 = vmatmul.mubr.f32.gmra.mrb[0].mxu0 %v40
    %v602 = vpop.f32.mrb[0].mxu0
    %v603 = vadd.f32 %v424, %v602
    %v604 = vpop.f32.mrb[0].mxu0
    %v605 = vadd.f32 %v426, %v604
    %606 = vmatprep.mubr.f32.mxu0 %v46
    %607 = vmatmul.mubr.f32.gmra.mrb[0].mxu0 %v45
    %v608 = vpop.f32.mrb[0].mxu0
    %v609 = vadd.f32 %v430, %v608
    %v610 = vpop.f32.mrb[0].mxu0
    %v611 = vadd.f32 %v432, %v610
    %612 = vmatprep.mubr.f32.mxu0 %v51
    %613 = vmatmul.mubr.f32.gmra.mrb[0].mxu0 %v50
    %v614 = vpop.f32.mrb[0].mxu0
    %v615 = vadd.f32 %v436, %v614
    %v616 = vpop.f32.mrb[0].mxu0
    %v617 = vadd.f32 %v438, %v616
    %618 = vmatprep.mubr.f32.mxu0 %v56
    %619 = vmatmul.mubr.f32.gmra.mrb[0].mxu0 %v55
    %v620 = vpop.f32.mrb[0].mxu0
    %v621 = vadd.f32 %v442, %v620
    %v622 = vpop.f32.mrb[0].mxu0
    %v623 = vadd.f32 %v444, %v622
    %624 = vmatprep.mubr.f32.mxu0 %v61
    %625 = vmatmul.mubr.f32.gmra.mrb[0].mxu0 %v60
    %v626 = vpop.f32.mrb[0].mxu0
    %v627 = vadd.f32 %v448, %v626
    %v628 = vpop.f32.mrb[0].mxu0
    %v629 = vadd.f32 %v450, %v628
    %630 = vmatprep.mubr.f32.mxu0 %v66
    %631 = vmatmul.mubr.f32.gmra.mrb[0].mxu0 %v65
    %v632 = vpop.f32.mrb[0].mxu0
    %v633 = vadd.f32 %v454, %v632
    %v634 = vpop.f32.mrb[0].mxu0
    %v635 = vadd.f32 %v456, %v634
    %636 = vmatprep.mubr.f32.mxu0 %v71
    %637 = vmatmul.mubr.f32.gmra.mrb[0].mxu0 %v70
    %v638 = vpop.f32.mrb[0].mxu0
    %v639 = vadd.f32 %v460, %v638
    %v640 = vpop.f32.mrb[0].mxu0
    %v641 = vadd.f32 %v462, %v640
    %642 = vmatprep.mubr.f32.mxu0 %v76
    %643 = vmatmul.mubr.f32.gmra.mrb[0].mxu0 %v75
    %v644 = vpop.f32.mrb[0].mxu0
    %v645 = vadd.f32 %v466, %v644
    %v646 = vpop.f32.mrb[0].mxu0
    %v647 = vadd.f32 %v468, %v646
    %648 = vmatprep.mubr.f32.mxu0 %v81
    %649 = vmatmul.mubr.f32.gmra.mrb[0].mxu0 %v80
    %v650 = vpop.f32.mrb[0].mxu0
    %v651 = vadd.f32 %v472, %v650
    %v652 = vpop.f32.mrb[0].mxu0
    %v653 = vadd.f32 %v474, %v652
    %654 = vmatprep.mubr.f32.mxu0 %v86
    %655 = vmatmul.mubr.f32.gmra.mrb[0].mxu0 %v85
    %v656 = vpop.f32.mrb[0].mxu0
    %v657 = vadd.f32 %v478, %v656
    %v658 = vpop.f32.mrb[0].mxu0
    %v659 = vadd.f32 %v480, %v658
    %660 = vmatprep.mubr.f32.mxu0 %v91
    %661 = vmatmul.mubr.f32.gmra.mrb[0].mxu0 %v90
    %v662 = vpop.f32.mrb[0].mxu0
    %v663 = vadd.f32 %v484, %v662
    %v664 = vpop.f32.mrb[0].mxu0
    %v665 = vadd.f32 %v486, %v664
    %666 = vmatprep.mubr.f32.mxu0 %v96
    %667 = vmatmul.mubr.f32.gmra.mrb[0].mxu0 %v95
    %v668 = vpop.f32.mrb[0].mxu0
    %v669 = vadd.f32 %v490, %v668
    %v670 = vpop.f32.mrb[0].mxu0
    %v671 = vadd.f32 %v492, %v670
    %672 = vmatprep.mubr.f32.mxu0 %v101
    %673 = vmatmul.mubr.f32.gmra.mrb[0].mxu0 %v100
    %v674 = vpop.f32.mrb[0].mxu0
    %v675 = vadd.f32 %v496, %v674
    %v676 = vpop.f32.mrb[0].mxu0
    %v677 = vadd.f32 %v498, %v676
    %678 = vmatprep.mubr.f32.mxu0 %v106
    %679 = vmatmul.mubr.f32.gmra.mrb[0].mxu0 %v105
    %v680 = vpop.f32.mrb[0].mxu0
    %v681 = vadd.f32 %v502, %v680
    %v682 = vpop.f32.mrb[0].mxu0
    %v683 = vadd.f32 %v504, %v682
    %684 = vmatprep.mubr.f32.mxu0 %v111
    %685 = vmatmul.mubr.f32.gmra.mrb[0].mxu0 %v110
    %v686 = vpop.f32.mrb[0].mxu0
    %v687 = vadd.f32 %v508, %v686
    %v688 = vpop.f32.mrb[0].mxu0
    %v689 = vadd.f32 %v510, %v688
    %690 = vmatprep.mubr.f32.mxu0 %v116
    %691 = vmatmul.mubr.f32.gmra.mrb[0].mxu0 %v115
    %v692 = vpop.f32.mrb[0].mxu0
    %v693 = vadd.f32 %v514, %v692
    %v694 = vpop.f32.mrb[0].mxu0
    %v695 = vadd.f32 %v516, %v694
    %696 = vmatprep.mubr.f32.mxu0 %v121
    %697 = vmatmul.mubr.f32.gmra.mrb[0].mxu0 %v120
    %v698 = vpop.f32.mrb[0].mxu0
    %v699 = vadd.f32 %v520, %v698
    %v700 = vpop.f32.mrb[0].mxu0
    %v701 = vadd.f32 %v522, %v700
    %702 = vmatprep.mubr.f32.mxu0 %v126
    %703 = vmatmul.mubr.f32.gmra.mrb[0].mxu0 %v125
    %v704 = vpop.f32.mrb[0].mxu0
    %v705 = vadd.f32 %v526, %v704
    %v706 = vpop.f32.mrb[0].mxu0
    %v707 = vadd.f32 %v528, %v706
    %708 = vdwg.mxu0
    %709 = vmatprep.subr.mxu0 %v257
    %710 = vmatpush1.msra.mxu0 %v256
    %711 = vmatprep.subr.mxu0 %v259
    %712 = vmatpush1.msra.mxu0 %v258
    %713 = vmatprep.subr.mxu0 %v261
    %714 = vmatpush1.msra.mxu0 %v260
    %715 = vmatprep.subr.mxu0 %v263
    %716 = vmatpush1.msra.mxu0 %v262
    %717 = vmatprep.subr.mxu0 %v265
    %718 = vmatpush1.msra.mxu0 %v264
    %719 = vmatprep.subr.mxu0 %v267
    %720 = vmatpush1.msra.mxu0 %v266
    %721 = vmatprep.subr.mxu0 %v269
    %722 = vmatpush1.msra.mxu0 %v268
    %723 = vmatprep.subr.mxu0 %v271
    %724 = vmatpush1.msra.mxu0 %v270
    %725 = vmatprep.subr.mxu0 %v273
    %726 = vmatpush1.msra.mxu0 %v272
    %727 = vmatprep.subr.mxu0 %v275
    %728 = vmatpush1.msra.mxu0 %v274
    %729 = vmatprep.subr.mxu0 %v277
    %730 = vmatpush1.msra.mxu0 %v276
    %731 = vmatprep.subr.mxu0 %v279
    %732 = vmatpush1.msra.mxu0 %v278
    %733 = vmatprep.subr.mxu0 %v281
    %734 = vmatpush1.msra.mxu0 %v280
    %735 = vmatprep.subr.mxu0 %v283
    %736 = vmatpush1.msra.mxu0 %v282
    %737 = vmatprep.subr.mxu0 %v349
    %738 = vmatpush1.msra.mxu0 %v346
    %739 = vmatprep.subr.mxu0 0.0
    %740 = vmatpush1.msra.mxu0 0.0
    %741 = vmatprep.subr.mxu0 0.0
    %742 = vmatpush1.msra.mxu0 0.0
    %743 = vmatprep.subr.mxu0 0.0
    %744 = vmatpush1.msra.mxu0 0.0
    %745 = vmatprep.subr.mxu0 0.0
    %746 = vmatpush1.msra.mxu0 0.0
    %747 = vmatprep.subr.mxu0 0.0
    %748 = vmatpush1.msra.mxu0 0.0
    %749 = vmatprep.subr.mxu0 0.0
    %750 = vmatpush1.msra.mxu0 0.0
    %751 = vmatprep.subr.mxu0 0.0
    %752 = vmatpush1.msra.mxu0 0.0
    %753 = vmatprep.subr.mxu0 0.0
    %754 = vmatpush1.msra.mxu0 0.0
    %755 = vmatprep.subr.mxu0 0.0
    %756 = vmatpush1.msra.mxu0 0.0
    %757 = vmatprep.subr.mxu0 0.0
    %758 = vmatpush1.msra.mxu0 0.0
    %759 = vmatprep.subr.mxu0 0.0
    %760 = vmatpush1.msra.mxu0 0.0
    %761 = vmatprep.subr.mxu0 0.0
    %762 = vmatpush1.msra.mxu0 0.0
    %763 = vmatprep.subr.mxu0 0.0
    %764 = vmatpush1.msra.mxu0 0.0
    %765 = vmatprep.subr.mxu0 0.0
    %766 = vmatpush1.msra.mxu0 0.0
    %767 = vmatprep.subr.mxu0 0.0
    %768 = vmatpush1.msra.mxu0 0.0
    %769 = vmatprep.subr.mxu0 0.0
    %770 = vmatpush1.msra.mxu0 0.0
    %771 = vmatprep.subr.mxu0 0.0
    %772 = vmatpush1.msra.mxu0 0.0
    %773 = vmatprep.mubr.f32.mxu0 0.0
    %774 = vmatmul.mubr.f32.gmra.mrb[0].mxu0 %v288
    %v775 = vpop.f32.mrb[0].mxu0
    %v776 = vadd.f32 %v597, %v775
    %v777 = vpop.f32.mrb[0].mxu0
    %v778 = vadd.f32 %v599, %v777
    %779 = vmatprep.mubr.f32.mxu0 0.0
    %780 = vmatmul.mubr.f32.gmra.mrb[0].mxu0 %v291
    %v781 = vpop.f32.mrb[0].mxu0
    %v782 = vadd.f32 %v603, %v781
    %v783 = vpop.f32.mrb[0].mxu0
    %v784 = vadd.f32 %v605, %v783
    %785 = vmatprep.mubr.f32.mxu0 0.0
    %786 = vmatmul.mubr.f32.gmra.mrb[0].mxu0 %v294
    %v787 = vpop.f32.mrb[0].mxu0
    %v788 = vadd.f32 %v609, %v787
    %v789 = vpop.f32.mrb[0].mxu0
    %v790 = vadd.f32 %v611, %v789
    %791 = vmatprep.mubr.f32.mxu0 0.0
    %792 = vmatmul.mubr.f32.gmra.mrb[0].mxu0 %v297
    %v793 = vpop.f32.mrb[0].mxu0
    %v794 = vadd.f32 %v615, %v793
    %v795 = vpop.f32.mrb[0].mxu0
    %v796 = vadd.f32 %v617, %v795
    %797 = vmatprep.mubr.f32.mxu0 0.0
    %798 = vmatmul.mubr.f32.gmra.mrb[0].mxu0 %v300
    %v799 = vpop.f32.mrb[0].mxu0
    %v800 = vadd.f32 %v621, %v799
    %v801 = vpop.f32.mrb[0].mxu0
    %v802 = vadd.f32 %v623, %v801
    %803 = vmatprep.mubr.f32.mxu0 0.0
    %804 = vmatmul.mubr.f32.gmra.mrb[0].mxu0 %v303
    %v805 = vpop.f32.mrb[0].mxu0
    %v806 = vadd.f32 %v627, %v805
    %v807 = vpop.f32.mrb[0].mxu0
    %v808 = vadd.f32 %v629, %v807
    %809 = vmatprep.mubr.f32.mxu0 0.0
    %810 = vmatmul.mubr.f32.gmra.mrb[0].mxu0 %v306
    %v811 = vpop.f32.mrb[0].mxu0
    %v812 = vadd.f32 %v633, %v811
    %v813 = vpop.f32.mrb[0].mxu0
    %v814 = vadd.f32 %v635, %v813
    %815 = vmatprep.mubr.f32.mxu0 0.0
    %816 = vmatmul.mubr.f32.gmra.mrb[0].mxu0 %v309
    %v817 = vpop.f32.mrb[0].mxu0
    %v818 = vadd.f32 %v639, %v817
    %v819 = vpop.f32.mrb[0].mxu0
    %v820 = vadd.f32 %v641, %v819
    %821 = vmatprep.mubr.f32.mxu0 0.0
    %822 = vmatmul.mubr.f32.gmra.mrb[0].mxu0 %v312
    %v823 = vpop.f32.mrb[0].mxu0
    %v824 = vadd.f32 %v645, %v823
    %v825 = vpop.f32.mrb[0].mxu0
    %v826 = vadd.f32 %v647, %v825
    %827 = vmatprep.mubr.f32.mxu0 0.0
    %828 = vmatmul.mubr.f32.gmra.mrb[0].mxu0 %v315
    %v829 = vpop.f32.mrb[0].mxu0
    %v830 = vadd.f32 %v651, %v829
    %v831 = vpop.f32.mrb[0].mxu0
    %v832 = vadd.f32 %v653, %v831
    %833 = vmatprep.mubr.f32.mxu0 0.0
    %834 = vmatmul.mubr.f32.gmra.mrb[0].mxu0 %v318
    %v835 = vpop.f32.mrb[0].mxu0
    %v836 = vadd.f32 %v657, %v835
    %v837 = vpop.f32.mrb[0].mxu0
    %v838 = vadd.f32 %v659, %v837
    %839 = vmatprep.mubr.f32.mxu0 0.0
    %840 = vmatmul.mubr.f32.gmra.mrb[0].mxu0 %v321
    %v841 = vpop.f32.mrb[0].mxu0
    %v842 = vadd.f32 %v663, %v841
    %v843 = vpop.f32.mrb[0].mxu0
    %v844 = vadd.f32 %v665, %v843
    %845 = vmatprep.mubr.f32.mxu0 0.0
    %846 = vmatmul.mubr.f32.gmra.mrb[0].mxu0 %v324
    %v847 = vpop.f32.mrb[0].mxu0
    %v848 = vadd.f32 %v669, %v847
    %v849 = vpop.f32.mrb[0].mxu0
    %v850 = vadd.f32 %v671, %v849
    %851 = vmatprep.mubr.f32.mxu0 0.0
    %852 = vmatmul.mubr.f32.gmra.mrb[0].mxu0 %v327
    %v853 = vpop.f32.mrb[0].mxu0
    %v854 = vadd.f32 %v675, %v853
    %v855 = vpop.f32.mrb[0].mxu0
    %v856 = vadd.f32 %v677, %v855
    %857 = vmatprep.mubr.f32.mxu0 0.0
    %858 = vmatmul.mubr.f32.gmra.mrb[0].mxu0 %v330
    %v859 = vpop.f32.mrb[0].mxu0
    %v860 = vadd.f32 %v681, %v859
    %v861 = vpop.f32.mrb[0].mxu0
    %v862 = vadd.f32 %v683, %v861
    %863 = vmatprep.mubr.f32.mxu0 0.0
    %864 = vmatmul.mubr.f32.gmra.mrb[0].mxu0 %v333
    %v865 = vpop.f32.mrb[0].mxu0
    %v866 = vadd.f32 %v687, %v865
    %v867 = vpop.f32.mrb[0].mxu0
    %v868 = vadd.f32 %v689, %v867
    %869 = vmatprep.mubr.f32.mxu0 0.0
    %870 = vmatmul.mubr.f32.gmra.mrb[0].mxu0 %v336
    %v871 = vpop.f32.mrb[0].mxu0
    %v872 = vadd.f32 %v693, %v871
    %v873 = vpop.f32.mrb[0].mxu0
    %v874 = vadd.f32 %v695, %v873
    %875 = vmatprep.mubr.f32.mxu0 0.0
    %876 = vmatmul.mubr.f32.gmra.mrb[0].mxu0 %v339
    %v877 = vpop.f32.mrb[0].mxu0
    %v878 = vadd.f32 %v699, %v877
    %v879 = vpop.f32.mrb[0].mxu0
    %v880 = vadd.f32 %v701, %v879
    %881 = vmatprep.mubr.f32.mxu0 0.0
    %882 = vmatmul.mubr.f32.gmra.mrb[0].mxu0 %v342
    %v883 = vpop.f32.mrb[0].mxu0
    %v884 = vadd.f32 %v705, %v883
    %v885 = vpop.f32.mrb[0].mxu0
    %v886 = vadd.f32 %v707, %v885
    %887 = vdwg.mxu0
    %s888 = scalar_lea.vmem %s0, 1264
    %v889 = vld [vmem:[%s888] sm:$0xff]
    %v890 = vld [vmem:[%s888 + $0x8] sm:$0xff]
    %v891 = vld [vmem:[%s888 + $0x10] sm:$0xff]
    %v892 = vld [vmem:[%s888 + $0x18] sm:$0xff]
    %v893 = vld [vmem:[%s888 + $0x20] sm:$0xff]
    %v894 = vld [vmem:[%s888 + $0x28] sm:$0xff]
    %v895 = vld [vmem:[%s888 + $0x30] sm:$0xff]
    %v896 = vld [vmem:[%s888 + $0x38] sm:$0xff]
    %v897 = vld [vmem:[%s888 + $0x40] sm:$0xff]
    %v898 = vld [vmem:[%s888 + $0x48] sm:$0xff]
    %v899 = vld [vmem:[%s888 + $0x50] sm:$0xff]
    %v900 = vld [vmem:[%s888 + $0x58] sm:$0xff]
    %v901 = vld [vmem:[%s888 + $0x60] sm:$0xff]
    %v902 = vld [vmem:[%s888 + $0x68] sm:$0xff]
    %v903 = vld [vmem:[%s888 + $0x70] sm:$0xff]
    %v904 = vld [vmem:[%s888 + $0x78] sm:$0xff]
    %v905 = vld [vmem:[%s888 + $0x80] sm:$0xff]
    %v906 = vld [vmem:[%s888 + $0x88] sm:$0xff]
    %v907 = vld [vmem:[%s888 + $0x90] sm:$0xff]
    %v908 = vld [vmem:[%s888 + $0x98] sm:$0xff]
    %v909 = vld [vmem:[%s888 + $0xa0] sm:$0xff]
    %v910 = vld [vmem:[%s888 + $0xa8] sm:$0xff]
    %v911 = vld [vmem:[%s888 + $0xb0] sm:$0xff]
    %v912 = vld [vmem:[%s888 + $0xb8] sm:$0xff]
    %v913 = vld [vmem:[%s888 + $0xc0] sm:$0xff]
    %v914 = vld [vmem:[%s888 + $0xc8] sm:$0xff]
    %v915 = vld [vmem:[%s888 + $0xd0] sm:$0xff]
    %v916 = vld [vmem:[%s888 + $0xd8] sm:$0xff]
    %v917 = vld [vmem:[%s888 + $0xe0] sm:$0xff]
    %v918 = vld [vmem:[%s888 + $0xe8] sm:$0xff]
    %v919 = vld [vmem:[%s888 + $0xf0] sm:$0xff]
    %v920 = vld [vmem:[%s888 + $0xf8] sm:$0xff]
    %v921 = vld [vmem:[%s888 + $0x100] sm:$0xff]
    %v922 = vld [vmem:[%s888 + $0x108] sm:$0xff]
    %v923 = vld [vmem:[%s888 + $0x110] sm:$0xff]
    %v924 = vld [vmem:[%s888 + $0x118] sm:$0xff]
    %v925 = vld [vmem:[%s888 + $0x120] sm:$0xff]
    %v926 = vld [vmem:[%s888 + $0x128] sm:$0xff]
    %v927 = vld [vmem:[%s888 + $0x130] sm:$0xff]
    %v928 = vld [vmem:[%s888 + $0x138] sm:$0xff]
    %v929 = vld [vmem:[%s888 + $0x140] sm:$0xff]
    %v930 = vld [vmem:[%s888 + $0x148] sm:$0xff]
    %v931 = vld [vmem:[%s888 + $0x150] sm:$0xff]
    %v932 = vld [vmem:[%s888 + $0x158] sm:$0xff]
    %v933 = vld [vmem:[%s888 + $0x160] sm:$0xff]
    %v934 = vld [vmem:[%s888 + $0x168] sm:$0xff]
    %v935 = vld [vmem:[%s888 + $0x170] sm:$0xff]
    %v936 = vld [vmem:[%s888 + $0x178] sm:$0xff]
    %v937 = vld [vmem:[%s888 + $0x180] sm:$0xff]
    %v938 = vld [vmem:[%s888 + $0x188] sm:$0xff]
    %v939 = vld [vmem:[%s888 + $0x190] sm:$0xff]
    %v940 = vld [vmem:[%s888 + $0x198] sm:$0xff]
    %v941 = vld [vmem:[%s888 + $0x1a0] sm:$0xff]
    %v942 = vld [vmem:[%s888 + $0x1a8] sm:$0xff]
    %v943 = vld [vmem:[%s888 + $0x1b0] sm:$0xff]
    %v944 = vld [vmem:[%s888 + $0x1b8] sm:$0xff]
    %v945 = vld [vmem:[%s888 + $0x1c0] sm:$0xff]
    %v946 = vld [vmem:[%s888 + $0x1c8] sm:$0xff]
    %v947 = vld [vmem:[%s888 + $0x1d0] sm:$0xff]
    %v948 = vld [vmem:[%s888 + $0x1d8] sm:$0xff]
    %v949 = vld [vmem:[%s888 + $0x1e0] sm:$0xff]
    %v950 = vld [vmem:[%s888 + $0x1e8] sm:$0xff]
    %v951 = vld [vmem:[%s888 + $0x1f0] sm:$0xff]
    %v952 = vld [vmem:[%s888 + $0x1f8] sm:$0xff]
    %v953 = vld [vmem:[%s888 + $0x200] sm:$0xff]
    %v954 = vld [vmem:[%s888 + $0x208] sm:$0xff]
    %v955 = vld [vmem:[%s888 + $0x210] sm:$0xff]
    %v956 = vld [vmem:[%s888 + $0x218] sm:$0xff]
    %v957 = vld [vmem:[%s888 + $0x220] sm:$0xff]
    %v958 = vld [vmem:[%s888 + $0x228] sm:$0xff]
    %v959 = vld [vmem:[%s888 + $0x230] sm:$0xff]
    %v960 = vld [vmem:[%s888 + $0x238] sm:$0xff]
    %v961 = vld [vmem:[%s888 + $0x240] sm:$0xff]
    %v962 = vld [vmem:[%s888 + $0x248] sm:$0xff]
    %v963 = vld [vmem:[%s888 + $0x250] sm:$0xff]
    %v964 = vld [vmem:[%s888 + $0x258] sm:$0xff]
    %v965 = vld [vmem:[%s888 + $0x260] sm:$0xff]
    %v966 = vld [vmem:[%s888 + $0x268] sm:$0xff]
    %v967 = vld [vmem:[%s888 + $0x270] sm:$0xff]
    %v968 = vld [vmem:[%s888 + $0x278] sm:$0xff]
    %v969 = vld [vmem:[%s888 + $0x280] sm:$0xff]
    %v970 = vld [vmem:[%s888 + $0x288] sm:$0xff]
    %v971 = vld [vmem:[%s888 + $0x290] sm:$0xff]
    %v972 = vld [vmem:[%s888 + $0x298] sm:$0xff]
    %v973 = vld [vmem:[%s888 + $0x2a0] sm:$0xff]
    %v974 = vld [vmem:[%s888 + $0x2a8] sm:$0xff]
    %v975 = vld [vmem:[%s888 + $0x2b0] sm:$0xff]
    %v976 = vld [vmem:[%s888 + $0x2b8] sm:$0xff]
    %v977 = vld [vmem:[%s888 + $0x2c0] sm:$0xff]
    %v978 = vld [vmem:[%s888 + $0x2c8] sm:$0xff]
    %v979 = vld [vmem:[%s888 + $0x2d0] sm:$0xff]
    %v980 = vld [vmem:[%s888 + $0x2d8] sm:$0xff]
    %v981 = vld [vmem:[%s888 + $0x2e0] sm:$0xff]
    %v982 = vld [vmem:[%s888 + $0x2e8] sm:$0xff]
    %v983 = vld [vmem:[%s888 + $0x2f0] sm:$0xff]
    %v984 = vld [vmem:[%s888 + $0x2f8] sm:$0xff]
    %v985 = vld [vmem:[%s888 + $0x300] sm:$0xff]
    %v986 = vld [vmem:[%s888 + $0x308] sm:$0xff]
    %v987 = vld [vmem:[%s888 + $0x310] sm:$0xff]
    %v988 = vld [vmem:[%s888 + $0x318] sm:$0xff]
    %v989 = vld [vmem:[%s888 + $0x320] sm:$0xff]
    %v990 = vld [vmem:[%s888 + $0x328] sm:$0xff]
    %v991 = vld [vmem:[%s888 + $0x330] sm:$0xff]
    %v992 = vld [vmem:[%s888 + $0x338] sm:$0xff]
    %v993 = vld [vmem:[%s888 + $0x340] sm:$0xff]
    %v994 = vld [vmem:[%s888 + $0x348] sm:$0xff]
    %v995 = vld [vmem:[%s888 + $0x350] sm:$0xff]
    %v996 = vld [vmem:[%s888 + $0x358] sm:$0xff]
    %v997 = vld [vmem:[%s888 + $0x360] sm:$0xff]
    %v998 = vld [vmem:[%s888 + $0x368] sm:$0xff]
    %v999 = vld [vmem:[%s888 + $0x370] sm:$0xff]
    %v1000 = vld [vmem:[%s888 + $0x378] sm:$0xff]
    %v1001 = vld [vmem:[%s888 + $0x380] sm:$0xff]
    %v1002 = vld [vmem:[%s888 + $0x388] sm:$0xff]
    %v1003 = vld [vmem:[%s888 + $0x390] sm:$0xff]
    %v1004 = vld [vmem:[%s888 + $0x398] sm:$0xff]
    %v1005 = vld [vmem:[%s888 + $0x3a0] sm:$0xff]
    %v1006 = vld [vmem:[%s888 + $0x3a8] sm:$0xff]
    %v1007 = vld [vmem:[%s888 + $0x3b0] sm:$0xff]
    %v1008 = vld [vmem:[%s888 + $0x3b8] sm:$0xff]
    %v1009 = vld [vmem:[%s888 + $0x3c0] sm:$0xff]
    %v1010 = vld [vmem:[%s888 + $0x3c8] sm:$0xff]
    %v1011 = vld [vmem:[%s888 + $0x3d0] sm:$0xff]
    %v1012 = vld [vmem:[%s888 + $0x3d8] sm:$0xff]
    %v1013 = vld [vmem:[%s888 + $0x3e0] sm:$0xff]
    %v1014 = vld [vmem:[%s888 + $0x3e8] sm:$0xff]
    %v1015 = vld [vmem:[%s888 + $0x3f0] sm:$0xff]
    %v1016 = vld [vmem:[%s888 + $0x3f8] sm:$0xff]
    %v1017 = vld [vmem:[%s888 + $0x400] sm:$0xff]
    %v1018 = vld [vmem:[%s888 + $0x408] sm:$0xff]
    %v1019 = vld [vmem:[%s888 + $0x410] sm:$0xff]
    %v1020 = vld [vmem:[%s888 + $0x418] sm:$0xff]
    %v1021 = vld [vmem:[%s888 + $0x420] sm:$0xff]
    %v1022 = vld [vmem:[%s888 + $0x428] sm:$0xff]
    %v1023 = vld [vmem:[%s888 + $0x430] sm:$0xff]
    %v1024 = vld [vmem:[%s888 + $0x438] sm:$0xff]
    %v1025 = vld [vmem:[%s888 + $0x440] sm:$0xff]
    %v1026 = vld [vmem:[%s888 + $0x448] sm:$0xff]
    %v1027 = vld [vmem:[%s888 + $0x450] sm:$0xff]
    %v1028 = vld [vmem:[%s888 + $0x458] sm:$0xff]
    %v1029 = vld [vmem:[%s888 + $0x460] sm:$0xff]
    %v1030 = vld [vmem:[%s888 + $0x468] sm:$0xff]
    %v1031 = vld [vmem:[%s888 + $0x470] sm:$0xff]
    %v1032 = vld [vmem:[%s888 + $0x478] sm:$0xff]
    %v1033 = vld [vmem:[%s888 + $0x480] sm:$0xff]
    %v1034 = vld [vmem:[%s888 + $0x488] sm:$0xff]
    %v1035 = vld [vmem:[%s888 + $0x490] sm:$0xff]
    %v1036 = vld [vmem:[%s888 + $0x498] sm:$0xff]
    %v1037 = vld [vmem:[%s888 + $0x4a0] sm:$0xff]
    %v1038 = vld [vmem:[%s888 + $0x4a8] sm:$0xff]
    %v1039 = vld [vmem:[%s888 + $0x4b0] sm:$0xff]
    %v1040 = vld [vmem:[%s888 + $0x4b8] sm:$0xff]
    %v1041 = vld [vmem:[%s888 + $0x4c0] sm:$0xff]
    %v1042 = vld [vmem:[%s888 + $0x4c8] sm:$0xff]
    %v1043 = vld [vmem:[%s888 + $0x4d0] sm:$0xff]
    %v1044 = vld [vmem:[%s888 + $0x4d8] sm:$0xff]
    %v1045 = vld [vmem:[%s888 + $0x4e0] sm:$0x1]
    %v1046 = vld [vmem:[%s888 + $0x4e8] sm:$0x1]
    %v1048 = vsel %vm344, %v1045, 0
    %v1051 = vsel %vm344, %v1046, 0
    %1053 = vmatprep.subr.mxu0 %v890
    %1054 = vmatpush1.msra.mxu0 %v889
    %1055 = vmatprep.subr.mxu0 %v892
    %1056 = vmatpush1.msra.mxu0 %v891
    %1057 = vmatprep.subr.mxu0 %v894
    %1058 = vmatpush1.msra.mxu0 %v893
    %1059 = vmatprep.subr.mxu0 %v896
    %1060 = vmatpush1.msra.mxu0 %v895
    %1061 = vmatprep.subr.mxu0 %v898
    %1062 = vmatpush1.msra.mxu0 %v897
    %1063 = vmatprep.subr.mxu0 %v900
    %1064 = vmatpush1.msra.mxu0 %v899
    %1065 = vmatprep.subr.mxu0 %v902
    %1066 = vmatpush1.msra.mxu0 %v901
    %1067 = vmatprep.subr.mxu0 %v904
    %1068 = vmatpush1.msra.mxu0 %v903
    %1069 = vmatprep.subr.mxu0 %v906
    %1070 = vmatpush1.msra.mxu0 %v905
    %1071 = vmatprep.subr.mxu0 %v908
    %1072 = vmatpush1.msra.mxu0 %v907
    %1073 = vmatprep.subr.mxu0 %v910
    %1074 = vmatpush1.msra.mxu0 %v909
    %1075 = vmatprep.subr.mxu0 %v912
    %1076 = vmatpush1.msra.mxu0 %v911
    %1077 = vmatprep.subr.mxu0 %v914
    %1078 = vmatpush1.msra.mxu0 %v913
    %1079 = vmatprep.subr.mxu0 %v916
    %1080 = vmatpush1.msra.mxu0 %v915
    %1081 = vmatprep.subr.mxu0 %v918
    %1082 = vmatpush1.msra.mxu0 %v917
    %1083 = vmatprep.subr.mxu0 %v920
    %1084 = vmatpush1.msra.mxu0 %v919
    %1085 = vmatprep.subr.mxu0 %v922
    %1086 = vmatpush1.msra.mxu0 %v921
    %1087 = vmatprep.subr.mxu0 %v924
    %1088 = vmatpush1.msra.mxu0 %v923
    %1089 = vmatprep.subr.mxu0 %v926
    %1090 = vmatpush1.msra.mxu0 %v925
    %1091 = vmatprep.subr.mxu0 %v928
    %1092 = vmatpush1.msra.mxu0 %v927
    %1093 = vmatprep.subr.mxu0 %v930
    %1094 = vmatpush1.msra.mxu0 %v929
    %1095 = vmatprep.subr.mxu0 %v932
    %1096 = vmatpush1.msra.mxu0 %v931
    %1097 = vmatprep.subr.mxu0 %v934
    %1098 = vmatpush1.msra.mxu0 %v933
    %1099 = vmatprep.subr.mxu0 %v936
    %1100 = vmatpush1.msra.mxu0 %v935
    %1101 = vmatprep.subr.mxu0 %v938
    %1102 = vmatpush1.msra.mxu0 %v937
    %1103 = vmatprep.subr.mxu0 %v940
    %1104 = vmatpush1.msra.mxu0 %v939
    %1105 = vmatprep.subr.mxu0 %v942
    %1106 = vmatpush1.msra.mxu0 %v941
    %1107 = vmatprep.subr.mxu0 %v944
    %1108 = vmatpush1.msra.mxu0 %v943
    %1109 = vmatprep.subr.mxu0 %v946
    %1110 = vmatpush1.msra.mxu0 %v945
    %1111 = vmatprep.subr.mxu0 %v948
    %1112 = vmatpush1.msra.mxu0 %v947
    %1113 = vmatprep.subr.mxu0 %v950
    %1114 = vmatpush1.msra.mxu0 %v949
    %1115 = vmatprep.subr.mxu0 %v952
    %1116 = vmatpush1.msra.mxu0 %v951
    %1117 = vmatprep.mubr.f32.mxu0 %v34
    %1118 = vmatmul.mubr.f32.gmra.mrb[0].mxu0 %v33
    %v1119 = vpop.f32.mrb[0].mxu0
    %v1120 = vadd.f32 0.0, %v1119
    %v1121 = vpop.f32.mrb[0].mxu0
    %v1122 = vadd.f32 0.0, %v1121
    %1123 = vmatprep.mubr.f32.mxu0 %v39
    %1124 = vmatmul.mubr.f32.gmra.mrb[0].mxu0 %v38
    %v1125 = vpop.f32.mrb[0].mxu0
    %v1126 = vadd.f32 0.0, %v1125
    %v1127 = vpop.f32.mrb[0].mxu0
    %v1128 = vadd.f32 0.0, %v1127
    %1129 = vmatprep.mubr.f32.mxu0 %v44
    %1130 = vmatmul.mubr.f32.gmra.mrb[0].mxu0 %v43
    %v1131 = vpop.f32.mrb[0].mxu0
    %v1132 = vadd.f32 0.0, %v1131
    %v1133 = vpop.f32.mrb[0].mxu0
    %v1134 = vadd.f32 0.0, %v1133
    %1135 = vmatprep.mubr.f32.mxu0 %v49
    %1136 = vmatmul.mubr.f32.gmra.mrb[0].mxu0 %v48
    %v1137 = vpop.f32.mrb[0].mxu0
    %v1138 = vadd.f32 0.0, %v1137
    %v1139 = vpop.f32.mrb[0].mxu0
    %v1140 = vadd.f32 0.0, %v1139
    %1141 = vmatprep.mubr.f32.mxu0 %v54
    %1142 = vmatmul.mubr.f32.gmra.mrb[0].mxu0 %v53
    %v1143 = vpop.f32.mrb[0].mxu0
    %v1144 = vadd.f32 0.0, %v1143
    %v1145 = vpop.f32.mrb[0].mxu0
    %v1146 = vadd.f32 0.0, %v1145
    %1147 = vmatprep.mubr.f32.mxu0 %v59
    %1148 = vmatmul.mubr.f32.gmra.mrb[0].mxu0 %v58
    %v1149 = vpop.f32.mrb[0].mxu0
    %v1150 = vadd.f32 0.0, %v1149
    %v1151 = vpop.f32.mrb[0].mxu0
    %v1152 = vadd.f32 0.0, %v1151
    %1153 = vmatprep.mubr.f32.mxu0 %v64
    %1154 = vmatmul.mubr.f32.gmra.mrb[0].mxu0 %v63
    %v1155 = vpop.f32.mrb[0].mxu0
    %v1156 = vadd.f32 0.0, %v1155
    %v1157 = vpop.f32.mrb[0].mxu0
    %v1158 = vadd.f32 0.0, %v1157
    %1159 = vmatprep.mubr.f32.mxu0 %v69
    %1160 = vmatmul.mubr.f32.gmra.mrb[0].mxu0 %v68
    %v1161 = vpop.f32.mrb[0].mxu0
    %v1162 = vadd.f32 0.0, %v1161
    %v1163 = vpop.f32.mrb[0].mxu0
    %v1164 = vadd.f32 0.0, %v1163
    %1165 = vmatprep.mubr.f32.mxu0 %v74
    %1166 = vmatmul.mubr.f32.gmra.mrb[0].mxu0 %v73
    %v1167 = vpop.f32.mrb[0].mxu0
    %v1168 = vadd.f32 0.0, %v1167
    %v1169 = vpop.f32.mrb[0].mxu0
    %v1170 = vadd.f32 0.0, %v1169
    %1171 = vmatprep.mubr.f32.mxu0 %v79
    %1172 = vmatmul.mubr.f32.gmra.mrb[0].mxu0 %v78
    %v1173 = vpop.f32.mrb[0].mxu0
    %v1174 = vadd.f32 0.0, %v1173
    %v1175 = vpop.f32.mrb[0].mxu0
    %v1176 = vadd.f32 0.0, %v1175
    %1177 = vmatprep.mubr.f32.mxu0 %v84
    %1178 = vmatmul.mubr.f32.gmra.mrb[0].mxu0 %v83
    %v1179 = vpop.f32.mrb[0].mxu0
    %v1180 = vadd.f32 0.0, %v1179
    %v1181 = vpop.f32.mrb[0].mxu0
    %v1182 = vadd.f32 0.0, %v1181
    %1183 = vmatprep.mubr.f32.mxu0 %v89
    %1184 = vmatmul.mubr.f32.gmra.mrb[0].mxu0 %v88
    %v1185 = vpop.f32.mrb[0].mxu0
    %v1186 = vadd.f32 0.0, %v1185
    %v1187 = vpop.f32.mrb[0].mxu0
    %v1188 = vadd.f32 0.0, %v1187
    %1189 = vmatprep.mubr.f32.mxu0 %v94
    %1190 = vmatmul.mubr.f32.gmra.mrb[0].mxu0 %v93
    %v1191 = vpop.f32.mrb[0].mxu0
    %v1192 = vadd.f32 0.0, %v1191
    %v1193 = vpop.f32.mrb[0].mxu0
    %v1194 = vadd.f32 0.0, %v1193
    %1195 = vmatprep.mubr.f32.mxu0 %v99
    %1196 = vmatmul.mubr.f32.gmra.mrb[0].mxu0 %v98
    %v1197 = vpop.f32.mrb[0].mxu0
    %v1198 = vadd.f32 0.0, %v1197
    %v1199 = vpop.f32.mrb[0].mxu0
    %v1200 = vadd.f32 0.0, %v1199
    %1201 = vmatprep.mubr.f32.mxu0 %v104
    %1202 = vmatmul.mubr.f32.gmra.mrb[0].mxu0 %v103
    %v1203 = vpop.f32.mrb[0].mxu0
    %v1204 = vadd.f32 0.0, %v1203
    %v1205 = vpop.f32.mrb[0].mxu0
    %v1206 = vadd.f32 0.0, %v1205
    %1207 = vmatprep.mubr.f32.mxu0 %v109
    %1208 = vmatmul.mubr.f32.gmra.mrb[0].mxu0 %v108
    %v1209 = vpop.f32.mrb[0].mxu0
    %v1210 = vadd.f32 0.0, %v1209
    %v1211 = vpop.f32.mrb[0].mxu0
    %v1212 = vadd.f32 0.0, %v1211
    %1213 = vmatprep.mubr.f32.mxu0 %v114
    %1214 = vmatmul.mubr.f32.gmra.mrb[0].mxu0 %v113
    %v1215 = vpop.f32.mrb[0].mxu0
    %v1216 = vadd.f32 0.0, %v1215
    %v1217 = vpop.f32.mrb[0].mxu0
    %v1218 = vadd.f32 0.0, %v1217
    %1219 = vmatprep.mubr.f32.mxu0 %v119
    %1220 = vmatmul.mubr.f32.gmra.mrb[0].mxu0 %v118
    %v1221 = vpop.f32.mrb[0].mxu0
    %v1222 = vadd.f32 0.0, %v1221
    %v1223 = vpop.f32.mrb[0].mxu0
    %v1224 = vadd.f32 0.0, %v1223
    %1225 = vmatprep.mubr.f32.mxu0 %v124
    %1226 = vmatmul.mubr.f32.gmra.mrb[0].mxu0 %v123
    %v1227 = vpop.f32.mrb[0].mxu0
    %v1228 = vadd.f32 0.0, %v1227
    %v1229 = vpop.f32.mrb[0].mxu0
    %v1230 = vadd.f32 0.0, %v1229
    %1231 = vdwg.mxu0
    %1232 = vmatprep.subr.mxu0 %v954
    %1233 = vmatpush1.msra.mxu0 %v953
    %1234 = vmatprep.subr.mxu0 %v956
    %1235 = vmatpush1.msra.mxu0 %v955
    %1236 = vmatprep.subr.mxu0 %v958
    %1237 = vmatpush1.msra.mxu0 %v957
    %1238 = vmatprep.subr.mxu0 %v960
    %1239 = vmatpush1.msra.mxu0 %v959
    %1240 = vmatprep.subr.mxu0 %v962
    %1241 = vmatpush1.msra.mxu0 %v961
    %1242 = vmatprep.subr.mxu0 %v964
    %1243 = vmatpush1.msra.mxu0 %v963
    %1244 = vmatprep.subr.mxu0 %v966
    %1245 = vmatpush1.msra.mxu0 %v965
    %1246 = vmatprep.subr.mxu0 %v968
    %1247 = vmatpush1.msra.mxu0 %v967
    %1248 = vmatprep.subr.mxu0 %v970
    %1249 = vmatpush1.msra.mxu0 %v969
    %1250 = vmatprep.subr.mxu0 %v972
    %1251 = vmatpush1.msra.mxu0 %v971
    %1252 = vmatprep.subr.mxu0 %v974
    %1253 = vmatpush1.msra.mxu0 %v973
    %1254 = vmatprep.subr.mxu0 %v976
    %1255 = vmatpush1.msra.mxu0 %v975
    %1256 = vmatprep.subr.mxu0 %v978
    %1257 = vmatpush1.msra.mxu0 %v977
    %1258 = vmatprep.subr.mxu0 %v980
    %1259 = vmatpush1.msra.mxu0 %v979
    %1260 = vmatprep.subr.mxu0 %v982
    %1261 = vmatpush1.msra.mxu0 %v981
    %1262 = vmatprep.subr.mxu0 %v984
    %1263 = vmatpush1.msra.mxu0 %v983
    %1264 = vmatprep.subr.mxu0 %v986
    %1265 = vmatpush1.msra.mxu0 %v985
    %1266 = vmatprep.subr.mxu0 %v988
    %1267 = vmatpush1.msra.mxu0 %v987
    %1268 = vmatprep.subr.mxu0 %v990
    %1269 = vmatpush1.msra.mxu0 %v989
    %1270 = vmatprep.subr.mxu0 %v992
    %1271 = vmatpush1.msra.mxu0 %v991
    %1272 = vmatprep.subr.mxu0 %v994
    %1273 = vmatpush1.msra.mxu0 %v993
    %1274 = vmatprep.subr.mxu0 %v996
    %1275 = vmatpush1.msra.mxu0 %v995
    %1276 = vmatprep.subr.mxu0 %v998
    %1277 = vmatpush1.msra.mxu0 %v997
    %1278 = vmatprep.subr.mxu0 %v1000
    %1279 = vmatpush1.msra.mxu0 %v999
    %1280 = vmatprep.subr.mxu0 %v1002
    %1281 = vmatpush1.msra.mxu0 %v1001
    %1282 = vmatprep.subr.mxu0 %v1004
    %1283 = vmatpush1.msra.mxu0 %v1003
    %1284 = vmatprep.subr.mxu0 %v1006
    %1285 = vmatpush1.msra.mxu0 %v1005
    %1286 = vmatprep.subr.mxu0 %v1008
    %1287 = vmatpush1.msra.mxu0 %v1007
    %1288 = vmatprep.subr.mxu0 %v1010
    %1289 = vmatpush1.msra.mxu0 %v1009
    %1290 = vmatprep.subr.mxu0 %v1012
    %1291 = vmatpush1.msra.mxu0 %v1011
    %1292 = vmatprep.subr.mxu0 %v1014
    %1293 = vmatpush1.msra.mxu0 %v1013
    %1294 = vmatprep.subr.mxu0 %v1016
    %1295 = vmatpush1.msra.mxu0 %v1015
    %1296 = vmatprep.mubr.f32.mxu0 %v36
    %1297 = vmatmul.mubr.f32.gmra.mrb[0].mxu0 %v35
    %v1298 = vpop.f32.mrb[0].mxu0
    %v1299 = vadd.f32 %v1120, %v1298
    %v1300 = vpop.f32.mrb[0].mxu0
    %v1301 = vadd.f32 %v1122, %v1300
    %1302 = vmatprep.mubr.f32.mxu0 %v41
    %1303 = vmatmul.mubr.f32.gmra.mrb[0].mxu0 %v40
    %v1304 = vpop.f32.mrb[0].mxu0
    %v1305 = vadd.f32 %v1126, %v1304
    %v1306 = vpop.f32.mrb[0].mxu0
    %v1307 = vadd.f32 %v1128, %v1306
    %1308 = vmatprep.mubr.f32.mxu0 %v46
    %1309 = vmatmul.mubr.f32.gmra.mrb[0].mxu0 %v45
    %v1310 = vpop.f32.mrb[0].mxu0
    %v1311 = vadd.f32 %v1132, %v1310
    %v1312 = vpop.f32.mrb[0].mxu0
    %v1313 = vadd.f32 %v1134, %v1312
    %1314 = vmatprep.mubr.f32.mxu0 %v51
    %1315 = vmatmul.mubr.f32.gmra.mrb[0].mxu0 %v50
    %v1316 = vpop.f32.mrb[0].mxu0
    %v1317 = vadd.f32 %v1138, %v1316
    %v1318 = vpop.f32.mrb[0].mxu0
    %v1319 = vadd.f32 %v1140, %v1318
    %1320 = vmatprep.mubr.f32.mxu0 %v56
    %1321 = vmatmul.mubr.f32.gmra.mrb[0].mxu0 %v55
    %v1322 = vpop.f32.mrb[0].mxu0
    %v1323 = vadd.f32 %v1144, %v1322
    %v1324 = vpop.f32.mrb[0].mxu0
    %v1325 = vadd.f32 %v1146, %v1324
    %1326 = vmatprep.mubr.f32.mxu0 %v61
    %1327 = vmatmul.mubr.f32.gmra.mrb[0].mxu0 %v60
    %v1328 = vpop.f32.mrb[0].mxu0
    %v1329 = vadd.f32 %v1150, %v1328
    %v1330 = vpop.f32.mrb[0].mxu0
    %v1331 = vadd.f32 %v1152, %v1330
    %1332 = vmatprep.mubr.f32.mxu0 %v66
    %1333 = vmatmul.mubr.f32.gmra.mrb[0].mxu0 %v65
    %v1334 = vpop.f32.mrb[0].mxu0
    %v1335 = vadd.f32 %v1156, %v1334
    %v1336 = vpop.f32.mrb[0].mxu0
    %v1337 = vadd.f32 %v1158, %v1336
    %1338 = vmatprep.mubr.f32.mxu0 %v71
    %1339 = vmatmul.mubr.f32.gmra.mrb[0].mxu0 %v70
    %v1340 = vpop.f32.mrb[0].mxu0
    %v1341 = vadd.f32 %v1162, %v1340
    %v1342 = vpop.f32.mrb[0].mxu0
    %v1343 = vadd.f32 %v1164, %v1342
    %1344 = vmatprep.mubr.f32.mxu0 %v76
    %1345 = vmatmul.mubr.f32.gmra.mrb[0].mxu0 %v75
    %v1346 = vpop.f32.mrb[0].mxu0
    %v1347 = vadd.f32 %v1168, %v1346
    %v1348 = vpop.f32.mrb[0].mxu0
    %v1349 = vadd.f32 %v1170, %v1348
    %1350 = vmatprep.mubr.f32.mxu0 %v81
    %1351 = vmatmul.mubr.f32.gmra.mrb[0].mxu0 %v80
    %v1352 = vpop.f32.mrb[0].mxu0
    %v1353 = vadd.f32 %v1174, %v1352
    %v1354 = vpop.f32.mrb[0].mxu0
    %v1355 = vadd.f32 %v1176, %v1354
    %1356 = vmatprep.mubr.f32.mxu0 %v86
    %1357 = vmatmul.mubr.f32.gmra.mrb[0].mxu0 %v85
    %v1358 = vpop.f32.mrb[0].mxu0
    %v1359 = vadd.f32 %v1180, %v1358
    %v1360 = vpop.f32.mrb[0].mxu0
    %v1361 = vadd.f32 %v1182, %v1360
    %1362 = vmatprep.mubr.f32.mxu0 %v91
    %1363 = vmatmul.mubr.f32.gmra.mrb[0].mxu0 %v90
    %v1364 = vpop.f32.mrb[0].mxu0
    %v1365 = vadd.f32 %v1186, %v1364
    %v1366 = vpop.f32.mrb[0].mxu0
    %v1367 = vadd.f32 %v1188, %v1366
    %1368 = vmatprep.mubr.f32.mxu0 %v96
    %1369 = vmatmul.mubr.f32.gmra.mrb[0].mxu0 %v95
    %v1370 = vpop.f32.mrb[0].mxu0
    %v1371 = vadd.f32 %v1192, %v1370
    %v1372 = vpop.f32.mrb[0].mxu0
    %v1373 = vadd.f32 %v1194, %v1372
    %1374 = vmatprep.mubr.f32.mxu0 %v101
    %1375 = vmatmul.mubr.f32.gmra.mrb[0].mxu0 %v100
    %v1376 = vpop.f32.mrb[0].mxu0
    %v1377 = vadd.f32 %v1198, %v1376
    %v1378 = vpop.f32.mrb[0].mxu0
    %v1379 = vadd.f32 %v1200, %v1378
    %1380 = vmatprep.mubr.f32.mxu0 %v106
    %1381 = vmatmul.mubr.f32.gmra.mrb[0].mxu0 %v105
    %v1382 = vpop.f32.mrb[0].mxu0
    %v1383 = vadd.f32 %v1204, %v1382
    %v1384 = vpop.f32.mrb[0].mxu0
    %v1385 = vadd.f32 %v1206, %v1384
    %1386 = vmatprep.mubr.f32.mxu0 %v111
    %1387 = vmatmul.mubr.f32.gmra.mrb[0].mxu0 %v110
    %v1388 = vpop.f32.mrb[0].mxu0
    %v1389 = vadd.f32 %v1210, %v1388
    %v1390 = vpop.f32.mrb[0].mxu0
    %v1391 = vadd.f32 %v1212, %v1390
    %1392 = vmatprep.mubr.f32.mxu0 %v116
    %1393 = vmatmul.mubr.f32.gmra.mrb[0].mxu0 %v115
    %v1394 = vpop.f32.mrb[0].mxu0
    %v1395 = vadd.f32 %v1216, %v1394
    %v1396 = vpop.f32.mrb[0].mxu0
    %v1397 = vadd.f32 %v1218, %v1396
    %1398 = vmatprep.mubr.f32.mxu0 %v121
    %1399 = vmatmul.mubr.f32.gmra.mrb[0].mxu0 %v120
    %v1400 = vpop.f32.mrb[0].mxu0
    %v1401 = vadd.f32 %v1222, %v1400
    %v1402 = vpop.f32.mrb[0].mxu0
    %v1403 = vadd.f32 %v1224, %v1402
    %1404 = vmatprep.mubr.f32.mxu0 %v126
    %1405 = vmatmul.mubr.f32.gmra.mrb[0].mxu0 %v125
    %v1406 = vpop.f32.mrb[0].mxu0
    %v1407 = vadd.f32 %v1228, %v1406
    %v1408 = vpop.f32.mrb[0].mxu0
    %v1409 = vadd.f32 %v1230, %v1408
    %1410 = vdwg.mxu0
    %1411 = vmatprep.subr.mxu0 %v1018
    %1412 = vmatpush1.msra.mxu0 %v1017
    %1413 = vmatprep.subr.mxu0 %v1020
    %1414 = vmatpush1.msra.mxu0 %v1019
    %1415 = vmatprep.subr.mxu0 %v1022
    %1416 = vmatpush1.msra.mxu0 %v1021
    %1417 = vmatprep.subr.mxu0 %v1024
    %1418 = vmatpush1.msra.mxu0 %v1023
    %1419 = vmatprep.subr.mxu0 %v1026
    %1420 = vmatpush1.msra.mxu0 %v1025
    %1421 = vmatprep.subr.mxu0 %v1028
    %1422 = vmatpush1.msra.mxu0 %v1027
    %1423 = vmatprep.subr.mxu0 %v1030
    %1424 = vmatpush1.msra.mxu0 %v1029
    %1425 = vmatprep.subr.mxu0 %v1032
    %1426 = vmatpush1.msra.mxu0 %v1031
    %1427 = vmatprep.subr.mxu0 %v1034
    %1428 = vmatpush1.msra.mxu0 %v1033
    %1429 = vmatprep.subr.mxu0 %v1036
    %1430 = vmatpush1.msra.mxu0 %v1035
    %1431 = vmatprep.subr.mxu0 %v1038
    %1432 = vmatpush1.msra.mxu0 %v1037
    %1433 = vmatprep.subr.mxu0 %v1040
    %1434 = vmatpush1.msra.mxu0 %v1039
    %1435 = vmatprep.subr.mxu0 %v1042
    %1436 = vmatpush1.msra.mxu0 %v1041
    %1437 = vmatprep.subr.mxu0 %v1044
    %1438 = vmatpush1.msra.mxu0 %v1043
    %1439 = vmatprep.subr.mxu0 %v1051
    %1440 = vmatpush1.msra.mxu0 %v1048
    %1441 = vmatprep.subr.mxu0 0.0
    %1442 = vmatpush1.msra.mxu0 0.0
    %1443 = vmatprep.subr.mxu0 0.0
    %1444 = vmatpush1.msra.mxu0 0.0
    %1445 = vmatprep.subr.mxu0 0.0
    %1446 = vmatpush1.msra.mxu0 0.0
    %1447 = vmatprep.subr.mxu0 0.0
    %1448 = vmatpush1.msra.mxu0 0.0
    %1449 = vmatprep.subr.mxu0 0.0
    %1450 = vmatpush1.msra.mxu0 0.0
    %1451 = vmatprep.subr.mxu0 0.0
    %1452 = vmatpush1.msra.mxu0 0.0
    %1453 = vmatprep.subr.mxu0 0.0
    %1454 = vmatpush1.msra.mxu0 0.0
    %1455 = vmatprep.subr.mxu0 0.0
    %1456 = vmatpush1.msra.mxu0 0.0
    %1457 = vmatprep.subr.mxu0 0.0
    %1458 = vmatpush1.msra.mxu0 0.0
    %1459 = vmatprep.subr.mxu0 0.0
    %1460 = vmatpush1.msra.mxu0 0.0
    %1461 = vmatprep.subr.mxu0 0.0
    %1462 = vmatpush1.msra.mxu0 0.0
    %1463 = vmatprep.subr.mxu0 0.0
    %1464 = vmatpush1.msra.mxu0 0.0
    %1465 = vmatprep.subr.mxu0 0.0
    %1466 = vmatpush1.msra.mxu0 0.0
    %1467 = vmatprep.subr.mxu0 0.0
    %1468 = vmatpush1.msra.mxu0 0.0
    %1469 = vmatprep.subr.mxu0 0.0
    %1470 = vmatpush1.msra.mxu0 0.0
    %1471 = vmatprep.subr.mxu0 0.0
    %1472 = vmatpush1.msra.mxu0 0.0
    %1473 = vmatprep.subr.mxu0 0.0
    %1474 = vmatpush1.msra.mxu0 0.0
    %1475 = vmatprep.mubr.f32.mxu0 0.0
    %1476 = vmatmul.mubr.f32.gmra.mrb[0].mxu0 %v288
    %v1477 = vpop.f32.mrb[0].mxu0
    %v1478 = vadd.f32 %v1299, %v1477
    %v1479 = vpop.f32.mrb[0].mxu0
    %v1480 = vadd.f32 %v1301, %v1479
    %1481 = vmatprep.mubr.f32.mxu0 0.0
    %1482 = vmatmul.mubr.f32.gmra.mrb[0].mxu0 %v291
    %v1483 = vpop.f32.mrb[0].mxu0
    %v1484 = vadd.f32 %v1305, %v1483
    %v1485 = vpop.f32.mrb[0].mxu0
    %v1486 = vadd.f32 %v1307, %v1485
    %1487 = vmatprep.mubr.f32.mxu0 0.0
    %1488 = vmatmul.mubr.f32.gmra.mrb[0].mxu0 %v294
    %v1489 = vpop.f32.mrb[0].mxu0
    %v1490 = vadd.f32 %v1311, %v1489
    %v1491 = vpop.f32.mrb[0].mxu0
    %v1492 = vadd.f32 %v1313, %v1491
    %1493 = vmatprep.mubr.f32.mxu0 0.0
    %1494 = vmatmul.mubr.f32.gmra.mrb[0].mxu0 %v297
    %v1495 = vpop.f32.mrb[0].mxu0
    %v1496 = vadd.f32 %v1317, %v1495
    %v1497 = vpop.f32.mrb[0].mxu0
    %v1498 = vadd.f32 %v1319, %v1497
    %1499 = vmatprep.mubr.f32.mxu0 0.0
    %1500 = vmatmul.mubr.f32.gmra.mrb[0].mxu0 %v300
    %v1501 = vpop.f32.mrb[0].mxu0
    %v1502 = vadd.f32 %v1323, %v1501
    %v1503 = vpop.f32.mrb[0].mxu0
    %v1504 = vadd.f32 %v1325, %v1503
    %1505 = vmatprep.mubr.f32.mxu0 0.0
    %1506 = vmatmul.mubr.f32.gmra.mrb[0].mxu0 %v303
    %v1507 = vpop.f32.mrb[0].mxu0
    %v1508 = vadd.f32 %v1329, %v1507
    %v1509 = vpop.f32.mrb[0].mxu0
    %v1510 = vadd.f32 %v1331, %v1509
    %1511 = vmatprep.mubr.f32.mxu0 0.0
    %1512 = vmatmul.mubr.f32.gmra.mrb[0].mxu0 %v306
    %v1513 = vpop.f32.mrb[0].mxu0
    %v1514 = vadd.f32 %v1335, %v1513
    %v1515 = vpop.f32.mrb[0].mxu0
    %v1516 = vadd.f32 %v1337, %v1515
    %1517 = vmatprep.mubr.f32.mxu0 0.0
    %1518 = vmatmul.mubr.f32.gmra.mrb[0].mxu0 %v309
    %v1519 = vpop.f32.mrb[0].mxu0
    %v1520 = vadd.f32 %v1341, %v1519
    %v1521 = vpop.f32.mrb[0].mxu0
    %v1522 = vadd.f32 %v1343, %v1521
    %1523 = vmatprep.mubr.f32.mxu0 0.0
    %1524 = vmatmul.mubr.f32.gmra.mrb[0].mxu0 %v312
    %v1525 = vpop.f32.mrb[0].mxu0
    %v1526 = vadd.f32 %v1347, %v1525
    %v1527 = vpop.f32.mrb[0].mxu0
    %v1528 = vadd.f32 %v1349, %v1527
    %1529 = vmatprep.mubr.f32.mxu0 0.0
    %1530 = vmatmul.mubr.f32.gmra.mrb[0].mxu0 %v315
    %v1531 = vpop.f32.mrb[0].mxu0
    %v1532 = vadd.f32 %v1353, %v1531
    %v1533 = vpop.f32.mrb[0].mxu0
    %v1534 = vadd.f32 %v1355, %v1533
    %1535 = vmatprep.mubr.f32.mxu0 0.0
    %1536 = vmatmul.mubr.f32.gmra.mrb[0].mxu0 %v318
    %v1537 = vpop.f32.mrb[0].mxu0
    %v1538 = vadd.f32 %v1359, %v1537
    %v1539 = vpop.f32.mrb[0].mxu0
    %v1540 = vadd.f32 %v1361, %v1539
    %1541 = vmatprep.mubr.f32.mxu0 0.0
    %1542 = vmatmul.mubr.f32.gmra.mrb[0].mxu0 %v321
    %v1543 = vpop.f32.mrb[0].mxu0
    %v1544 = vadd.f32 %v1365, %v1543
    %v1545 = vpop.f32.mrb[0].mxu0
    %v1546 = vadd.f32 %v1367, %v1545
    %1547 = vmatprep.mubr.f32.mxu0 0.0
    %1548 = vmatmul.mubr.f32.gmra.mrb[0].mxu0 %v324
    %v1549 = vpop.f32.mrb[0].mxu0
    %v1550 = vadd.f32 %v1371, %v1549
    %v1551 = vpop.f32.mrb[0].mxu0
    %v1552 = vadd.f32 %v1373, %v1551
    %1553 = vmatprep.mubr.f32.mxu0 0.0
    %1554 = vmatmul.mubr.f32.gmra.mrb[0].mxu0 %v327
    %v1555 = vpop.f32.mrb[0].mxu0
    %v1556 = vadd.f32 %v1377, %v1555
    %v1557 = vpop.f32.mrb[0].mxu0
    %v1558 = vadd.f32 %v1379, %v1557
    %1559 = vmatprep.mubr.f32.mxu0 0.0
    %1560 = vmatmul.mubr.f32.gmra.mrb[0].mxu0 %v330
    %v1561 = vpop.f32.mrb[0].mxu0
    %v1562 = vadd.f32 %v1383, %v1561
    %v1563 = vpop.f32.mrb[0].mxu0
    %v1564 = vadd.f32 %v1385, %v1563
    %1565 = vmatprep.mubr.f32.mxu0 0.0
    %1566 = vmatmul.mubr.f32.gmra.mrb[0].mxu0 %v333
    %v1567 = vpop.f32.mrb[0].mxu0
    %v1568 = vadd.f32 %v1389, %v1567
    %v1569 = vpop.f32.mrb[0].mxu0
    %v1570 = vadd.f32 %v1391, %v1569
    %1571 = vmatprep.mubr.f32.mxu0 0.0
    %1572 = vmatmul.mubr.f32.gmra.mrb[0].mxu0 %v336
    %v1573 = vpop.f32.mrb[0].mxu0
    %v1574 = vadd.f32 %v1395, %v1573
    %v1575 = vpop.f32.mrb[0].mxu0
    %v1576 = vadd.f32 %v1397, %v1575
    %1577 = vmatprep.mubr.f32.mxu0 0.0
    %1578 = vmatmul.mubr.f32.gmra.mrb[0].mxu0 %v339
    %v1579 = vpop.f32.mrb[0].mxu0
    %v1580 = vadd.f32 %v1401, %v1579
    %v1581 = vpop.f32.mrb[0].mxu0
    %v1582 = vadd.f32 %v1403, %v1581
    %1583 = vmatprep.mubr.f32.mxu0 0.0
    %1584 = vmatmul.mubr.f32.gmra.mrb[0].mxu0 %v342
    %v1585 = vpop.f32.mrb[0].mxu0
    %v1586 = vadd.f32 %v1407, %v1585
    %v1587 = vpop.f32.mrb[0].mxu0
    %v1588 = vadd.f32 %v1409, %v1587
    %1589 = vdwg.mxu0
    %s1590 = scalar_lea.vmem %s0, 2528
    %v1591 = vld [vmem:[%s1590] sm:$0xff]
    %v1592 = vld [vmem:[%s1590 + $0x8] sm:$0xff]
    %v1593 = vld [vmem:[%s1590 + $0x10] sm:$0xff]
    %v1594 = vld [vmem:[%s1590 + $0x18] sm:$0xff]
    %v1595 = vld [vmem:[%s1590 + $0x20] sm:$0xff]
    %v1596 = vld [vmem:[%s1590 + $0x28] sm:$0xff]
    %v1597 = vld [vmem:[%s1590 + $0x30] sm:$0xff]
    %v1598 = vld [vmem:[%s1590 + $0x38] sm:$0xff]
    %v1599 = vld [vmem:[%s1590 + $0x40] sm:$0xff]
    %v1600 = vld [vmem:[%s1590 + $0x48] sm:$0xff]
    %v1601 = vld [vmem:[%s1590 + $0x50] sm:$0xff]
    %v1602 = vld [vmem:[%s1590 + $0x58] sm:$0xff]
    %v1603 = vld [vmem:[%s1590 + $0x60] sm:$0xff]
    %v1604 = vld [vmem:[%s1590 + $0x68] sm:$0xff]
    %v1605 = vld [vmem:[%s1590 + $0x70] sm:$0xff]
    %v1606 = vld [vmem:[%s1590 + $0x78] sm:$0xff]
    %v1607 = vld [vmem:[%s1590 + $0x80] sm:$0xff]
    %v1608 = vld [vmem:[%s1590 + $0x88] sm:$0xff]
    %v1609 = vld [vmem:[%s1590 + $0x90] sm:$0xff]
    %v1610 = vld [vmem:[%s1590 + $0x98] sm:$0xff]
    %v1611 = vld [vmem:[%s1590 + $0xa0] sm:$0xff]
    %v1612 = vld [vmem:[%s1590 + $0xa8] sm:$0xff]
    %v1613 = vld [vmem:[%s1590 + $0xb0] sm:$0xff]
    %v1614 = vld [vmem:[%s1590 + $0xb8] sm:$0xff]
    %v1615 = vld [vmem:[%s1590 + $0xc0] sm:$0xff]
    %v1616 = vld [vmem:[%s1590 + $0xc8] sm:$0xff]
    %v1617 = vld [vmem:[%s1590 + $0xd0] sm:$0xff]
    %v1618 = vld [vmem:[%s1590 + $0xd8] sm:$0xff]
    %v1619 = vld [vmem:[%s1590 + $0xe0] sm:$0xff]
    %v1620 = vld [vmem:[%s1590 + $0xe8] sm:$0xff]
    %v1621 = vld [vmem:[%s1590 + $0xf0] sm:$0xff]
    %v1622 = vld [vmem:[%s1590 + $0xf8] sm:$0xff]
    %v1623 = vld [vmem:[%s1590 + $0x100] sm:$0xff]
    %v1624 = vld [vmem:[%s1590 + $0x108] sm:$0xff]
    %v1625 = vld [vmem:[%s1590 + $0x110] sm:$0xff]
    %v1626 = vld [vmem:[%s1590 + $0x118] sm:$0xff]
    %v1627 = vld [vmem:[%s1590 + $0x120] sm:$0xff]
    %v1628 = vld [vmem:[%s1590 + $0x128] sm:$0xff]
    %v1629 = vld [vmem:[%s1590 + $0x130] sm:$0xff]
    %v1630 = vld [vmem:[%s1590 + $0x138] sm:$0xff]
    %v1631 = vld [vmem:[%s1590 + $0x140] sm:$0xff]
    %v1632 = vld [vmem:[%s1590 + $0x148] sm:$0xff]
    %v1633 = vld [vmem:[%s1590 + $0x150] sm:$0xff]
    %v1634 = vld [vmem:[%s1590 + $0x158] sm:$0xff]
    %v1635 = vld [vmem:[%s1590 + $0x160] sm:$0xff]
    %v1636 = vld [vmem:[%s1590 + $0x168] sm:$0xff]
    %v1637 = vld [vmem:[%s1590 + $0x170] sm:$0xff]
    %v1638 = vld [vmem:[%s1590 + $0x178] sm:$0xff]
    %v1639 = vld [vmem:[%s1590 + $0x180] sm:$0xff]
    %v1640 = vld [vmem:[%s1590 + $0x188] sm:$0xff]
    %v1641 = vld [vmem:[%s1590 + $0x190] sm:$0xff]
    %v1642 = vld [vmem:[%s1590 + $0x198] sm:$0xff]
    %v1643 = vld [vmem:[%s1590 + $0x1a0] sm:$0xff]
    %v1644 = vld [vmem:[%s1590 + $0x1a8] sm:$0xff]
    %v1645 = vld [vmem:[%s1590 + $0x1b0] sm:$0xff]
    %v1646 = vld [vmem:[%s1590 + $0x1b8] sm:$0xff]
    %v1647 = vld [vmem:[%s1590 + $0x1c0] sm:$0xff]
    %v1648 = vld [vmem:[%s1590 + $0x1c8] sm:$0xff]
    %v1649 = vld [vmem:[%s1590 + $0x1d0] sm:$0xff]
    %v1650 = vld [vmem:[%s1590 + $0x1d8] sm:$0xff]
    %v1651 = vld [vmem:[%s1590 + $0x1e0] sm:$0xff]
    %v1652 = vld [vmem:[%s1590 + $0x1e8] sm:$0xff]
    %v1653 = vld [vmem:[%s1590 + $0x1f0] sm:$0xff]
    %v1654 = vld [vmem:[%s1590 + $0x1f8] sm:$0xff]
    %v1655 = vld [vmem:[%s1590 + $0x200] sm:$0xff]
    %v1656 = vld [vmem:[%s1590 + $0x208] sm:$0xff]
    %v1657 = vld [vmem:[%s1590 + $0x210] sm:$0xff]
    %v1658 = vld [vmem:[%s1590 + $0x218] sm:$0xff]
    %v1659 = vld [vmem:[%s1590 + $0x220] sm:$0xff]
    %v1660 = vld [vmem:[%s1590 + $0x228] sm:$0xff]
    %v1661 = vld [vmem:[%s1590 + $0x230] sm:$0xff]
    %v1662 = vld [vmem:[%s1590 + $0x238] sm:$0xff]
    %v1663 = vld [vmem:[%s1590 + $0x240] sm:$0xff]
    %v1664 = vld [vmem:[%s1590 + $0x248] sm:$0xff]
    %v1665 = vld [vmem:[%s1590 + $0x250] sm:$0xff]
    %v1666 = vld [vmem:[%s1590 + $0x258] sm:$0xff]
    %v1667 = vld [vmem:[%s1590 + $0x260] sm:$0xff]
    %v1668 = vld [vmem:[%s1590 + $0x268] sm:$0xff]
    %v1669 = vld [vmem:[%s1590 + $0x270] sm:$0xff]
    %v1670 = vld [vmem:[%s1590 + $0x278] sm:$0xff]
    %v1671 = vld [vmem:[%s1590 + $0x280] sm:$0xff]
    %v1672 = vld [vmem:[%s1590 + $0x288] sm:$0xff]
    %v1673 = vld [vmem:[%s1590 + $0x290] sm:$0xff]
    %v1674 = vld [vmem:[%s1590 + $0x298] sm:$0xff]
    %v1675 = vld [vmem:[%s1590 + $0x2a0] sm:$0xff]
    %v1676 = vld [vmem:[%s1590 + $0x2a8] sm:$0xff]
    %v1677 = vld [vmem:[%s1590 + $0x2b0] sm:$0xff]
    %v1678 = vld [vmem:[%s1590 + $0x2b8] sm:$0xff]
    %v1679 = vld [vmem:[%s1590 + $0x2c0] sm:$0xff]
    %v1680 = vld [vmem:[%s1590 + $0x2c8] sm:$0xff]
    %v1681 = vld [vmem:[%s1590 + $0x2d0] sm:$0xff]
    %v1682 = vld [vmem:[%s1590 + $0x2d8] sm:$0xff]
    %v1683 = vld [vmem:[%s1590 + $0x2e0] sm:$0xff]
    %v1684 = vld [vmem:[%s1590 + $0x2e8] sm:$0xff]
    %v1685 = vld [vmem:[%s1590 + $0x2f0] sm:$0xff]
    %v1686 = vld [vmem:[%s1590 + $0x2f8] sm:$0xff]
    %v1687 = vld [vmem:[%s1590 + $0x300] sm:$0xff]
    %v1688 = vld [vmem:[%s1590 + $0x308] sm:$0xff]
    %v1689 = vld [vmem:[%s1590 + $0x310] sm:$0xff]
    %v1690 = vld [vmem:[%s1590 + $0x318] sm:$0xff]
    %v1691 = vld [vmem:[%s1590 + $0x320] sm:$0xff]
    %v1692 = vld [vmem:[%s1590 + $0x328] sm:$0xff]
    %v1693 = vld [vmem:[%s1590 + $0x330] sm:$0xff]
    %v1694 = vld [vmem:[%s1590 + $0x338] sm:$0xff]
    %v1695 = vld [vmem:[%s1590 + $0x340] sm:$0xff]
    %v1696 = vld [vmem:[%s1590 + $0x348] sm:$0xff]
    %v1697 = vld [vmem:[%s1590 + $0x350] sm:$0xff]
    %v1698 = vld [vmem:[%s1590 + $0x358] sm:$0xff]
    %v1699 = vld [vmem:[%s1590 + $0x360] sm:$0xff]
    %v1700 = vld [vmem:[%s1590 + $0x368] sm:$0xff]
    %v1701 = vld [vmem:[%s1590 + $0x370] sm:$0xff]
    %v1702 = vld [vmem:[%s1590 + $0x378] sm:$0xff]
    %v1703 = vld [vmem:[%s1590 + $0x380] sm:$0xff]
    %v1704 = vld [vmem:[%s1590 + $0x388] sm:$0xff]
    %v1705 = vld [vmem:[%s1590 + $0x390] sm:$0xff]
    %v1706 = vld [vmem:[%s1590 + $0x398] sm:$0xff]
    %v1707 = vld [vmem:[%s1590 + $0x3a0] sm:$0xff]
    %v1708 = vld [vmem:[%s1590 + $0x3a8] sm:$0xff]
    %v1709 = vld [vmem:[%s1590 + $0x3b0] sm:$0xff]
    %v1710 = vld [vmem:[%s1590 + $0x3b8] sm:$0xff]
    %v1711 = vld [vmem:[%s1590 + $0x3c0] sm:$0xff]
    %v1712 = vld [vmem:[%s1590 + $0x3c8] sm:$0xff]
    %v1713 = vld [vmem:[%s1590 + $0x3d0] sm:$0xff]
    %v1714 = vld [vmem:[%s1590 + $0x3d8] sm:$0xff]
    %v1715 = vld [vmem:[%s1590 + $0x3e0] sm:$0xff]
    %v1716 = vld [vmem:[%s1590 + $0x3e8] sm:$0xff]
    %v1717 = vld [vmem:[%s1590 + $0x3f0] sm:$0xff]
    %v1718 = vld [vmem:[%s1590 + $0x3f8] sm:$0xff]
    %v1719 = vld [vmem:[%s1590 + $0x400] sm:$0xff]
    %v1720 = vld [vmem:[%s1590 + $0x408] sm:$0xff]
    %v1721 = vld [vmem:[%s1590 + $0x410] sm:$0xff]
    %v1722 = vld [vmem:[%s1590 + $0x418] sm:$0xff]
    %v1723 = vld [vmem:[%s1590 + $0x420] sm:$0xff]
    %v1724 = vld [vmem:[%s1590 + $0x428] sm:$0xff]
    %v1725 = vld [vmem:[%s1590 + $0x430] sm:$0xff]
    %v1726 = vld [vmem:[%s1590 + $0x438] sm:$0xff]
    %v1727 = vld [vmem:[%s1590 + $0x440] sm:$0xff]
    %v1728 = vld [vmem:[%s1590 + $0x448] sm:$0xff]
    %v1729 = vld [vmem:[%s1590 + $0x450] sm:$0xff]
    %v1730 = vld [vmem:[%s1590 + $0x458] sm:$0xff]
    %v1731 = vld [vmem:[%s1590 + $0x460] sm:$0xff]
    %v1732 = vld [vmem:[%s1590 + $0x468] sm:$0xff]
    %v1733 = vld [vmem:[%s1590 + $0x470] sm:$0xff]
    %v1734 = vld [vmem:[%s1590 + $0x478] sm:$0xff]
    %v1735 = vld [vmem:[%s1590 + $0x480] sm:$0xff]
    %v1736 = vld [vmem:[%s1590 + $0x488] sm:$0xff]
    %v1737 = vld [vmem:[%s1590 + $0x490] sm:$0xff]
    %v1738 = vld [vmem:[%s1590 + $0x498] sm:$0xff]
    %v1739 = vld [vmem:[%s1590 + $0x4a0] sm:$0xff]
    %v1740 = vld [vmem:[%s1590 + $0x4a8] sm:$0xff]
    %v1741 = vld [vmem:[%s1590 + $0x4b0] sm:$0xff]
    %v1742 = vld [vmem:[%s1590 + $0x4b8] sm:$0xff]
    %v1743 = vld [vmem:[%s1590 + $0x4c0] sm:$0xff]
    %v1744 = vld [vmem:[%s1590 + $0x4c8] sm:$0xff]
    %v1745 = vld [vmem:[%s1590 + $0x4d0] sm:$0xff]
    %v1746 = vld [vmem:[%s1590 + $0x4d8] sm:$0xff]
    %v1747 = vld [vmem:[%s1590 + $0x4e0] sm:$0x1]
    %v1748 = vld [vmem:[%s1590 + $0x4e8] sm:$0x1]
    %v1750 = vsel %vm344, %v1747, 0
    %v1753 = vsel %vm344, %v1748, 0
    %1755 = vmatprep.subr.mxu0 %v1592
    %1756 = vmatpush1.msra.mxu0 %v1591
    %1757 = vmatprep.subr.mxu0 %v1594
    %1758 = vmatpush1.msra.mxu0 %v1593
    %1759 = vmatprep.subr.mxu0 %v1596
    %1760 = vmatpush1.msra.mxu0 %v1595
    %1761 = vmatprep.subr.mxu0 %v1598
    %1762 = vmatpush1.msra.mxu0 %v1597
    %1763 = vmatprep.subr.mxu0 %v1600
    %1764 = vmatpush1.msra.mxu0 %v1599
    %1765 = vmatprep.subr.mxu0 %v1602
    %1766 = vmatpush1.msra.mxu0 %v1601
    %1767 = vmatprep.subr.mxu0 %v1604
    %1768 = vmatpush1.msra.mxu0 %v1603
    %1769 = vmatprep.subr.mxu0 %v1606
    %1770 = vmatpush1.msra.mxu0 %v1605
    %1771 = vmatprep.subr.mxu0 %v1608
    %1772 = vmatpush1.msra.mxu0 %v1607
    %1773 = vmatprep.subr.mxu0 %v1610
    %1774 = vmatpush1.msra.mxu0 %v1609
    %1775 = vmatprep.subr.mxu0 %v1612
    %1776 = vmatpush1.msra.mxu0 %v1611
    %1777 = vmatprep.subr.mxu0 %v1614
    %1778 = vmatpush1.msra.mxu0 %v1613
    %1779 = vmatprep.subr.mxu0 %v1616
    %1780 = vmatpush1.msra.mxu0 %v1615
    %1781 = vmatprep.subr.mxu0 %v1618
    %1782 = vmatpush1.msra.mxu0 %v1617
    %1783 = vmatprep.subr.mxu0 %v1620
    %1784 = vmatpush1.msra.mxu0 %v1619
    %1785 = vmatprep.subr.mxu0 %v1622
    %1786 = vmatpush1.msra.mxu0 %v1621
    %1787 = vmatprep.subr.mxu0 %v1624
    %1788 = vmatpush1.msra.mxu0 %v1623
    %1789 = vmatprep.subr.mxu0 %v1626
    %1790 = vmatpush1.msra.mxu0 %v1625
    %1791 = vmatprep.subr.mxu0 %v1628
    %1792 = vmatpush1.msra.mxu0 %v1627
    %1793 = vmatprep.subr.mxu0 %v1630
    %1794 = vmatpush1.msra.mxu0 %v1629
    %1795 = vmatprep.subr.mxu0 %v1632
    %1796 = vmatpush1.msra.mxu0 %v1631
    %1797 = vmatprep.subr.mxu0 %v1634
    %1798 = vmatpush1.msra.mxu0 %v1633
    %1799 = vmatprep.subr.mxu0 %v1636
    %1800 = vmatpush1.msra.mxu0 %v1635
    %1801 = vmatprep.subr.mxu0 %v1638
    %1802 = vmatpush1.msra.mxu0 %v1637
    %1803 = vmatprep.subr.mxu0 %v1640
    %1804 = vmatpush1.msra.mxu0 %v1639
    %1805 = vmatprep.subr.mxu0 %v1642
    %1806 = vmatpush1.msra.mxu0 %v1641
    %1807 = vmatprep.subr.mxu0 %v1644
    %1808 = vmatpush1.msra.mxu0 %v1643
    %1809 = vmatprep.subr.mxu0 %v1646
    %1810 = vmatpush1.msra.mxu0 %v1645
    %1811 = vmatprep.subr.mxu0 %v1648
    %1812 = vmatpush1.msra.mxu0 %v1647
    %1813 = vmatprep.subr.mxu0 %v1650
    %1814 = vmatpush1.msra.mxu0 %v1649
    %1815 = vmatprep.subr.mxu0 %v1652
    %1816 = vmatpush1.msra.mxu0 %v1651
    %1817 = vmatprep.subr.mxu0 %v1654
    %1818 = vmatpush1.msra.mxu0 %v1653
    %1819 = vmatprep.mubr.f32.mxu0 %v34
    %1820 = vmatmul.mubr.f32.gmra.mrb[0].mxu0 %v33
    %v1821 = vpop.f32.mrb[0].mxu0
    %v1822 = vadd.f32 0.0, %v1821
    %v1823 = vpop.f32.mrb[0].mxu0
    %v1824 = vadd.f32 0.0, %v1823
    %1825 = vmatprep.mubr.f32.mxu0 %v39
    %1826 = vmatmul.mubr.f32.gmra.mrb[0].mxu0 %v38
    %v1827 = vpop.f32.mrb[0].mxu0
    %v1828 = vadd.f32 0.0, %v1827
    %v1829 = vpop.f32.mrb[0].mxu0
    %v1830 = vadd.f32 0.0, %v1829
    %1831 = vmatprep.mubr.f32.mxu0 %v44
    %1832 = vmatmul.mubr.f32.gmra.mrb[0].mxu0 %v43
    %v1833 = vpop.f32.mrb[0].mxu0
    %v1834 = vadd.f32 0.0, %v1833
    %v1835 = vpop.f32.mrb[0].mxu0
    %v1836 = vadd.f32 0.0, %v1835
    %1837 = vmatprep.mubr.f32.mxu0 %v49
    %1838 = vmatmul.mubr.f32.gmra.mrb[0].mxu0 %v48
    %v1839 = vpop.f32.mrb[0].mxu0
    %v1840 = vadd.f32 0.0, %v1839
    %v1841 = vpop.f32.mrb[0].mxu0
    %v1842 = vadd.f32 0.0, %v1841
    %1843 = vmatprep.mubr.f32.mxu0 %v54
    %1844 = vmatmul.mubr.f32.gmra.mrb[0].mxu0 %v53
    %v1845 = vpop.f32.mrb[0].mxu0
    %v1846 = vadd.f32 0.0, %v1845
    %v1847 = vpop.f32.mrb[0].mxu0
    %v1848 = vadd.f32 0.0, %v1847
    %1849 = vmatprep.mubr.f32.mxu0 %v59
    %1850 = vmatmul.mubr.f32.gmra.mrb[0].mxu0 %v58
    %v1851 = vpop.f32.mrb[0].mxu0
    %v1852 = vadd.f32 0.0, %v1851
    %v1853 = vpop.f32.mrb[0].mxu0
    %v1854 = vadd.f32 0.0, %v1853
    %1855 = vmatprep.mubr.f32.mxu0 %v64
    %1856 = vmatmul.mubr.f32.gmra.mrb[0].mxu0 %v63
    %v1857 = vpop.f32.mrb[0].mxu0
    %v1858 = vadd.f32 0.0, %v1857
    %v1859 = vpop.f32.mrb[0].mxu0
    %v1860 = vadd.f32 0.0, %v1859
    %1861 = vmatprep.mubr.f32.mxu0 %v69
    %1862 = vmatmul.mubr.f32.gmra.mrb[0].mxu0 %v68
    %v1863 = vpop.f32.mrb[0].mxu0
    %v1864 = vadd.f32 0.0, %v1863
    %v1865 = vpop.f32.mrb[0].mxu0
    %v1866 = vadd.f32 0.0, %v1865
    %1867 = vmatprep.mubr.f32.mxu0 %v74
    %1868 = vmatmul.mubr.f32.gmra.mrb[0].mxu0 %v73
    %v1869 = vpop.f32.mrb[0].mxu0
    %v1870 = vadd.f32 0.0, %v1869
    %v1871 = vpop.f32.mrb[0].mxu0
    %v1872 = vadd.f32 0.0, %v1871
    %1873 = vmatprep.mubr.f32.mxu0 %v79
    %1874 = vmatmul.mubr.f32.gmra.mrb[0].mxu0 %v78
    %v1875 = vpop.f32.mrb[0].mxu0
    %v1876 = vadd.f32 0.0, %v1875
    %v1877 = vpop.f32.mrb[0].mxu0
    %v1878 = vadd.f32 0.0, %v1877
    %1879 = vmatprep.mubr.f32.mxu0 %v84
    %1880 = vmatmul.mubr.f32.gmra.mrb[0].mxu0 %v83
    %v1881 = vpop.f32.mrb[0].mxu0
    %v1882 = vadd.f32 0.0, %v1881
    %v1883 = vpop.f32.mrb[0].mxu0
    %v1884 = vadd.f32 0.0, %v1883
    %1885 = vmatprep.mubr.f32.mxu0 %v89
    %1886 = vmatmul.mubr.f32.gmra.mrb[0].mxu0 %v88
    %v1887 = vpop.f32.mrb[0].mxu0
    %v1888 = vadd.f32 0.0, %v1887
    %v1889 = vpop.f32.mrb[0].mxu0
    %v1890 = vadd.f32 0.0, %v1889
    %1891 = vmatprep.mubr.f32.mxu0 %v94
    %1892 = vmatmul.mubr.f32.gmra.mrb[0].mxu0 %v93
    %v1893 = vpop.f32.mrb[0].mxu0
    %v1894 = vadd.f32 0.0, %v1893
    %v1895 = vpop.f32.mrb[0].mxu0
    %v1896 = vadd.f32 0.0, %v1895
    %1897 = vmatprep.mubr.f32.mxu0 %v99
    %1898 = vmatmul.mubr.f32.gmra.mrb[0].mxu0 %v98
    %v1899 = vpop.f32.mrb[0].mxu0
    %v1900 = vadd.f32 0.0, %v1899
    %v1901 = vpop.f32.mrb[0].mxu0
    %v1902 = vadd.f32 0.0, %v1901
    %1903 = vmatprep.mubr.f32.mxu0 %v104
    %1904 = vmatmul.mubr.f32.gmra.mrb[0].mxu0 %v103
    %v1905 = vpop.f32.mrb[0].mxu0
    %v1906 = vadd.f32 0.0, %v1905
    %v1907 = vpop.f32.mrb[0].mxu0
    %v1908 = vadd.f32 0.0, %v1907
    %1909 = vmatprep.mubr.f32.mxu0 %v109
    %1910 = vmatmul.mubr.f32.gmra.mrb[0].mxu0 %v108
    %v1911 = vpop.f32.mrb[0].mxu0
    %v1912 = vadd.f32 0.0, %v1911
    %v1913 = vpop.f32.mrb[0].mxu0
    %v1914 = vadd.f32 0.0, %v1913
    %1915 = vmatprep.mubr.f32.mxu0 %v114
    %1916 = vmatmul.mubr.f32.gmra.mrb[0].mxu0 %v113
    %v1917 = vpop.f32.mrb[0].mxu0
    %v1918 = vadd.f32 0.0, %v1917
    %v1919 = vpop.f32.mrb[0].mxu0
    %v1920 = vadd.f32 0.0, %v1919
    %1921 = vmatprep.mubr.f32.mxu0 %v119
    %1922 = vmatmul.mubr.f32.gmra.mrb[0].mxu0 %v118
    %v1923 = vpop.f32.mrb[0].mxu0
    %v1924 = vadd.f32 0.0, %v1923
    %v1925 = vpop.f32.mrb[0].mxu0
    %v1926 = vadd.f32 0.0, %v1925
    %1927 = vmatprep.mubr.f32.mxu0 %v124
    %1928 = vmatmul.mubr.f32.gmra.mrb[0].mxu0 %v123
    %v1929 = vpop.f32.mrb[0].mxu0
    %v1930 = vadd.f32 0.0, %v1929
    %v1931 = vpop.f32.mrb[0].mxu0
    %v1932 = vadd.f32 0.0, %v1931
    %1933 = vdwg.mxu0
    %1934 = vmatprep.subr.mxu0 %v1656
    %1935 = vmatpush1.msra.mxu0 %v1655
    %1936 = vmatprep.subr.mxu0 %v1658
    %1937 = vmatpush1.msra.mxu0 %v1657
    %1938 = vmatprep.subr.mxu0 %v1660
    %1939 = vmatpush1.msra.mxu0 %v1659
    %1940 = vmatprep.subr.mxu0 %v1662
    %1941 = vmatpush1.msra.mxu0 %v1661
    %1942 = vmatprep.subr.mxu0 %v1664
    %1943 = vmatpush1.msra.mxu0 %v1663
    %1944 = vmatprep.subr.mxu0 %v1666
    %1945 = vmatpush1.msra.mxu0 %v1665
    %1946 = vmatprep.subr.mxu0 %v1668
    %1947 = vmatpush1.msra.mxu0 %v1667
    %1948 = vmatprep.subr.mxu0 %v1670
    %1949 = vmatpush1.msra.mxu0 %v1669
    %1950 = vmatprep.subr.mxu0 %v1672
    %1951 = vmatpush1.msra.mxu0 %v1671
    %1952 = vmatprep.subr.mxu0 %v1674
    %1953 = vmatpush1.msra.mxu0 %v1673
    %1954 = vmatprep.subr.mxu0 %v1676
    %1955 = vmatpush1.msra.mxu0 %v1675
    %1956 = vmatprep.subr.mxu0 %v1678
    %1957 = vmatpush1.msra.mxu0 %v1677
    %1958 = vmatprep.subr.mxu0 %v1680
    %1959 = vmatpush1.msra.mxu0 %v1679
    %1960 = vmatprep.subr.mxu0 %v1682
    %1961 = vmatpush1.msra.mxu0 %v1681
    %1962 = vmatprep.subr.mxu0 %v1684
    %1963 = vmatpush1.msra.mxu0 %v1683
    %1964 = vmatprep.subr.mxu0 %v1686
    %1965 = vmatpush1.msra.mxu0 %v1685
    %1966 = vmatprep.subr.mxu0 %v1688
    %1967 = vmatpush1.msra.mxu0 %v1687
    %1968 = vmatprep.subr.mxu0 %v1690
    %1969 = vmatpush1.msra.mxu0 %v1689
    %1970 = vmatprep.subr.mxu0 %v1692
    %1971 = vmatpush1.msra.mxu0 %v1691
    %1972 = vmatprep.subr.mxu0 %v1694
    %1973 = vmatpush1.msra.mxu0 %v1693
    %1974 = vmatprep.subr.mxu0 %v1696
    %1975 = vmatpush1.msra.mxu0 %v1695
    %1976 = vmatprep.subr.mxu0 %v1698
    %1977 = vmatpush1.msra.mxu0 %v1697
    %1978 = vmatprep.subr.mxu0 %v1700
    %1979 = vmatpush1.msra.mxu0 %v1699
    %1980 = vmatprep.subr.mxu0 %v1702
    %1981 = vmatpush1.msra.mxu0 %v1701
    %1982 = vmatprep.subr.mxu0 %v1704
    %1983 = vmatpush1.msra.mxu0 %v1703
    %1984 = vmatprep.subr.mxu0 %v1706
    %1985 = vmatpush1.msra.mxu0 %v1705
    %1986 = vmatprep.subr.mxu0 %v1708
    %1987 = vmatpush1.msra.mxu0 %v1707
    %1988 = vmatprep.subr.mxu0 %v1710
    %1989 = vmatpush1.msra.mxu0 %v1709
    %1990 = vmatprep.subr.mxu0 %v1712
    %1991 = vmatpush1.msra.mxu0 %v1711
    %1992 = vmatprep.subr.mxu0 %v1714
    %1993 = vmatpush1.msra.mxu0 %v1713
    %1994 = vmatprep.subr.mxu0 %v1716
    %1995 = vmatpush1.msra.mxu0 %v1715
    %1996 = vmatprep.subr.mxu0 %v1718
    %1997 = vmatpush1.msra.mxu0 %v1717
    %1998 = vmatprep.mubr.f32.mxu0 %v36
    %1999 = vmatmul.mubr.f32.gmra.mrb[0].mxu0 %v35
    %v2000 = vpop.f32.mrb[0].mxu0
    %v2001 = vadd.f32 %v1822, %v2000
    %v2002 = vpop.f32.mrb[0].mxu0
    %v2003 = vadd.f32 %v1824, %v2002
    %2004 = vmatprep.mubr.f32.mxu0 %v41
    %2005 = vmatmul.mubr.f32.gmra.mrb[0].mxu0 %v40
    %v2006 = vpop.f32.mrb[0].mxu0
    %v2007 = vadd.f32 %v1828, %v2006
    %v2008 = vpop.f32.mrb[0].mxu0
    %v2009 = vadd.f32 %v1830, %v2008
    %2010 = vmatprep.mubr.f32.mxu0 %v46
    %2011 = vmatmul.mubr.f32.gmra.mrb[0].mxu0 %v45
    %v2012 = vpop.f32.mrb[0].mxu0
    %v2013 = vadd.f32 %v1834, %v2012
    %v2014 = vpop.f32.mrb[0].mxu0
    %v2015 = vadd.f32 %v1836, %v2014
    %2016 = vmatprep.mubr.f32.mxu0 %v51
    %2017 = vmatmul.mubr.f32.gmra.mrb[0].mxu0 %v50
    %v2018 = vpop.f32.mrb[0].mxu0
    %v2019 = vadd.f32 %v1840, %v2018
    %v2020 = vpop.f32.mrb[0].mxu0
    %v2021 = vadd.f32 %v1842, %v2020
    %2022 = vmatprep.mubr.f32.mxu0 %v56
    %2023 = vmatmul.mubr.f32.gmra.mrb[0].mxu0 %v55
    %v2024 = vpop.f32.mrb[0].mxu0
    %v2025 = vadd.f32 %v1846, %v2024
    %v2026 = vpop.f32.mrb[0].mxu0
    %v2027 = vadd.f32 %v1848, %v2026
    %2028 = vmatprep.mubr.f32.mxu0 %v61
    %2029 = vmatmul.mubr.f32.gmra.mrb[0].mxu0 %v60
    %v2030 = vpop.f32.mrb[0].mxu0
    %v2031 = vadd.f32 %v1852, %v2030
    %v2032 = vpop.f32.mrb[0].mxu0
    %v2033 = vadd.f32 %v1854, %v2032
    %2034 = vmatprep.mubr.f32.mxu0 %v66
    %2035 = vmatmul.mubr.f32.gmra.mrb[0].mxu0 %v65
    %v2036 = vpop.f32.mrb[0].mxu0
    %v2037 = vadd.f32 %v1858, %v2036
    %v2038 = vpop.f32.mrb[0].mxu0
    %v2039 = vadd.f32 %v1860, %v2038
    %2040 = vmatprep.mubr.f32.mxu0 %v71
    %2041 = vmatmul.mubr.f32.gmra.mrb[0].mxu0 %v70
    %v2042 = vpop.f32.mrb[0].mxu0
    %v2043 = vadd.f32 %v1864, %v2042
    %v2044 = vpop.f32.mrb[0].mxu0
    %v2045 = vadd.f32 %v1866, %v2044
    %2046 = vmatprep.mubr.f32.mxu0 %v76
    %2047 = vmatmul.mubr.f32.gmra.mrb[0].mxu0 %v75
    %v2048 = vpop.f32.mrb[0].mxu0
    %v2049 = vadd.f32 %v1870, %v2048
    %v2050 = vpop.f32.mrb[0].mxu0
    %v2051 = vadd.f32 %v1872, %v2050
    %2052 = vmatprep.mubr.f32.mxu0 %v81
    %2053 = vmatmul.mubr.f32.gmra.mrb[0].mxu0 %v80
    %v2054 = vpop.f32.mrb[0].mxu0
    %v2055 = vadd.f32 %v1876, %v2054
    %v2056 = vpop.f32.mrb[0].mxu0
    %v2057 = vadd.f32 %v1878, %v2056
    %2058 = vmatprep.mubr.f32.mxu0 %v86
    %2059 = vmatmul.mubr.f32.gmra.mrb[0].mxu0 %v85
    %v2060 = vpop.f32.mrb[0].mxu0
    %v2061 = vadd.f32 %v1882, %v2060
    %v2062 = vpop.f32.mrb[0].mxu0
    %v2063 = vadd.f32 %v1884, %v2062
    %2064 = vmatprep.mubr.f32.mxu0 %v91
    %2065 = vmatmul.mubr.f32.gmra.mrb[0].mxu0 %v90
    %v2066 = vpop.f32.mrb[0].mxu0
    %v2067 = vadd.f32 %v1888, %v2066
    %v2068 = vpop.f32.mrb[0].mxu0
    %v2069 = vadd.f32 %v1890, %v2068
    %2070 = vmatprep.mubr.f32.mxu0 %v96
    %2071 = vmatmul.mubr.f32.gmra.mrb[0].mxu0 %v95
    %v2072 = vpop.f32.mrb[0].mxu0
    %v2073 = vadd.f32 %v1894, %v2072
    %v2074 = vpop.f32.mrb[0].mxu0
    %v2075 = vadd.f32 %v1896, %v2074
    %2076 = vmatprep.mubr.f32.mxu0 %v101
    %2077 = vmatmul.mubr.f32.gmra.mrb[0].mxu0 %v100
    %v2078 = vpop.f32.mrb[0].mxu0
    %v2079 = vadd.f32 %v1900, %v2078
    %v2080 = vpop.f32.mrb[0].mxu0
    %v2081 = vadd.f32 %v1902, %v2080
    %2082 = vmatprep.mubr.f32.mxu0 %v106
    %2083 = vmatmul.mubr.f32.gmra.mrb[0].mxu0 %v105
    %v2084 = vpop.f32.mrb[0].mxu0
    %v2085 = vadd.f32 %v1906, %v2084
    %v2086 = vpop.f32.mrb[0].mxu0
    %v2087 = vadd.f32 %v1908, %v2086
    %2088 = vmatprep.mubr.f32.mxu0 %v111
    %2089 = vmatmul.mubr.f32.gmra.mrb[0].mxu0 %v110
    %v2090 = vpop.f32.mrb[0].mxu0
    %v2091 = vadd.f32 %v1912, %v2090
    %v2092 = vpop.f32.mrb[0].mxu0
    %v2093 = vadd.f32 %v1914, %v2092
    %2094 = vmatprep.mubr.f32.mxu0 %v116
    %2095 = vmatmul.mubr.f32.gmra.mrb[0].mxu0 %v115
    %v2096 = vpop.f32.mrb[0].mxu0
    %v2097 = vadd.f32 %v1918, %v2096
    %v2098 = vpop.f32.mrb[0].mxu0
    %v2099 = vadd.f32 %v1920, %v2098
    %2100 = vmatprep.mubr.f32.mxu0 %v121
    %2101 = vmatmul.mubr.f32.gmra.mrb[0].mxu0 %v120
    %v2102 = vpop.f32.mrb[0].mxu0
    %v2103 = vadd.f32 %v1924, %v2102
    %v2104 = vpop.f32.mrb[0].mxu0
    %v2105 = vadd.f32 %v1926, %v2104
    %2106 = vmatprep.mubr.f32.mxu0 %v126
    %2107 = vmatmul.mubr.f32.gmra.mrb[0].mxu0 %v125
    %v2108 = vpop.f32.mrb[0].mxu0
    %v2109 = vadd.f32 %v1930, %v2108
    %v2110 = vpop.f32.mrb[0].mxu0
    %v2111 = vadd.f32 %v1932, %v2110
    %2112 = vdwg.mxu0
    %2113 = vmatprep.subr.mxu0 %v1720
    %2114 = vmatpush1.msra.mxu0 %v1719
    %2115 = vmatprep.subr.mxu0 %v1722
    %2116 = vmatpush1.msra.mxu0 %v1721
    %2117 = vmatprep.subr.mxu0 %v1724
    %2118 = vmatpush1.msra.mxu0 %v1723
    %2119 = vmatprep.subr.mxu0 %v1726
    %2120 = vmatpush1.msra.mxu0 %v1725
    %2121 = vmatprep.subr.mxu0 %v1728
    %2122 = vmatpush1.msra.mxu0 %v1727
    %2123 = vmatprep.subr.mxu0 %v1730
    %2124 = vmatpush1.msra.mxu0 %v1729
    %2125 = vmatprep.subr.mxu0 %v1732
    %2126 = vmatpush1.msra.mxu0 %v1731
    %2127 = vmatprep.subr.mxu0 %v1734
    %2128 = vmatpush1.msra.mxu0 %v1733
    %2129 = vmatprep.subr.mxu0 %v1736
    %2130 = vmatpush1.msra.mxu0 %v1735
    %2131 = vmatprep.subr.mxu0 %v1738
    %2132 = vmatpush1.msra.mxu0 %v1737
    %2133 = vmatprep.subr.mxu0 %v1740
    %2134 = vmatpush1.msra.mxu0 %v1739
    %2135 = vmatprep.subr.mxu0 %v1742
    %2136 = vmatpush1.msra.mxu0 %v1741
    %2137 = vmatprep.subr.mxu0 %v1744
    %2138 = vmatpush1.msra.mxu0 %v1743
    %2139 = vmatprep.subr.mxu0 %v1746
    %2140 = vmatpush1.msra.mxu0 %v1745
    %2141 = vmatprep.subr.mxu0 %v1753
    %2142 = vmatpush1.msra.mxu0 %v1750
    %2143 = vmatprep.subr.mxu0 0.0
    %2144 = vmatpush1.msra.mxu0 0.0
    %2145 = vmatprep.subr.mxu0 0.0
    %2146 = vmatpush1.msra.mxu0 0.0
    %2147 = vmatprep.subr.mxu0 0.0
    %2148 = vmatpush1.msra.mxu0 0.0
    %2149 = vmatprep.subr.mxu0 0.0
    %2150 = vmatpush1.msra.mxu0 0.0
    %2151 = vmatprep.subr.mxu0 0.0
    %2152 = vmatpush1.msra.mxu0 0.0
    %2153 = vmatprep.subr.mxu0 0.0
    %2154 = vmatpush1.msra.mxu0 0.0
    %2155 = vmatprep.subr.mxu0 0.0
    %2156 = vmatpush1.msra.mxu0 0.0
    %2157 = vmatprep.subr.mxu0 0.0
    %2158 = vmatpush1.msra.mxu0 0.0
    %2159 = vmatprep.subr.mxu0 0.0
    %2160 = vmatpush1.msra.mxu0 0.0
    %2161 = vmatprep.subr.mxu0 0.0
    %2162 = vmatpush1.msra.mxu0 0.0
    %2163 = vmatprep.subr.mxu0 0.0
    %2164 = vmatpush1.msra.mxu0 0.0
    %2165 = vmatprep.subr.mxu0 0.0
    %2166 = vmatpush1.msra.mxu0 0.0
    %2167 = vmatprep.subr.mxu0 0.0
    %2168 = vmatpush1.msra.mxu0 0.0
    %2169 = vmatprep.subr.mxu0 0.0
    %2170 = vmatpush1.msra.mxu0 0.0
    %2171 = vmatprep.subr.mxu0 0.0
    %2172 = vmatpush1.msra.mxu0 0.0
    %2173 = vmatprep.subr.mxu0 0.0
    %2174 = vmatpush1.msra.mxu0 0.0
    %2175 = vmatprep.subr.mxu0 0.0
    %2176 = vmatpush1.msra.mxu0 0.0
    %2177 = vmatprep.mubr.f32.mxu0 0.0
    %2178 = vmatmul.mubr.f32.gmra.mrb[0].mxu0 %v288
    %v2179 = vpop.f32.mrb[0].mxu0
    %v2180 = vadd.f32 %v2001, %v2179
    %v2181 = vpop.f32.mrb[0].mxu0
    %v2182 = vadd.f32 %v2003, %v2181
    %2183 = vmatprep.mubr.f32.mxu0 0.0
    %2184 = vmatmul.mubr.f32.gmra.mrb[0].mxu0 %v291
    %v2185 = vpop.f32.mrb[0].mxu0
    %v2186 = vadd.f32 %v2007, %v2185
    %v2187 = vpop.f32.mrb[0].mxu0
    %v2188 = vadd.f32 %v2009, %v2187
    %2189 = vmatprep.mubr.f32.mxu0 0.0
    %2190 = vmatmul.mubr.f32.gmra.mrb[0].mxu0 %v294
    %v2191 = vpop.f32.mrb[0].mxu0
    %v2192 = vadd.f32 %v2013, %v2191
    %v2193 = vpop.f32.mrb[0].mxu0
    %v2194 = vadd.f32 %v2015, %v2193
    %2195 = vmatprep.mubr.f32.mxu0 0.0
    %2196 = vmatmul.mubr.f32.gmra.mrb[0].mxu0 %v297
    %v2197 = vpop.f32.mrb[0].mxu0
    %v2198 = vadd.f32 %v2019, %v2197
    %v2199 = vpop.f32.mrb[0].mxu0
    %v2200 = vadd.f32 %v2021, %v2199
    %2201 = vmatprep.mubr.f32.mxu0 0.0
    %2202 = vmatmul.mubr.f32.gmra.mrb[0].mxu0 %v300
    %v2203 = vpop.f32.mrb[0].mxu0
    %v2204 = vadd.f32 %v2025, %v2203
    %v2205 = vpop.f32.mrb[0].mxu0
    %v2206 = vadd.f32 %v2027, %v2205
    %2207 = vmatprep.mubr.f32.mxu0 0.0
    %2208 = vmatmul.mubr.f32.gmra.mrb[0].mxu0 %v303
    %v2209 = vpop.f32.mrb[0].mxu0
    %v2210 = vadd.f32 %v2031, %v2209
    %v2211 = vpop.f32.mrb[0].mxu0
    %v2212 = vadd.f32 %v2033, %v2211
    %2213 = vmatprep.mubr.f32.mxu0 0.0
    %2214 = vmatmul.mubr.f32.gmra.mrb[0].mxu0 %v306
    %v2215 = vpop.f32.mrb[0].mxu0
    %v2216 = vadd.f32 %v2037, %v2215
    %v2217 = vpop.f32.mrb[0].mxu0
    %v2218 = vadd.f32 %v2039, %v2217
    %2219 = vmatprep.mubr.f32.mxu0 0.0
    %2220 = vmatmul.mubr.f32.gmra.mrb[0].mxu0 %v309
    %v2221 = vpop.f32.mrb[0].mxu0
    %v2222 = vadd.f32 %v2043, %v2221
    %v2223 = vpop.f32.mrb[0].mxu0
    %v2224 = vadd.f32 %v2045, %v2223
    %2225 = vmatprep.mubr.f32.mxu0 0.0
    %2226 = vmatmul.mubr.f32.gmra.mrb[0].mxu0 %v312
    %v2227 = vpop.f32.mrb[0].mxu0
    %v2228 = vadd.f32 %v2049, %v2227
    %v2229 = vpop.f32.mrb[0].mxu0
    %v2230 = vadd.f32 %v2051, %v2229
    %2231 = vmatprep.mubr.f32.mxu0 0.0
    %2232 = vmatmul.mubr.f32.gmra.mrb[0].mxu0 %v315
    %v2233 = vpop.f32.mrb[0].mxu0
    %v2234 = vadd.f32 %v2055, %v2233
    %v2235 = vpop.f32.mrb[0].mxu0
    %v2236 = vadd.f32 %v2057, %v2235
    %2237 = vmatprep.mubr.f32.mxu0 0.0
    %2238 = vmatmul.mubr.f32.gmra.mrb[0].mxu0 %v318
    %v2239 = vpop.f32.mrb[0].mxu0
    %v2240 = vadd.f32 %v2061, %v2239
    %v2241 = vpop.f32.mrb[0].mxu0
    %v2242 = vadd.f32 %v2063, %v2241
    %2243 = vmatprep.mubr.f32.mxu0 0.0
    %2244 = vmatmul.mubr.f32.gmra.mrb[0].mxu0 %v321
    %v2245 = vpop.f32.mrb[0].mxu0
    %v2246 = vadd.f32 %v2067, %v2245
    %v2247 = vpop.f32.mrb[0].mxu0
    %v2248 = vadd.f32 %v2069, %v2247
    %2249 = vmatprep.mubr.f32.mxu0 0.0
    %2250 = vmatmul.mubr.f32.gmra.mrb[0].mxu0 %v324
    %v2251 = vpop.f32.mrb[0].mxu0
    %v2252 = vadd.f32 %v2073, %v2251
    %v2253 = vpop.f32.mrb[0].mxu0
    %v2254 = vadd.f32 %v2075, %v2253
    %2255 = vmatprep.mubr.f32.mxu0 0.0
    %2256 = vmatmul.mubr.f32.gmra.mrb[0].mxu0 %v327
    %v2257 = vpop.f32.mrb[0].mxu0
    %v2258 = vadd.f32 %v2079, %v2257
    %v2259 = vpop.f32.mrb[0].mxu0
    %v2260 = vadd.f32 %v2081, %v2259
    %2261 = vmatprep.mubr.f32.mxu0 0.0
    %2262 = vmatmul.mubr.f32.gmra.mrb[0].mxu0 %v330
    %v2263 = vpop.f32.mrb[0].mxu0
    %v2264 = vadd.f32 %v2085, %v2263
    %v2265 = vpop.f32.mrb[0].mxu0
    %v2266 = vadd.f32 %v2087, %v2265
    %2267 = vmatprep.mubr.f32.mxu0 0.0
    %2268 = vmatmul.mubr.f32.gmra.mrb[0].mxu0 %v333
    %v2269 = vpop.f32.mrb[0].mxu0
    %v2270 = vadd.f32 %v2091, %v2269
    %v2271 = vpop.f32.mrb[0].mxu0
    %v2272 = vadd.f32 %v2093, %v2271
    %2273 = vmatprep.mubr.f32.mxu0 0.0
    %2274 = vmatmul.mubr.f32.gmra.mrb[0].mxu0 %v336
    %v2275 = vpop.f32.mrb[0].mxu0
    %v2276 = vadd.f32 %v2097, %v2275
    %v2277 = vpop.f32.mrb[0].mxu0
    %v2278 = vadd.f32 %v2099, %v2277
    %2279 = vmatprep.mubr.f32.mxu0 0.0
    %2280 = vmatmul.mubr.f32.gmra.mrb[0].mxu0 %v339
    %v2281 = vpop.f32.mrb[0].mxu0
    %v2282 = vadd.f32 %v2103, %v2281
    %v2283 = vpop.f32.mrb[0].mxu0
    %v2284 = vadd.f32 %v2105, %v2283
    %2285 = vmatprep.mubr.f32.mxu0 0.0
    %2286 = vmatmul.mubr.f32.gmra.mrb[0].mxu0 %v342
    %v2287 = vpop.f32.mrb[0].mxu0
    %v2288 = vadd.f32 %v2109, %v2287
    %v2289 = vpop.f32.mrb[0].mxu0
    %v2290 = vadd.f32 %v2111, %v2289
    %2291 = vdwg.mxu0
    %s2292 = scalar_lea.vmem %s0, 3792
    %v2293 = vld [vmem:[%s2292] sm:$0xff]
    %v2294 = vld [vmem:[%s2292 + $0x8] sm:$0xff]
    %v2295 = vld [vmem:[%s2292 + $0x10] sm:$0xff]
    %v2296 = vld [vmem:[%s2292 + $0x18] sm:$0xff]
    %v2297 = vld [vmem:[%s2292 + $0x20] sm:$0xff]
    %v2298 = vld [vmem:[%s2292 + $0x28] sm:$0xff]
    %v2299 = vld [vmem:[%s2292 + $0x30] sm:$0xff]
    %v2300 = vld [vmem:[%s2292 + $0x38] sm:$0xff]
    %v2301 = vld [vmem:[%s2292 + $0x40] sm:$0xff]
    %v2302 = vld [vmem:[%s2292 + $0x48] sm:$0xff]
    %v2303 = vld [vmem:[%s2292 + $0x50] sm:$0xff]
    %v2304 = vld [vmem:[%s2292 + $0x58] sm:$0xff]
    %v2305 = vld [vmem:[%s2292 + $0x60] sm:$0xff]
    %v2306 = vld [vmem:[%s2292 + $0x68] sm:$0xff]
    %v2307 = vld [vmem:[%s2292 + $0x70] sm:$0xff]
    %v2308 = vld [vmem:[%s2292 + $0x78] sm:$0xff]
    %v2309 = vld [vmem:[%s2292 + $0x80] sm:$0xff]
    %v2310 = vld [vmem:[%s2292 + $0x88] sm:$0xff]
    %v2311 = vld [vmem:[%s2292 + $0x90] sm:$0xff]
    %v2312 = vld [vmem:[%s2292 + $0x98] sm:$0xff]
    %v2313 = vld [vmem:[%s2292 + $0xa0] sm:$0xff]
    %v2314 = vld [vmem:[%s2292 + $0xa8] sm:$0xff]
    %v2315 = vld [vmem:[%s2292 + $0xb0] sm:$0xff]
    %v2316 = vld [vmem:[%s2292 + $0xb8] sm:$0xff]
    %v2317 = vld [vmem:[%s2292 + $0xc0] sm:$0xff]
    %v2318 = vld [vmem:[%s2292 + $0xc8] sm:$0xff]
    %v2319 = vld [vmem:[%s2292 + $0xd0] sm:$0xff]
    %v2320 = vld [vmem:[%s2292 + $0xd8] sm:$0xff]
    %v2321 = vld [vmem:[%s2292 + $0xe0] sm:$0xff]
    %v2322 = vld [vmem:[%s2292 + $0xe8] sm:$0xff]
    %v2323 = vld [vmem:[%s2292 + $0xf0] sm:$0xff]
    %v2324 = vld [vmem:[%s2292 + $0xf8] sm:$0xff]
    %v2325 = vld [vmem:[%s2292 + $0x100] sm:$0xff]
    %v2326 = vld [vmem:[%s2292 + $0x108] sm:$0xff]
    %v2327 = vld [vmem:[%s2292 + $0x110] sm:$0xff]
    %v2328 = vld [vmem:[%s2292 + $0x118] sm:$0xff]
    %v2329 = vld [vmem:[%s2292 + $0x120] sm:$0xff]
    %v2330 = vld [vmem:[%s2292 + $0x128] sm:$0xff]
    %v2331 = vld [vmem:[%s2292 + $0x130] sm:$0xff]
    %v2332 = vld [vmem:[%s2292 + $0x138] sm:$0xff]
    %v2333 = vld [vmem:[%s2292 + $0x140] sm:$0xff]
    %v2334 = vld [vmem:[%s2292 + $0x148] sm:$0xff]
    %v2335 = vld [vmem:[%s2292 + $0x150] sm:$0xff]
    %v2336 = vld [vmem:[%s2292 + $0x158] sm:$0xff]
    %v2337 = vld [vmem:[%s2292 + $0x160] sm:$0xff]
    %v2338 = vld [vmem:[%s2292 + $0x168] sm:$0xff]
    %v2339 = vld [vmem:[%s2292 + $0x170] sm:$0xff]
    %v2340 = vld [vmem:[%s2292 + $0x178] sm:$0xff]
    %v2341 = vld [vmem:[%s2292 + $0x180] sm:$0xff]
    %v2342 = vld [vmem:[%s2292 + $0x188] sm:$0xff]
    %v2343 = vld [vmem:[%s2292 + $0x190] sm:$0xff]
    %v2344 = vld [vmem:[%s2292 + $0x198] sm:$0xff]
    %v2345 = vld [vmem:[%s2292 + $0x1a0] sm:$0xff]
    %v2346 = vld [vmem:[%s2292 + $0x1a8] sm:$0xff]
    %v2347 = vld [vmem:[%s2292 + $0x1b0] sm:$0xff]
    %v2348 = vld [vmem:[%s2292 + $0x1b8] sm:$0xff]
    %v2349 = vld [vmem:[%s2292 + $0x1c0] sm:$0xff]
    %v2350 = vld [vmem:[%s2292 + $0x1c8] sm:$0xff]
    %v2351 = vld [vmem:[%s2292 + $0x1d0] sm:$0xff]
    %v2352 = vld [vmem:[%s2292 + $0x1d8] sm:$0xff]
    %v2353 = vld [vmem:[%s2292 + $0x1e0] sm:$0xff]
    %v2354 = vld [vmem:[%s2292 + $0x1e8] sm:$0xff]
    %v2355 = vld [vmem:[%s2292 + $0x1f0] sm:$0xff]
    %v2356 = vld [vmem:[%s2292 + $0x1f8] sm:$0xff]
    %v2357 = vld [vmem:[%s2292 + $0x200] sm:$0xff]
    %v2358 = vld [vmem:[%s2292 + $0x208] sm:$0xff]
    %v2359 = vld [vmem:[%s2292 + $0x210] sm:$0xff]
    %v2360 = vld [vmem:[%s2292 + $0x218] sm:$0xff]
    %v2361 = vld [vmem:[%s2292 + $0x220] sm:$0xff]
    %v2362 = vld [vmem:[%s2292 + $0x228] sm:$0xff]
    %v2363 = vld [vmem:[%s2292 + $0x230] sm:$0xff]
    %v2364 = vld [vmem:[%s2292 + $0x238] sm:$0xff]
    %v2365 = vld [vmem:[%s2292 + $0x240] sm:$0xff]
    %v2366 = vld [vmem:[%s2292 + $0x248] sm:$0xff]
    %v2367 = vld [vmem:[%s2292 + $0x250] sm:$0xff]
    %v2368 = vld [vmem:[%s2292 + $0x258] sm:$0xff]
    %v2369 = vld [vmem:[%s2292 + $0x260] sm:$0xff]
    %v2370 = vld [vmem:[%s2292 + $0x268] sm:$0xff]
    %v2371 = vld [vmem:[%s2292 + $0x270] sm:$0xff]
    %v2372 = vld [vmem:[%s2292 + $0x278] sm:$0xff]
    %v2373 = vld [vmem:[%s2292 + $0x280] sm:$0xff]
    %v2374 = vld [vmem:[%s2292 + $0x288] sm:$0xff]
    %v2375 = vld [vmem:[%s2292 + $0x290] sm:$0xff]
    %v2376 = vld [vmem:[%s2292 + $0x298] sm:$0xff]
    %v2377 = vld [vmem:[%s2292 + $0x2a0] sm:$0xff]
    %v2378 = vld [vmem:[%s2292 + $0x2a8] sm:$0xff]
    %v2379 = vld [vmem:[%s2292 + $0x2b0] sm:$0xff]
    %v2380 = vld [vmem:[%s2292 + $0x2b8] sm:$0xff]
    %v2381 = vld [vmem:[%s2292 + $0x2c0] sm:$0xff]
    %v2382 = vld [vmem:[%s2292 + $0x2c8] sm:$0xff]
    %v2383 = vld [vmem:[%s2292 + $0x2d0] sm:$0xff]
    %v2384 = vld [vmem:[%s2292 + $0x2d8] sm:$0xff]
    %v2385 = vld [vmem:[%s2292 + $0x2e0] sm:$0xff]
    %v2386 = vld [vmem:[%s2292 + $0x2e8] sm:$0xff]
    %v2387 = vld [vmem:[%s2292 + $0x2f0] sm:$0xff]
    %v2388 = vld [vmem:[%s2292 + $0x2f8] sm:$0xff]
    %v2389 = vld [vmem:[%s2292 + $0x300] sm:$0xff]
    %v2390 = vld [vmem:[%s2292 + $0x308] sm:$0xff]
    %v2391 = vld [vmem:[%s2292 + $0x310] sm:$0xff]
    %v2392 = vld [vmem:[%s2292 + $0x318] sm:$0xff]
    %v2393 = vld [vmem:[%s2292 + $0x320] sm:$0xff]
    %v2394 = vld [vmem:[%s2292 + $0x328] sm:$0xff]
    %v2395 = vld [vmem:[%s2292 + $0x330] sm:$0xff]
    %v2396 = vld [vmem:[%s2292 + $0x338] sm:$0xff]
    %v2397 = vld [vmem:[%s2292 + $0x340] sm:$0xff]
    %v2398 = vld [vmem:[%s2292 + $0x348] sm:$0xff]
    %v2399 = vld [vmem:[%s2292 + $0x350] sm:$0xff]
    %v2400 = vld [vmem:[%s2292 + $0x358] sm:$0xff]
    %v2401 = vld [vmem:[%s2292 + $0x360] sm:$0xff]
    %v2402 = vld [vmem:[%s2292 + $0x368] sm:$0xff]
    %v2403 = vld [vmem:[%s2292 + $0x370] sm:$0xff]
    %v2404 = vld [vmem:[%s2292 + $0x378] sm:$0xff]
    %v2405 = vld [vmem:[%s2292 + $0x380] sm:$0xff]
    %v2406 = vld [vmem:[%s2292 + $0x388] sm:$0xff]
    %v2407 = vld [vmem:[%s2292 + $0x390] sm:$0xff]
    %v2408 = vld [vmem:[%s2292 + $0x398] sm:$0xff]
    %v2409 = vld [vmem:[%s2292 + $0x3a0] sm:$0xff]
    %v2410 = vld [vmem:[%s2292 + $0x3a8] sm:$0xff]
    %v2411 = vld [vmem:[%s2292 + $0x3b0] sm:$0xff]
    %v2412 = vld [vmem:[%s2292 + $0x3b8] sm:$0xff]
    %v2413 = vld [vmem:[%s2292 + $0x3c0] sm:$0xff]
    %v2414 = vld [vmem:[%s2292 + $0x3c8] sm:$0xff]
    %v2415 = vld [vmem:[%s2292 + $0x3d0] sm:$0xff]
    %v2416 = vld [vmem:[%s2292 + $0x3d8] sm:$0xff]
    %v2417 = vld [vmem:[%s2292 + $0x3e0] sm:$0xff]
    %v2418 = vld [vmem:[%s2292 + $0x3e8] sm:$0xff]
    %v2419 = vld [vmem:[%s2292 + $0x3f0] sm:$0xff]
    %v2420 = vld [vmem:[%s2292 + $0x3f8] sm:$0xff]
    %v2421 = vld [vmem:[%s2292 + $0x400] sm:$0xff]
    %v2422 = vld [vmem:[%s2292 + $0x408] sm:$0xff]
    %v2423 = vld [vmem:[%s2292 + $0x410] sm:$0xff]
    %v2424 = vld [vmem:[%s2292 + $0x418] sm:$0xff]
    %v2425 = vld [vmem:[%s2292 + $0x420] sm:$0xff]
    %v2426 = vld [vmem:[%s2292 + $0x428] sm:$0xff]
    %v2427 = vld [vmem:[%s2292 + $0x430] sm:$0xff]
    %v2428 = vld [vmem:[%s2292 + $0x438] sm:$0xff]
    %v2429 = vld [vmem:[%s2292 + $0x440] sm:$0xff]
    %v2430 = vld [vmem:[%s2292 + $0x448] sm:$0xff]
    %v2431 = vld [vmem:[%s2292 + $0x450] sm:$0xff]
    %v2432 = vld [vmem:[%s2292 + $0x458] sm:$0xff]
    %v2433 = vld [vmem:[%s2292 + $0x460] sm:$0xff]
    %v2434 = vld [vmem:[%s2292 + $0x468] sm:$0xff]
    %v2435 = vld [vmem:[%s2292 + $0x470] sm:$0xff]
    %v2436 = vld [vmem:[%s2292 + $0x478] sm:$0xff]
    %v2437 = vld [vmem:[%s2292 + $0x480] sm:$0xff]
    %v2438 = vld [vmem:[%s2292 + $0x488] sm:$0xff]
    %v2439 = vld [vmem:[%s2292 + $0x490] sm:$0xff]
    %v2440 = vld [vmem:[%s2292 + $0x498] sm:$0xff]
    %v2441 = vld [vmem:[%s2292 + $0x4a0] sm:$0xff]
    %v2442 = vld [vmem:[%s2292 + $0x4a8] sm:$0xff]
    %v2443 = vld [vmem:[%s2292 + $0x4b0] sm:$0xff]
    %v2444 = vld [vmem:[%s2292 + $0x4b8] sm:$0xff]
    %v2445 = vld [vmem:[%s2292 + $0x4c0] sm:$0xff]
    %v2446 = vld [vmem:[%s2292 + $0x4c8] sm:$0xff]
    %v2447 = vld [vmem:[%s2292 + $0x4d0] sm:$0xff]
    %v2448 = vld [vmem:[%s2292 + $0x4d8] sm:$0xff]
    %v2449 = vld [vmem:[%s2292 + $0x4e0] sm:$0x1]
    %v2450 = vld [vmem:[%s2292 + $0x4e8] sm:$0x1]
    %v2452 = vsel %vm344, %v2449, 0
    %v2455 = vsel %vm344, %v2450, 0
    %2457 = vmatprep.subr.mxu0 %v2294
    %2458 = vmatpush1.msra.mxu0 %v2293
    %2459 = vmatprep.subr.mxu0 %v2296
    %2460 = vmatpush1.msra.mxu0 %v2295
    %2461 = vmatprep.subr.mxu0 %v2298
    %2462 = vmatpush1.msra.mxu0 %v2297
    %2463 = vmatprep.subr.mxu0 %v2300
    %2464 = vmatpush1.msra.mxu0 %v2299
    %2465 = vmatprep.subr.mxu0 %v2302
    %2466 = vmatpush1.msra.mxu0 %v2301
    %2467 = vmatprep.subr.mxu0 %v2304
    %2468 = vmatpush1.msra.mxu0 %v2303
    %2469 = vmatprep.subr.mxu0 %v2306
    %2470 = vmatpush1.msra.mxu0 %v2305
    %2471 = vmatprep.subr.mxu0 %v2308
    %2472 = vmatpush1.msra.mxu0 %v2307
    %2473 = vmatprep.subr.mxu0 %v2310
    %2474 = vmatpush1.msra.mxu0 %v2309
    %2475 = vmatprep.subr.mxu0 %v2312
    %2476 = vmatpush1.msra.mxu0 %v2311
    %2477 = vmatprep.subr.mxu0 %v2314
    %2478 = vmatpush1.msra.mxu0 %v2313
    %2479 = vmatprep.subr.mxu0 %v2316
    %2480 = vmatpush1.msra.mxu0 %v2315
    %2481 = vmatprep.subr.mxu0 %v2318
    %2482 = vmatpush1.msra.mxu0 %v2317
    %2483 = vmatprep.subr.mxu0 %v2320
    %2484 = vmatpush1.msra.mxu0 %v2319
    %2485 = vmatprep.subr.mxu0 %v2322
    %2486 = vmatpush1.msra.mxu0 %v2321
    %2487 = vmatprep.subr.mxu0 %v2324
    %2488 = vmatpush1.msra.mxu0 %v2323
    %2489 = vmatprep.subr.mxu0 %v2326
    %2490 = vmatpush1.msra.mxu0 %v2325
    %2491 = vmatprep.subr.mxu0 %v2328
    %2492 = vmatpush1.msra.mxu0 %v2327
    %2493 = vmatprep.subr.mxu0 %v2330
    %2494 = vmatpush1.msra.mxu0 %v2329
    %2495 = vmatprep.subr.mxu0 %v2332
    %2496 = vmatpush1.msra.mxu0 %v2331
    %2497 = vmatprep.subr.mxu0 %v2334
    %2498 = vmatpush1.msra.mxu0 %v2333
    %2499 = vmatprep.subr.mxu0 %v2336
    %2500 = vmatpush1.msra.mxu0 %v2335
    %2501 = vmatprep.subr.mxu0 %v2338
    %2502 = vmatpush1.msra.mxu0 %v2337
    %2503 = vmatprep.subr.mxu0 %v2340
    %2504 = vmatpush1.msra.mxu0 %v2339
    %2505 = vmatprep.subr.mxu0 %v2342
    %2506 = vmatpush1.msra.mxu0 %v2341
    %2507 = vmatprep.subr.mxu0 %v2344
    %2508 = vmatpush1.msra.mxu0 %v2343
    %2509 = vmatprep.subr.mxu0 %v2346
    %2510 = vmatpush1.msra.mxu0 %v2345
    %2511 = vmatprep.subr.mxu0 %v2348
    %2512 = vmatpush1.msra.mxu0 %v2347
    %2513 = vmatprep.subr.mxu0 %v2350
    %2514 = vmatpush1.msra.mxu0 %v2349
    %2515 = vmatprep.subr.mxu0 %v2352
    %2516 = vmatpush1.msra.mxu0 %v2351
    %2517 = vmatprep.subr.mxu0 %v2354
    %2518 = vmatpush1.msra.mxu0 %v2353
    %2519 = vmatprep.subr.mxu0 %v2356
    %2520 = vmatpush1.msra.mxu0 %v2355
    %2521 = vmatprep.mubr.f32.mxu0 %v34
    %2522 = vmatmul.mubr.f32.gmra.mrb[0].mxu0 %v33
    %v2523 = vpop.f32.mrb[0].mxu0
    %v2524 = vadd.f32 0.0, %v2523
    %v2525 = vpop.f32.mrb[0].mxu0
    %v2526 = vadd.f32 0.0, %v2525
    %2527 = vmatprep.mubr.f32.mxu0 %v39
    %2528 = vmatmul.mubr.f32.gmra.mrb[0].mxu0 %v38
    %v2529 = vpop.f32.mrb[0].mxu0
    %v2530 = vadd.f32 0.0, %v2529
    %v2531 = vpop.f32.mrb[0].mxu0
    %v2532 = vadd.f32 0.0, %v2531
    %2533 = vmatprep.mubr.f32.mxu0 %v44
    %2534 = vmatmul.mubr.f32.gmra.mrb[0].mxu0 %v43
    %v2535 = vpop.f32.mrb[0].mxu0
    %v2536 = vadd.f32 0.0, %v2535
    %v2537 = vpop.f32.mrb[0].mxu0
    %v2538 = vadd.f32 0.0, %v2537
    %2539 = vmatprep.mubr.f32.mxu0 %v49
    %2540 = vmatmul.mubr.f32.gmra.mrb[0].mxu0 %v48
    %v2541 = vpop.f32.mrb[0].mxu0
    %v2542 = vadd.f32 0.0, %v2541
    %v2543 = vpop.f32.mrb[0].mxu0
    %v2544 = vadd.f32 0.0, %v2543
    %2545 = vmatprep.mubr.f32.mxu0 %v54
    %2546 = vmatmul.mubr.f32.gmra.mrb[0].mxu0 %v53
    %v2547 = vpop.f32.mrb[0].mxu0
    %v2548 = vadd.f32 0.0, %v2547
    %v2549 = vpop.f32.mrb[0].mxu0
    %v2550 = vadd.f32 0.0, %v2549
    %2551 = vmatprep.mubr.f32.mxu0 %v59
    %2552 = vmatmul.mubr.f32.gmra.mrb[0].mxu0 %v58
    %v2553 = vpop.f32.mrb[0].mxu0
    %v2554 = vadd.f32 0.0, %v2553
    %v2555 = vpop.f32.mrb[0].mxu0
    %v2556 = vadd.f32 0.0, %v2555
    %2557 = vmatprep.mubr.f32.mxu0 %v64
    %2558 = vmatmul.mubr.f32.gmra.mrb[0].mxu0 %v63
    %v2559 = vpop.f32.mrb[0].mxu0
    %v2560 = vadd.f32 0.0, %v2559
    %v2561 = vpop.f32.mrb[0].mxu0
    %v2562 = vadd.f32 0.0, %v2561
    %2563 = vmatprep.mubr.f32.mxu0 %v69
    %2564 = vmatmul.mubr.f32.gmra.mrb[0].mxu0 %v68
    %v2565 = vpop.f32.mrb[0].mxu0
    %v2566 = vadd.f32 0.0, %v2565
    %v2567 = vpop.f32.mrb[0].mxu0
    %v2568 = vadd.f32 0.0, %v2567
    %2569 = vmatprep.mubr.f32.mxu0 %v74
    %2570 = vmatmul.mubr.f32.gmra.mrb[0].mxu0 %v73
    %v2571 = vpop.f32.mrb[0].mxu0
    %v2572 = vadd.f32 0.0, %v2571
    %v2573 = vpop.f32.mrb[0].mxu0
    %v2574 = vadd.f32 0.0, %v2573
    %2575 = vmatprep.mubr.f32.mxu0 %v79
    %2576 = vmatmul.mubr.f32.gmra.mrb[0].mxu0 %v78
    %v2577 = vpop.f32.mrb[0].mxu0
    %v2578 = vadd.f32 0.0, %v2577
    %v2579 = vpop.f32.mrb[0].mxu0
    %v2580 = vadd.f32 0.0, %v2579
    %2581 = vmatprep.mubr.f32.mxu0 %v84
    %2582 = vmatmul.mubr.f32.gmra.mrb[0].mxu0 %v83
    %v2583 = vpop.f32.mrb[0].mxu0
    %v2584 = vadd.f32 0.0, %v2583
    %v2585 = vpop.f32.mrb[0].mxu0
    %v2586 = vadd.f32 0.0, %v2585
    %2587 = vmatprep.mubr.f32.mxu0 %v89
    %2588 = vmatmul.mubr.f32.gmra.mrb[0].mxu0 %v88
    %v2589 = vpop.f32.mrb[0].mxu0
    %v2590 = vadd.f32 0.0, %v2589
    %v2591 = vpop.f32.mrb[0].mxu0
    %v2592 = vadd.f32 0.0, %v2591
    %2593 = vmatprep.mubr.f32.mxu0 %v94
    %2594 = vmatmul.mubr.f32.gmra.mrb[0].mxu0 %v93
    %v2595 = vpop.f32.mrb[0].mxu0
    %v2596 = vadd.f32 0.0, %v2595
    %v2597 = vpop.f32.mrb[0].mxu0
    %v2598 = vadd.f32 0.0, %v2597
    %2599 = vmatprep.mubr.f32.mxu0 %v99
    %2600 = vmatmul.mubr.f32.gmra.mrb[0].mxu0 %v98
    %v2601 = vpop.f32.mrb[0].mxu0
    %v2602 = vadd.f32 0.0, %v2601
    %v2603 = vpop.f32.mrb[0].mxu0
    %v2604 = vadd.f32 0.0, %v2603
    %2605 = vmatprep.mubr.f32.mxu0 %v104
    %2606 = vmatmul.mubr.f32.gmra.mrb[0].mxu0 %v103
    %v2607 = vpop.f32.mrb[0].mxu0
    %v2608 = vadd.f32 0.0, %v2607
    %v2609 = vpop.f32.mrb[0].mxu0
    %v2610 = vadd.f32 0.0, %v2609
    %2611 = vmatprep.mubr.f32.mxu0 %v109
    %2612 = vmatmul.mubr.f32.gmra.mrb[0].mxu0 %v108
    %v2613 = vpop.f32.mrb[0].mxu0
    %v2614 = vadd.f32 0.0, %v2613
    %v2615 = vpop.f32.mrb[0].mxu0
    %v2616 = vadd.f32 0.0, %v2615
    %2617 = vmatprep.mubr.f32.mxu0 %v114
    %2618 = vmatmul.mubr.f32.gmra.mrb[0].mxu0 %v113
    %v2619 = vpop.f32.mrb[0].mxu0
    %v2620 = vadd.f32 0.0, %v2619
    %v2621 = vpop.f32.mrb[0].mxu0
    %v2622 = vadd.f32 0.0, %v2621
    %2623 = vmatprep.mubr.f32.mxu0 %v119
    %2624 = vmatmul.mubr.f32.gmra.mrb[0].mxu0 %v118
    %v2625 = vpop.f32.mrb[0].mxu0
    %v2626 = vadd.f32 0.0, %v2625
    %v2627 = vpop.f32.mrb[0].mxu0
    %v2628 = vadd.f32 0.0, %v2627
    %2629 = vmatprep.mubr.f32.mxu0 %v124
    %2630 = vmatmul.mubr.f32.gmra.mrb[0].mxu0 %v123
    %v2631 = vpop.f32.mrb[0].mxu0
    %v2632 = vadd.f32 0.0, %v2631
    %v2633 = vpop.f32.mrb[0].mxu0
    %v2634 = vadd.f32 0.0, %v2633
    %2635 = vdwg.mxu0
    %2636 = vmatprep.subr.mxu0 %v2358
    %2637 = vmatpush1.msra.mxu0 %v2357
    %2638 = vmatprep.subr.mxu0 %v2360
    %2639 = vmatpush1.msra.mxu0 %v2359
    %2640 = vmatprep.subr.mxu0 %v2362
    %2641 = vmatpush1.msra.mxu0 %v2361
    %2642 = vmatprep.subr.mxu0 %v2364
    %2643 = vmatpush1.msra.mxu0 %v2363
    %2644 = vmatprep.subr.mxu0 %v2366
    %2645 = vmatpush1.msra.mxu0 %v2365
    %2646 = vmatprep.subr.mxu0 %v2368
    %2647 = vmatpush1.msra.mxu0 %v2367
    %2648 = vmatprep.subr.mxu0 %v2370
    %2649 = vmatpush1.msra.mxu0 %v2369
    %2650 = vmatprep.subr.mxu0 %v2372
    %2651 = vmatpush1.msra.mxu0 %v2371
    %2652 = vmatprep.subr.mxu0 %v2374
    %2653 = vmatpush1.msra.mxu0 %v2373
    %2654 = vmatprep.subr.mxu0 %v2376
    %2655 = vmatpush1.msra.mxu0 %v2375
    %2656 = vmatprep.subr.mxu0 %v2378
    %2657 = vmatpush1.msra.mxu0 %v2377
    %2658 = vmatprep.subr.mxu0 %v2380
    %2659 = vmatpush1.msra.mxu0 %v2379
    %2660 = vmatprep.subr.mxu0 %v2382
    %2661 = vmatpush1.msra.mxu0 %v2381
    %2662 = vmatprep.subr.mxu0 %v2384
    %2663 = vmatpush1.msra.mxu0 %v2383
    %2664 = vmatprep.subr.mxu0 %v2386
    %2665 = vmatpush1.msra.mxu0 %v2385
    %2666 = vmatprep.subr.mxu0 %v2388
    %2667 = vmatpush1.msra.mxu0 %v2387
    %2668 = vmatprep.subr.mxu0 %v2390
    %2669 = vmatpush1.msra.mxu0 %v2389
    %2670 = vmatprep.subr.mxu0 %v2392
    %2671 = vmatpush1.msra.mxu0 %v2391
    %2672 = vmatprep.subr.mxu0 %v2394
    %2673 = vmatpush1.msra.mxu0 %v2393
    %2674 = vmatprep.subr.mxu0 %v2396
    %2675 = vmatpush1.msra.mxu0 %v2395
    %2676 = vmatprep.subr.mxu0 %v2398
    %2677 = vmatpush1.msra.mxu0 %v2397
    %2678 = vmatprep.subr.mxu0 %v2400
    %2679 = vmatpush1.msra.mxu0 %v2399
    %2680 = vmatprep.subr.mxu0 %v2402
    %2681 = vmatpush1.msra.mxu0 %v2401
    %2682 = vmatprep.subr.mxu0 %v2404
    %2683 = vmatpush1.msra.mxu0 %v2403
    %2684 = vmatprep.subr.mxu0 %v2406
    %2685 = vmatpush1.msra.mxu0 %v2405
    %2686 = vmatprep.subr.mxu0 %v2408
    %2687 = vmatpush1.msra.mxu0 %v2407
    %2688 = vmatprep.subr.mxu0 %v2410
    %2689 = vmatpush1.msra.mxu0 %v2409
    %2690 = vmatprep.subr.mxu0 %v2412
    %2691 = vmatpush1.msra.mxu0 %v2411
    %2692 = vmatprep.subr.mxu0 %v2414
    %2693 = vmatpush1.msra.mxu0 %v2413
    %2694 = vmatprep.subr.mxu0 %v2416
    %2695 = vmatpush1.msra.mxu0 %v2415
    %2696 = vmatprep.subr.mxu0 %v2418
    %2697 = vmatpush1.msra.mxu0 %v2417
    %2698 = vmatprep.subr.mxu0 %v2420
    %2699 = vmatpush1.msra.mxu0 %v2419
    %2700 = vmatprep.mubr.f32.mxu0 %v36
    %2701 = vmatmul.mubr.f32.gmra.mrb[0].mxu0 %v35
    %v2702 = vpop.f32.mrb[0].mxu0
    %v2703 = vadd.f32 %v2524, %v2702
    %v2704 = vpop.f32.mrb[0].mxu0
    %v2705 = vadd.f32 %v2526, %v2704
    %2706 = vmatprep.mubr.f32.mxu0 %v41
    %2707 = vmatmul.mubr.f32.gmra.mrb[0].mxu0 %v40
    %v2708 = vpop.f32.mrb[0].mxu0
    %v2709 = vadd.f32 %v2530, %v2708
    %v2710 = vpop.f32.mrb[0].mxu0
    %v2711 = vadd.f32 %v2532, %v2710
    %2712 = vmatprep.mubr.f32.mxu0 %v46
    %2713 = vmatmul.mubr.f32.gmra.mrb[0].mxu0 %v45
    %v2714 = vpop.f32.mrb[0].mxu0
    %v2715 = vadd.f32 %v2536, %v2714
    %v2716 = vpop.f32.mrb[0].mxu0
    %v2717 = vadd.f32 %v2538, %v2716
    %2718 = vmatprep.mubr.f32.mxu0 %v51
    %2719 = vmatmul.mubr.f32.gmra.mrb[0].mxu0 %v50
    %v2720 = vpop.f32.mrb[0].mxu0
    %v2721 = vadd.f32 %v2542, %v2720
    %v2722 = vpop.f32.mrb[0].mxu0
    %v2723 = vadd.f32 %v2544, %v2722
    %2724 = vmatprep.mubr.f32.mxu0 %v56
    %2725 = vmatmul.mubr.f32.gmra.mrb[0].mxu0 %v55
    %v2726 = vpop.f32.mrb[0].mxu0
    %v2727 = vadd.f32 %v2548, %v2726
    %v2728 = vpop.f32.mrb[0].mxu0
    %v2729 = vadd.f32 %v2550, %v2728
    %2730 = vmatprep.mubr.f32.mxu0 %v61
    %2731 = vmatmul.mubr.f32.gmra.mrb[0].mxu0 %v60
    %v2732 = vpop.f32.mrb[0].mxu0
    %v2733 = vadd.f32 %v2554, %v2732
    %v2734 = vpop.f32.mrb[0].mxu0
    %v2735 = vadd.f32 %v2556, %v2734
    %2736 = vmatprep.mubr.f32.mxu0 %v66
    %2737 = vmatmul.mubr.f32.gmra.mrb[0].mxu0 %v65
    %v2738 = vpop.f32.mrb[0].mxu0
    %v2739 = vadd.f32 %v2560, %v2738
    %v2740 = vpop.f32.mrb[0].mxu0
    %v2741 = vadd.f32 %v2562, %v2740
    %2742 = vmatprep.mubr.f32.mxu0 %v71
    %2743 = vmatmul.mubr.f32.gmra.mrb[0].mxu0 %v70
    %v2744 = vpop.f32.mrb[0].mxu0
    %v2745 = vadd.f32 %v2566, %v2744
    %v2746 = vpop.f32.mrb[0].mxu0
    %v2747 = vadd.f32 %v2568, %v2746
    %2748 = vmatprep.mubr.f32.mxu0 %v76
    %2749 = vmatmul.mubr.f32.gmra.mrb[0].mxu0 %v75
    %v2750 = vpop.f32.mrb[0].mxu0
    %v2751 = vadd.f32 %v2572, %v2750
    %v2752 = vpop.f32.mrb[0].mxu0
    %v2753 = vadd.f32 %v2574, %v2752
    %2754 = vmatprep.mubr.f32.mxu0 %v81
    %2755 = vmatmul.mubr.f32.gmra.mrb[0].mxu0 %v80
    %v2756 = vpop.f32.mrb[0].mxu0
    %v2757 = vadd.f32 %v2578, %v2756
    %v2758 = vpop.f32.mrb[0].mxu0
    %v2759 = vadd.f32 %v2580, %v2758
    %2760 = vmatprep.mubr.f32.mxu0 %v86
    %2761 = vmatmul.mubr.f32.gmra.mrb[0].mxu0 %v85
    %v2762 = vpop.f32.mrb[0].mxu0
    %v2763 = vadd.f32 %v2584, %v2762
    %v2764 = vpop.f32.mrb[0].mxu0
    %v2765 = vadd.f32 %v2586, %v2764
    %2766 = vmatprep.mubr.f32.mxu0 %v91
    %2767 = vmatmul.mubr.f32.gmra.mrb[0].mxu0 %v90
    %v2768 = vpop.f32.mrb[0].mxu0
    %v2769 = vadd.f32 %v2590, %v2768
    %v2770 = vpop.f32.mrb[0].mxu0
    %v2771 = vadd.f32 %v2592, %v2770
    %2772 = vmatprep.mubr.f32.mxu0 %v96
    %2773 = vmatmul.mubr.f32.gmra.mrb[0].mxu0 %v95
    %v2774 = vpop.f32.mrb[0].mxu0
    %v2775 = vadd.f32 %v2596, %v2774
    %v2776 = vpop.f32.mrb[0].mxu0
    %v2777 = vadd.f32 %v2598, %v2776
    %2778 = vmatprep.mubr.f32.mxu0 %v101
    %2779 = vmatmul.mubr.f32.gmra.mrb[0].mxu0 %v100
    %v2780 = vpop.f32.mrb[0].mxu0
    %v2781 = vadd.f32 %v2602, %v2780
    %v2782 = vpop.f32.mrb[0].mxu0
    %v2783 = vadd.f32 %v2604, %v2782
    %2784 = vmatprep.mubr.f32.mxu0 %v106
    %2785 = vmatmul.mubr.f32.gmra.mrb[0].mxu0 %v105
    %v2786 = vpop.f32.mrb[0].mxu0
    %v2787 = vadd.f32 %v2608, %v2786
    %v2788 = vpop.f32.mrb[0].mxu0
    %v2789 = vadd.f32 %v2610, %v2788
    %2790 = vmatprep.mubr.f32.mxu0 %v111
    %2791 = vmatmul.mubr.f32.gmra.mrb[0].mxu0 %v110
    %v2792 = vpop.f32.mrb[0].mxu0
    %v2793 = vadd.f32 %v2614, %v2792
    %v2794 = vpop.f32.mrb[0].mxu0
    %v2795 = vadd.f32 %v2616, %v2794
    %2796 = vmatprep.mubr.f32.mxu0 %v116
    %2797 = vmatmul.mubr.f32.gmra.mrb[0].mxu0 %v115
    %v2798 = vpop.f32.mrb[0].mxu0
    %v2799 = vadd.f32 %v2620, %v2798
    %v2800 = vpop.f32.mrb[0].mxu0
    %v2801 = vadd.f32 %v2622, %v2800
    %2802 = vmatprep.mubr.f32.mxu0 %v121
    %2803 = vmatmul.mubr.f32.gmra.mrb[0].mxu0 %v120
    %v2804 = vpop.f32.mrb[0].mxu0
    %v2805 = vadd.f32 %v2626, %v2804
    %v2806 = vpop.f32.mrb[0].mxu0
    %v2807 = vadd.f32 %v2628, %v2806
    %2808 = vmatprep.mubr.f32.mxu0 %v126
    %2809 = vmatmul.mubr.f32.gmra.mrb[0].mxu0 %v125
    %v2810 = vpop.f32.mrb[0].mxu0
    %v2811 = vadd.f32 %v2632, %v2810
    %v2812 = vpop.f32.mrb[0].mxu0
    %v2813 = vadd.f32 %v2634, %v2812
    %2814 = vdwg.mxu0
    %2815 = vmatprep.subr.mxu0 %v2422
    %2816 = vmatpush1.msra.mxu0 %v2421
    %2817 = vmatprep.subr.mxu0 %v2424
    %2818 = vmatpush1.msra.mxu0 %v2423
    %2819 = vmatprep.subr.mxu0 %v2426
    %2820 = vmatpush1.msra.mxu0 %v2425
    %2821 = vmatprep.subr.mxu0 %v2428
    %2822 = vmatpush1.msra.mxu0 %v2427
    %2823 = vmatprep.subr.mxu0 %v2430
    %2824 = vmatpush1.msra.mxu0 %v2429
    %2825 = vmatprep.subr.mxu0 %v2432
    %2826 = vmatpush1.msra.mxu0 %v2431
    %2827 = vmatprep.subr.mxu0 %v2434
    %2828 = vmatpush1.msra.mxu0 %v2433
    %2829 = vmatprep.subr.mxu0 %v2436
    %2830 = vmatpush1.msra.mxu0 %v2435
    %2831 = vmatprep.subr.mxu0 %v2438
    %2832 = vmatpush1.msra.mxu0 %v2437
    %2833 = vmatprep.subr.mxu0 %v2440
    %2834 = vmatpush1.msra.mxu0 %v2439
    %2835 = vmatprep.subr.mxu0 %v2442
    %2836 = vmatpush1.msra.mxu0 %v2441
    %2837 = vmatprep.subr.mxu0 %v2444
    %2838 = vmatpush1.msra.mxu0 %v2443
    %2839 = vmatprep.subr.mxu0 %v2446
    %2840 = vmatpush1.msra.mxu0 %v2445
    %2841 = vmatprep.subr.mxu0 %v2448
    %2842 = vmatpush1.msra.mxu0 %v2447
    %2843 = vmatprep.subr.mxu0 %v2455
    %2844 = vmatpush1.msra.mxu0 %v2452
    %2845 = vmatprep.subr.mxu0 0.0
    %2846 = vmatpush1.msra.mxu0 0.0
    %2847 = vmatprep.subr.mxu0 0.0
    %2848 = vmatpush1.msra.mxu0 0.0
    %2849 = vmatprep.subr.mxu0 0.0
    %2850 = vmatpush1.msra.mxu0 0.0
    %2851 = vmatprep.subr.mxu0 0.0
    %2852 = vmatpush1.msra.mxu0 0.0
    %2853 = vmatprep.subr.mxu0 0.0
    %2854 = vmatpush1.msra.mxu0 0.0
    %2855 = vmatprep.subr.mxu0 0.0
    %2856 = vmatpush1.msra.mxu0 0.0
    %2857 = vmatprep.subr.mxu0 0.0
    %2858 = vmatpush1.msra.mxu0 0.0
    %2859 = vmatprep.subr.mxu0 0.0
    %2860 = vmatpush1.msra.mxu0 0.0
    %2861 = vmatprep.subr.mxu0 0.0
    %2862 = vmatpush1.msra.mxu0 0.0
    %2863 = vmatprep.subr.mxu0 0.0
    %2864 = vmatpush1.msra.mxu0 0.0
    %2865 = vmatprep.subr.mxu0 0.0
    %2866 = vmatpush1.msra.mxu0 0.0
    %2867 = vmatprep.subr.mxu0 0.0
    %2868 = vmatpush1.msra.mxu0 0.0
    %2869 = vmatprep.subr.mxu0 0.0
    %2870 = vmatpush1.msra.mxu0 0.0
    %2871 = vmatprep.subr.mxu0 0.0
    %2872 = vmatpush1.msra.mxu0 0.0
    %2873 = vmatprep.subr.mxu0 0.0
    %2874 = vmatpush1.msra.mxu0 0.0
    %2875 = vmatprep.subr.mxu0 0.0
    %2876 = vmatpush1.msra.mxu0 0.0
    %2877 = vmatprep.subr.mxu0 0.0
    %2878 = vmatpush1.msra.mxu0 0.0
    %2879 = vmatprep.mubr.f32.mxu0 0.0
    %2880 = vmatmul.mubr.f32.gmra.mrb[0].mxu0 %v288
    %v2881 = vpop.f32.mrb[0].mxu0
    %v2882 = vadd.f32 %v2703, %v2881
    %v2883 = vpop.f32.mrb[0].mxu0
    %v2884 = vadd.f32 %v2705, %v2883
    %2885 = vmatprep.mubr.f32.mxu0 0.0
    %2886 = vmatmul.mubr.f32.gmra.mrb[0].mxu0 %v291
    %v2887 = vpop.f32.mrb[0].mxu0
    %v2888 = vadd.f32 %v2709, %v2887
    %v2889 = vpop.f32.mrb[0].mxu0
    %v2890 = vadd.f32 %v2711, %v2889
    %2891 = vmatprep.mubr.f32.mxu0 0.0
    %2892 = vmatmul.mubr.f32.gmra.mrb[0].mxu0 %v294
    %v2893 = vpop.f32.mrb[0].mxu0
    %v2894 = vadd.f32 %v2715, %v2893
    %v2895 = vpop.f32.mrb[0].mxu0
    %v2896 = vadd.f32 %v2717, %v2895
    %2897 = vmatprep.mubr.f32.mxu0 0.0
    %2898 = vmatmul.mubr.f32.gmra.mrb[0].mxu0 %v297
    %v2899 = vpop.f32.mrb[0].mxu0
    %v2900 = vadd.f32 %v2721, %v2899
    %v2901 = vpop.f32.mrb[0].mxu0
    %v2902 = vadd.f32 %v2723, %v2901
    %2903 = vmatprep.mubr.f32.mxu0 0.0
    %2904 = vmatmul.mubr.f32.gmra.mrb[0].mxu0 %v300
    %v2905 = vpop.f32.mrb[0].mxu0
    %v2906 = vadd.f32 %v2727, %v2905
    %v2907 = vpop.f32.mrb[0].mxu0
    %v2908 = vadd.f32 %v2729, %v2907
    %2909 = vmatprep.mubr.f32.mxu0 0.0
    %2910 = vmatmul.mubr.f32.gmra.mrb[0].mxu0 %v303
    %v2911 = vpop.f32.mrb[0].mxu0
    %v2912 = vadd.f32 %v2733, %v2911
    %v2913 = vpop.f32.mrb[0].mxu0
    %v2914 = vadd.f32 %v2735, %v2913
    %2915 = vmatprep.mubr.f32.mxu0 0.0
    %2916 = vmatmul.mubr.f32.gmra.mrb[0].mxu0 %v306
    %v2917 = vpop.f32.mrb[0].mxu0
    %v2918 = vadd.f32 %v2739, %v2917
    %v2919 = vpop.f32.mrb[0].mxu0
    %v2920 = vadd.f32 %v2741, %v2919
    %2921 = vmatprep.mubr.f32.mxu0 0.0
    %2922 = vmatmul.mubr.f32.gmra.mrb[0].mxu0 %v309
    %v2923 = vpop.f32.mrb[0].mxu0
    %v2924 = vadd.f32 %v2745, %v2923
    %v2925 = vpop.f32.mrb[0].mxu0
    %v2926 = vadd.f32 %v2747, %v2925
    %2927 = vmatprep.mubr.f32.mxu0 0.0
    %2928 = vmatmul.mubr.f32.gmra.mrb[0].mxu0 %v312
    %v2929 = vpop.f32.mrb[0].mxu0
    %v2930 = vadd.f32 %v2751, %v2929
    %v2931 = vpop.f32.mrb[0].mxu0
    %v2932 = vadd.f32 %v2753, %v2931
    %2933 = vmatprep.mubr.f32.mxu0 0.0
    %2934 = vmatmul.mubr.f32.gmra.mrb[0].mxu0 %v315
    %v2935 = vpop.f32.mrb[0].mxu0
    %v2936 = vadd.f32 %v2757, %v2935
    %v2937 = vpop.f32.mrb[0].mxu0
    %v2938 = vadd.f32 %v2759, %v2937
    %2939 = vmatprep.mubr.f32.mxu0 0.0
    %2940 = vmatmul.mubr.f32.gmra.mrb[0].mxu0 %v318
    %v2941 = vpop.f32.mrb[0].mxu0
    %v2942 = vadd.f32 %v2763, %v2941
    %v2943 = vpop.f32.mrb[0].mxu0
    %v2944 = vadd.f32 %v2765, %v2943
    %2945 = vmatprep.mubr.f32.mxu0 0.0
    %2946 = vmatmul.mubr.f32.gmra.mrb[0].mxu0 %v321
    %v2947 = vpop.f32.mrb[0].mxu0
    %v2948 = vadd.f32 %v2769, %v2947
    %v2949 = vpop.f32.mrb[0].mxu0
    %v2950 = vadd.f32 %v2771, %v2949
    %2951 = vmatprep.mubr.f32.mxu0 0.0
    %2952 = vmatmul.mubr.f32.gmra.mrb[0].mxu0 %v324
    %v2953 = vpop.f32.mrb[0].mxu0
    %v2954 = vadd.f32 %v2775, %v2953
    %v2955 = vpop.f32.mrb[0].mxu0
    %v2956 = vadd.f32 %v2777, %v2955
    %2957 = vmatprep.mubr.f32.mxu0 0.0
    %2958 = vmatmul.mubr.f32.gmra.mrb[0].mxu0 %v327
    %v2959 = vpop.f32.mrb[0].mxu0
    %v2960 = vadd.f32 %v2781, %v2959
    %v2961 = vpop.f32.mrb[0].mxu0
    %v2962 = vadd.f32 %v2783, %v2961
    %2963 = vmatprep.mubr.f32.mxu0 0.0
    %2964 = vmatmul.mubr.f32.gmra.mrb[0].mxu0 %v330
    %v2965 = vpop.f32.mrb[0].mxu0
    %v2966 = vadd.f32 %v2787, %v2965
    %v2967 = vpop.f32.mrb[0].mxu0
    %v2968 = vadd.f32 %v2789, %v2967
    %2969 = vmatprep.mubr.f32.mxu0 0.0
    %2970 = vmatmul.mubr.f32.gmra.mrb[0].mxu0 %v333
    %v2971 = vpop.f32.mrb[0].mxu0
    %v2972 = vadd.f32 %v2793, %v2971
    %v2973 = vpop.f32.mrb[0].mxu0
    %v2974 = vadd.f32 %v2795, %v2973
    %2975 = vmatprep.mubr.f32.mxu0 0.0
    %2976 = vmatmul.mubr.f32.gmra.mrb[0].mxu0 %v336
    %v2977 = vpop.f32.mrb[0].mxu0
    %v2978 = vadd.f32 %v2799, %v2977
    %v2979 = vpop.f32.mrb[0].mxu0
    %v2980 = vadd.f32 %v2801, %v2979
    %2981 = vmatprep.mubr.f32.mxu0 0.0
    %2982 = vmatmul.mubr.f32.gmra.mrb[0].mxu0 %v339
    %v2983 = vpop.f32.mrb[0].mxu0
    %v2984 = vadd.f32 %v2805, %v2983
    %v2985 = vpop.f32.mrb[0].mxu0
    %v2986 = vadd.f32 %v2807, %v2985
    %2987 = vmatprep.mubr.f32.mxu0 0.0
    %2988 = vmatmul.mubr.f32.gmra.mrb[0].mxu0 %v342
    %v2989 = vpop.f32.mrb[0].mxu0
    %v2990 = vadd.f32 %v2811, %v2989
    %v2991 = vpop.f32.mrb[0].mxu0
    %v2992 = vadd.f32 %v2813, %v2991
    %2993 = vdwg.mxu0
    %v2994 = vmax.f32 %v776, %v1478
    %v2995 = vmax.f32 %v778, %v1480
    %v2996 = vmax.f32 %v782, %v1484
    %v2997 = vmax.f32 %v784, %v1486
    %v2998 = vmax.f32 %v788, %v1490
    %v2999 = vmax.f32 %v790, %v1492
    %v3000 = vmax.f32 %v794, %v1496
    %v3001 = vmax.f32 %v796, %v1498
    %v3002 = vmax.f32 %v800, %v1502
    %v3003 = vmax.f32 %v802, %v1504
    %v3004 = vmax.f32 %v806, %v1508
    %v3005 = vmax.f32 %v808, %v1510
    %v3006 = vmax.f32 %v812, %v1514
    %v3007 = vmax.f32 %v814, %v1516
    %v3008 = vmax.f32 %v818, %v1520
    %v3009 = vmax.f32 %v820, %v1522
    %v3010 = vmax.f32 %v824, %v1526
    %v3011 = vmax.f32 %v826, %v1528
    %v3012 = vmax.f32 %v830, %v1532
    %v3013 = vmax.f32 %v832, %v1534
    %v3014 = vmax.f32 %v836, %v1538
    %v3015 = vmax.f32 %v838, %v1540
    %v3016 = vmax.f32 %v842, %v1544
    %v3017 = vmax.f32 %v844, %v1546
    %v3018 = vmax.f32 %v848, %v1550
    %v3019 = vmax.f32 %v850, %v1552
    %v3020 = vmax.f32 %v854, %v1556
    %v3021 = vmax.f32 %v856, %v1558
    %v3022 = vmax.f32 %v860, %v1562
    %v3023 = vmax.f32 %v862, %v1564
    %v3024 = vmax.f32 %v866, %v1568
    %v3025 = vmax.f32 %v868, %v1570
    %v3026 = vmax.f32 %v872, %v1574
    %v3027 = vmax.f32 %v874, %v1576
    %v3028 = vmax.f32 %v878, %v1580
    %v3029 = vmax.f32 %v880, %v1582
    %v3030 = vmax.f32 %v884, %v1586
    %v3031 = vmax.f32 %v886, %v1588
    %v3032 = vmax.f32 %v2180, %v2882
    %v3033 = vmax.f32 %v2182, %v2884
    %v3034 = vmax.f32 %v2186, %v2888
    %v3035 = vmax.f32 %v2188, %v2890
    %v3036 = vmax.f32 %v2192, %v2894
    %v3037 = vmax.f32 %v2194, %v2896
    %v3038 = vmax.f32 %v2198, %v2900
    %v3039 = vmax.f32 %v2200, %v2902
    %v3040 = vmax.f32 %v2204, %v2906
    %v3041 = vmax.f32 %v2206, %v2908
    %v3042 = vmax.f32 %v2210, %v2912
    %v3043 = vmax.f32 %v2212, %v2914
    %v3044 = vmax.f32 %v2216, %v2918
    %v3045 = vmax.f32 %v2218, %v2920
    %v3046 = vmax.f32 %v2222, %v2924
    %v3047 = vmax.f32 %v2224, %v2926
    %v3048 = vmax.f32 %v2228, %v2930
    %v3049 = vmax.f32 %v2230, %v2932
    %v3050 = vmax.f32 %v2234, %v2936
    %v3051 = vmax.f32 %v2236, %v2938
    %v3052 = vmax.f32 %v2240, %v2942
    %v3053 = vmax.f32 %v2242, %v2944
    %v3054 = vmax.f32 %v2246, %v2948
    %v3055 = vmax.f32 %v2248, %v2950
    %v3056 = vmax.f32 %v2252, %v2954
    %v3057 = vmax.f32 %v2254, %v2956
    %v3058 = vmax.f32 %v2258, %v2960
    %v3059 = vmax.f32 %v2260, %v2962
    %v3060 = vmax.f32 %v2264, %v2966
    %v3061 = vmax.f32 %v2266, %v2968
    %v3062 = vmax.f32 %v2270, %v2972
    %v3063 = vmax.f32 %v2272, %v2974
    %v3064 = vmax.f32 %v2276, %v2978
    %v3065 = vmax.f32 %v2278, %v2980
    %v3066 = vmax.f32 %v2282, %v2984
    %v3067 = vmax.f32 %v2284, %v2986
    %v3068 = vmax.f32 %v2288, %v2990
    %v3069 = vmax.f32 %v2290, %v2992
    %v3070 = vmax.f32 %v2994, %v3032
    %v3071 = vmax.f32 %v2995, %v3033
    %v3072 = vmax.f32 %v2996, %v3034
    %v3073 = vmax.f32 %v2997, %v3035
    %v3074 = vmax.f32 %v2998, %v3036
    %v3075 = vmax.f32 %v2999, %v3037
    %v3076 = vmax.f32 %v3000, %v3038
    %v3077 = vmax.f32 %v3001, %v3039
    %v3078 = vmax.f32 %v3002, %v3040
    %v3079 = vmax.f32 %v3003, %v3041
    %v3080 = vmax.f32 %v3004, %v3042
    %v3081 = vmax.f32 %v3005, %v3043
    %v3082 = vmax.f32 %v3006, %v3044
    %v3083 = vmax.f32 %v3007, %v3045
    %v3084 = vmax.f32 %v3008, %v3046
    %v3085 = vmax.f32 %v3009, %v3047
    %v3086 = vmax.f32 %v3010, %v3048
    %v3087 = vmax.f32 %v3011, %v3049
    %v3088 = vmax.f32 %v3012, %v3050
    %v3089 = vmax.f32 %v3013, %v3051
    %v3090 = vmax.f32 %v3014, %v3052
    %v3091 = vmax.f32 %v3015, %v3053
    %v3092 = vmax.f32 %v3016, %v3054
    %v3093 = vmax.f32 %v3017, %v3055
    %v3094 = vmax.f32 %v3018, %v3056
    %v3095 = vmax.f32 %v3019, %v3057
    %v3096 = vmax.f32 %v3020, %v3058
    %v3097 = vmax.f32 %v3021, %v3059
    %v3098 = vmax.f32 %v3022, %v3060
    %v3099 = vmax.f32 %v3023, %v3061
    %v3100 = vmax.f32 %v3024, %v3062
    %v3101 = vmax.f32 %v3025, %v3063
    %v3102 = vmax.f32 %v3026, %v3064
    %v3103 = vmax.f32 %v3027, %v3065
    %v3104 = vmax.f32 %v3028, %v3066
    %v3105 = vmax.f32 %v3029, %v3067
    %v3106 = vmax.f32 %v3030, %v3068
    %v3107 = vmax.f32 %v3031, %v3069
    %v3108 = vld [vmem:[%s2] sm:$0xff]
    %v3109 = vld [vmem:[%s2 + $0x8] sm:$0xff]
    %v3110 = vld [vmem:[%s2 + $0x10] sm:$0xff]
    %v3111 = vld [vmem:[%s2 + $0x18] sm:$0xff]
    %v3112 = vld [vmem:[%s2 + $0x20] sm:$0xff]
    %v3113 = vld [vmem:[%s2 + $0x28] sm:$0xff]
    %v3114 = vld [vmem:[%s2 + $0x30] sm:$0xff]
    %v3115 = vld [vmem:[%s2 + $0x38] sm:$0xff]
    %v3116 = vld [vmem:[%s2 + $0x40] sm:$0xff]
    %v3117 = vld [vmem:[%s2 + $0x48] sm:$0xff]
    %v3118 = vld [vmem:[%s2 + $0x50] sm:$0xff]
    %v3119 = vld [vmem:[%s2 + $0x58] sm:$0xff]
    %v3120 = vld [vmem:[%s2 + $0x60] sm:$0xff]
    %v3121 = vld [vmem:[%s2 + $0x68] sm:$0xff]
    %v3122 = vld [vmem:[%s2 + $0x70] sm:$0xff]
    %v3123 = vld [vmem:[%s2 + $0x78] sm:$0xff]
    %v3124 = vld [vmem:[%s2 + $0x80] sm:$0xff]
    %v3125 = vld [vmem:[%s2 + $0x88] sm:$0xff]
    %v3126 = vld [vmem:[%s2 + $0x90] sm:$0x3f]
    %3128 = vset.pattern.permute.xlu0 0
    %3129 = vperm.xlu0 %3128, %v3108
    %v3130 = vpop.permute.xlu0 %3129
    %3133 = vset.pattern.permute.xlu0 0
    %3134 = vperm.xlu0 %3133, %v3109
    %v3135 = vpop.permute.xlu0 %3134
    %3138 = vset.pattern.permute.xlu0 0
    %3139 = vperm.xlu0 %3138, %v3110
    %v3140 = vpop.permute.xlu0 %3139
    %3143 = vset.pattern.permute.xlu0 0
    %3144 = vperm.xlu0 %3143, %v3111
    %v3145 = vpop.permute.xlu0 %3144
    %3148 = vset.pattern.permute.xlu0 0
    %3149 = vperm.xlu0 %3148, %v3112
    %v3150 = vpop.permute.xlu0 %3149
    %3153 = vset.pattern.permute.xlu0 0
    %3154 = vperm.xlu0 %3153, %v3113
    %v3155 = vpop.permute.xlu0 %3154
    %3158 = vset.pattern.permute.xlu0 0
    %3159 = vperm.xlu0 %3158, %v3114
    %v3160 = vpop.permute.xlu0 %3159
    %3163 = vset.pattern.permute.xlu0 0
    %3164 = vperm.xlu0 %3163, %v3115
    %v3165 = vpop.permute.xlu0 %3164
    %3168 = vset.pattern.permute.xlu0 0
    %3169 = vperm.xlu0 %3168, %v3116
    %v3170 = vpop.permute.xlu0 %3169
    %3173 = vset.pattern.permute.xlu0 0
    %3174 = vperm.xlu0 %3173, %v3117
    %v3175 = vpop.permute.xlu0 %3174
    %3178 = vset.pattern.permute.xlu0 0
    %3179 = vperm.xlu0 %3178, %v3118
    %v3180 = vpop.permute.xlu0 %3179
    %3183 = vset.pattern.permute.xlu0 0
    %3184 = vperm.xlu0 %3183, %v3119
    %v3185 = vpop.permute.xlu0 %3184
    %3188 = vset.pattern.permute.xlu0 0
    %3189 = vperm.xlu0 %3188, %v3120
    %v3190 = vpop.permute.xlu0 %3189
    %3193 = vset.pattern.permute.xlu0 0
    %3194 = vperm.xlu0 %3193, %v3121
    %v3195 = vpop.permute.xlu0 %3194
    %3198 = vset.pattern.permute.xlu0 0
    %3199 = vperm.xlu0 %3198, %v3122
    %v3200 = vpop.permute.xlu0 %3199
    %3203 = vset.pattern.permute.xlu0 0
    %3204 = vperm.xlu0 %3203, %v3123
    %v3205 = vpop.permute.xlu0 %3204
    %3208 = vset.pattern.permute.xlu0 0
    %3209 = vperm.xlu0 %3208, %v3124
    %v3210 = vpop.permute.xlu0 %3209
    %3213 = vset.pattern.permute.xlu0 0
    %3214 = vperm.xlu0 %3213, %v3125
    %v3215 = vpop.permute.xlu0 %3214
    %3218 = vset.pattern.permute.xlu0 0
    %3219 = vperm.xlu0 %3218, %v3126
    %v3220 = vpop.permute.xlu0 %3219
    %v3222 = vadd.f32 %v3070, %v3130
    %v3223 = vadd.f32 %v3071, %v3130
    %v3224 = vadd.f32 %v3072, %v3135
    %v3225 = vadd.f32 %v3073, %v3135
    %v3226 = vadd.f32 %v3074, %v3140
    %v3227 = vadd.f32 %v3075, %v3140
    %v3228 = vadd.f32 %v3076, %v3145
    %v3229 = vadd.f32 %v3077, %v3145
    %v3230 = vadd.f32 %v3078, %v3150
    %v3231 = vadd.f32 %v3079, %v3150
    %v3232 = vadd.f32 %v3080, %v3155
    %v3233 = vadd.f32 %v3081, %v3155
    %v3234 = vadd.f32 %v3082, %v3160
    %v3235 = vadd.f32 %v3083, %v3160
    %v3236 = vadd.f32 %v3084, %v3165
    %v3237 = vadd.f32 %v3085, %v3165
    %v3238 = vadd.f32 %v3086, %v3170
    %v3239 = vadd.f32 %v3087, %v3170
    %v3240 = vadd.f32 %v3088, %v3175
    %v3241 = vadd.f32 %v3089, %v3175
    %v3242 = vadd.f32 %v3090, %v3180
    %v3243 = vadd.f32 %v3091, %v3180
    %v3244 = vadd.f32 %v3092, %v3185
    %v3245 = vadd.f32 %v3093, %v3185
    %v3246 = vadd.f32 %v3094, %v3190
    %v3247 = vadd.f32 %v3095, %v3190
    %v3248 = vadd.f32 %v3096, %v3195
    %v3249 = vadd.f32 %v3097, %v3195
    %v3250 = vadd.f32 %v3098, %v3200
    %v3251 = vadd.f32 %v3099, %v3200
    %v3252 = vadd.f32 %v3100, %v3205
    %v3253 = vadd.f32 %v3101, %v3205
    %v3254 = vadd.f32 %v3102, %v3210
    %v3255 = vadd.f32 %v3103, %v3210
    %v3256 = vadd.f32 %v3104, %v3215
    %v3257 = vadd.f32 %v3105, %v3215
    %v3258 = vadd.f32 %v3106, %v3220
    %v3259 = vadd.f32 %v3107, %v3220
    %v3260 = vmax.f32 %v3222, 0.0
    %v3261 = vmax.f32 %v3223, 0.0
    %v3262 = vmax.f32 %v3224, 0.0
    %v3263 = vmax.f32 %v3225, 0.0
    %v3264 = vmax.f32 %v3226, 0.0
    %v3265 = vmax.f32 %v3227, 0.0
    %v3266 = vmax.f32 %v3228, 0.0
    %v3267 = vmax.f32 %v3229, 0.0
    %v3268 = vmax.f32 %v3230, 0.0
    %v3269 = vmax.f32 %v3231, 0.0
    %v3270 = vmax.f32 %v3232, 0.0
    %v3271 = vmax.f32 %v3233, 0.0
    %v3272 = vmax.f32 %v3234, 0.0
    %v3273 = vmax.f32 %v3235, 0.0
    %v3274 = vmax.f32 %v3236, 0.0
    %v3275 = vmax.f32 %v3237, 0.0
    %v3276 = vmax.f32 %v3238, 0.0
    %v3277 = vmax.f32 %v3239, 0.0
    %v3278 = vmax.f32 %v3240, 0.0
    %v3279 = vmax.f32 %v3241, 0.0
    %v3280 = vmax.f32 %v3242, 0.0
    %v3281 = vmax.f32 %v3243, 0.0
    %v3282 = vmax.f32 %v3244, 0.0
    %v3283 = vmax.f32 %v3245, 0.0
    %v3284 = vmax.f32 %v3246, 0.0
    %v3285 = vmax.f32 %v3247, 0.0
    %v3286 = vmax.f32 %v3248, 0.0
    %v3287 = vmax.f32 %v3249, 0.0
    %v3288 = vmax.f32 %v3250, 0.0
    %v3289 = vmax.f32 %v3251, 0.0
    %v3290 = vmax.f32 %v3252, 0.0
    %v3291 = vmax.f32 %v3253, 0.0
    %v3292 = vmax.f32 %v3254, 0.0
    %v3293 = vmax.f32 %v3255, 0.0
    %v3294 = vmax.f32 %v3256, 0.0
    %v3295 = vmax.f32 %v3257, 0.0
    %v3296 = vmax.f32 %v3258, 0.0
    %v3297 = vmax.f32 %v3259, 0.0
    %v3298 = vld [vmem:[%s3] sm:$0xff]
    %v3299 = vld [vmem:[%s3 + $0x8] sm:$0xff]
    %v3300 = vld [vmem:[%s3 + $0x10] sm:$0xff]
    %v3301 = vld [vmem:[%s3 + $0x18] sm:$0xff]
    %vm3302 = vcmask 179200
    %v3304 = vsel %vm3302, %v3299, 0
    %v3307 = vsel %vm3302, %v3301, 0
    %vm3309 = vcmask 1045504
    %v3311 = vsel %vm3309, %v3296, 0
    %v3314 = vsel %vm3309, %v3297, 0
    %3316 = vmatprep.subr.mxu0 %v3261
    %3317 = vmatpush1.msra.mxu0 %v3260
    %3318 = vmatprep.subr.mxu0 %v3263
    %3319 = vmatpush1.msra.mxu0 %v3262
    %3320 = vmatprep.subr.mxu0 %v3265
    %3321 = vmatpush1.msra.mxu0 %v3264
    %3322 = vmatprep.subr.mxu0 %v3267
    %3323 = vmatpush1.msra.mxu0 %v3266
    %3324 = vmatprep.subr.mxu0 %v3269
    %3325 = vmatpush1.msra.mxu0 %v3268
    %3326 = vmatprep.subr.mxu0 %v3271
    %3327 = vmatpush1.msra.mxu0 %v3270
    %3328 = vmatprep.subr.mxu0 %v3273
    %3329 = vmatpush1.msra.mxu0 %v3272
    %3330 = vmatprep.subr.mxu0 %v3275
    %3331 = vmatpush1.msra.mxu0 %v3274
    %3332 = vmatprep.subr.mxu0 %v3277
    %3333 = vmatpush1.msra.mxu0 %v3276
    %3334 = vmatprep.subr.mxu0 %v3279
    %3335 = vmatpush1.msra.mxu0 %v3278
    %3336 = vmatprep.subr.mxu0 %v3281
    %3337 = vmatpush1.msra.mxu0 %v3280
    %3338 = vmatprep.subr.mxu0 %v3283
    %3339 = vmatpush1.msra.mxu0 %v3282
    %3340 = vmatprep.subr.mxu0 %v3285
    %3341 = vmatpush1.msra.mxu0 %v3284
    %3342 = vmatprep.subr.mxu0 %v3287
    %3343 = vmatpush1.msra.mxu0 %v3286
    %3344 = vmatprep.subr.mxu0 %v3289
    %3345 = vmatpush1.msra.mxu0 %v3288
    %3346 = vmatprep.subr.mxu0 %v3291
    %3347 = vmatpush1.msra.mxu0 %v3290
    %3348 = vmatprep.subr.mxu0 %v3293
    %3349 = vmatpush1.msra.mxu0 %v3292
    %3350 = vmatprep.subr.mxu0 %v3295
    %3351 = vmatpush1.msra.mxu0 %v3294
    %3352 = vmatprep.subr.mxu0 %v3314
    %3353 = vmatpush1.msra.mxu0 %v3311
    %3354 = vmatprep.subr.mxu0 0.0
    %3355 = vmatpush1.msra.mxu0 0.0
    %3356 = vmatprep.subr.mxu0 0.0
    %3357 = vmatpush1.msra.mxu0 0.0
    %3358 = vmatprep.subr.mxu0 0.0
    %3359 = vmatpush1.msra.mxu0 0.0
    %3360 = vmatprep.subr.mxu0 0.0
    %3361 = vmatpush1.msra.mxu0 0.0
    %3362 = vmatprep.subr.mxu0 0.0
    %3363 = vmatpush1.msra.mxu0 0.0
    %3364 = vmatprep.subr.mxu0 0.0
    %3365 = vmatpush1.msra.mxu0 0.0
    %3366 = vmatprep.subr.mxu0 0.0
    %3367 = vmatpush1.msra.mxu0 0.0
    %3368 = vmatprep.subr.mxu0 0.0
    %3369 = vmatpush1.msra.mxu0 0.0
    %3370 = vmatprep.subr.mxu0 0.0
    %3371 = vmatpush1.msra.mxu0 0.0
    %3372 = vmatprep.subr.mxu0 0.0
    %3373 = vmatpush1.msra.mxu0 0.0
    %3374 = vmatprep.subr.mxu0 0.0
    %3375 = vmatpush1.msra.mxu0 0.0
    %3376 = vmatprep.subr.mxu0 0.0
    %3377 = vmatpush1.msra.mxu0 0.0
    %3378 = vmatprep.subr.mxu0 0.0
    %3379 = vmatpush1.msra.mxu0 0.0
    %3380 = vmatprep.mubr.f32.mxu0 %v3304
    %3381 = vmatmul.mubr.f32.gmra.mrb[0].mxu0 %v3298
    %v3382 = vpop.f32.mrb[0].mxu0
    %v3383 = vadd.f32 0.0, %v3382
    %v3384 = vpop.f32.mrb[0].mxu0
    %v3385 = vadd.f32 0.0, %v3384
    %3386 = vmatprep.mubr.f32.mxu0 %v3307
    %3387 = vmatmul.mubr.f32.gmra.mrb[0].mxu0 %v3300
    %v3388 = vpop.f32.mrb[0].mxu0
    %v3389 = vpop.f32.mrb[0].mxu0
    %3390 = vdwg.mxu0
    %3392 = vrot.lane.b32.xlu0 %v3383, 88
    %v3393 = vpop.permute.xlu0 %3392
    %v3395 = vmax.f32 %v3383, %v3393
    %3397 = vrot.lane.b32.xlu0 %v3385, 88
    %v3398 = vpop.permute.xlu0 %3397
    %vm3399 = vcmask 719872
    %v3400 = vsel %vm3399, %v3393, %v3398
    %v3402 = vmax.f32 %v3383, %v3400
    %3404 = vrot.lane.b32.xlu0 %v3402, 48
    %v3405 = vpop.permute.xlu0 %3404
    %v3407 = vmax.f32 %v3395, %v3405
    %v3408 = vld [vmem:[%s4] sm:$0xff]
    %3410 = vset.pattern.permute.xlu0 0
    %3411 = vperm.xlu0 %3410, %v3408
    %v3412 = vpop.permute.xlu0 %3411
    %v3414 = vadd.f32 %v3407, %v3412
    %v3415 = vmax.f32 %v3414, 0.0
    %v3417 = vrot.slane %v3415, 1
    %3418 = vrot.lane.b32.xlu0 %v3417, 20
    %v3419 = vpop.permute.xlu0 %3418
    %v3421 = vrot.slane %v3415, 2
    %3422 = vrot.lane.b32.xlu0 %v3421, 40
    %v3423 = vpop.permute.xlu0 %3422
    %v3425 = vrot.slane %v3415, 3
    %3426 = vrot.lane.b32.xlu0 %v3425, 60
    %v3427 = vpop.permute.xlu0 %3426
    %v3429 = vrot.slane %v3415, 4
    %3430 = vrot.lane.b32.xlu0 %v3429, 80
    %v3431 = vpop.permute.xlu0 %3430
    %v3433 = vrot.slane %v3415, 5
    %3434 = vrot.lane.b32.xlu0 %v3433, 100
    %v3435 = vpop.permute.xlu0 %3434
    %vm3437 = vcmask 162816
    %v3438 = vsel %vm3437, %v3415, %v3419
    %vm3439 = vcmask 326656
    %v3440 = vsel %vm3439, %v3438, %v3423
    %vm3441 = vcmask 490496
    %v3442 = vsel %vm3441, %v3440, %v3427
    %vm3443 = vcmask 654336
    %v3444 = vsel %vm3443, %v3442, %v3431
    %vm3445 = vcmask 818176
    %v3446 = vsel %vm3445, %v3444, %v3435
    %3447 = vrot.lane.b32.xlu0 %v3415, 108
    %v3448 = vpop.permute.xlu0 %3447
    %3451 = vrot.lane.b32.xlu0 %v3421, 20
    %v3452 = vpop.permute.xlu0 %3451
    %3454 = vrot.lane.b32.xlu0 %v3425, 40
    %v3455 = vpop.permute.xlu0 %3454
    %3457 = vrot.lane.b32.xlu0 %v3429, 60
    %v3458 = vpop.permute.xlu0 %3457
    %3460 = vrot.lane.b32.xlu0 %v3433, 80
    %v3461 = vpop.permute.xlu0 %3460
    %v3463 = vsel %vm3437, %v3448, %v3417
    %v3464 = vsel %vm3439, %v3463, %v3452
    %v3465 = vsel %vm3441, %v3464, %v3455
    %v3466 = vsel %vm3443, %v3465, %v3458
    %v3467 = vsel %vm3445, %v3466, %v3461
    %v3469 = vrot.slane %v3467, 7
    %v3471 = vsel %vm344, %v3446, %v3469
    %v3472 = vld [vmem:[%s5] sm:$0xff]
    %v3473 = vld [vmem:[%s5 + $0x8] sm:$0xff]
    %v3474 = vld [vmem:[%s5 + $0x10] sm:$0xff]
    %v3475 = vld [vmem:[%s5 + $0x18] sm:$0xff]
    %v3476 = vld [vmem:[%s5 + $0x20] sm:$0xff]
    %v3477 = vld [vmem:[%s5 + $0x28] sm:$0xff]
    %v3478 = vld [vmem:[%s5 + $0x30] sm:$0xff]
    %v3479 = vld [vmem:[%s5 + $0x38] sm:$0xff]
    %v3480 = vld [vmem:[%s5 + $0x40] sm:$0xff]
    %v3481 = vld [vmem:[%s5 + $0x48] sm:$0xff]
    %v3482 = vld [vmem:[%s5 + $0x50] sm:$0xff]
    %v3483 = vld [vmem:[%s5 + $0x58] sm:$0xff]
    %v3484 = vld [vmem:[%s5 + $0x60] sm:$0xff]
    %v3485 = vld [vmem:[%s5 + $0x68] sm:$0xff]
    %v3486 = vld [vmem:[%s5 + $0x70] sm:$0xff]
    %v3487 = vld [vmem:[%s6] sm:$0x1]
    %v3489 = vlaneseq
    %v3490 = vshrl.u32 %v3489, 7
    %v3491 = vsub.s32 0, %v3490
    %v3492 = vrot.slane %v3487, %v3491
    %vm3494 = vcmask 982016
    %v3496 = vsel %vm3494, %v3471, 0
    %3498 = vmatprep.subr.mxu0 0.0
    %3499 = vmatpush1.msra.mxu0 %v3472
    %3500 = vmatprep.subr.mxu0 0.0
    %3501 = vmatpush1.msra.mxu0 %v3473
    %3502 = vmatprep.subr.mxu0 0.0
    %3503 = vmatpush1.msra.mxu0 %v3474
    %3504 = vmatprep.subr.mxu0 0.0
    %3505 = vmatpush1.msra.mxu0 %v3475
    %3506 = vmatprep.subr.mxu0 0.0
    %3507 = vmatpush1.msra.mxu0 %v3476
    %3508 = vmatprep.subr.mxu0 0.0
    %3509 = vmatpush1.msra.mxu0 %v3477
    %3510 = vmatprep.subr.mxu0 0.0
    %3511 = vmatpush1.msra.mxu0 %v3478
    %3512 = vmatprep.subr.mxu0 0.0
    %3513 = vmatpush1.msra.mxu0 %v3479
    %3514 = vmatprep.subr.mxu0 0.0
    %3515 = vmatpush1.msra.mxu0 %v3480
    %3516 = vmatprep.subr.mxu0 0.0
    %3517 = vmatpush1.msra.mxu0 %v3481
    %3518 = vmatprep.subr.mxu0 0.0
    %3519 = vmatpush1.msra.mxu0 %v3482
    %3520 = vmatprep.subr.mxu0 0.0
    %3521 = vmatpush1.msra.mxu0 %v3483
    %3522 = vmatprep.subr.mxu0 0.0
    %3523 = vmatpush1.msra.mxu0 %v3484
    %3524 = vmatprep.subr.mxu0 0.0
    %3525 = vmatpush1.msra.mxu0 %v3485
    %3526 = vmatprep.subr.mxu0 0.0
    %3527 = vmatpush1.msra.mxu0 %v3486
    %3528 = vmatprep.subr.mxu0 0.0
    %3529 = vmatpush1.msra.mxu0 0.0
    %3530 = vmatprep.subr.mxu0 0.0
    %3531 = vmatpush1.msra.mxu0 0.0
    %3532 = vmatprep.subr.mxu0 0.0
    %3533 = vmatpush1.msra.mxu0 0.0
    %3534 = vmatprep.subr.mxu0 0.0
    %3535 = vmatpush1.msra.mxu0 0.0
    %3536 = vmatprep.subr.mxu0 0.0
    %3537 = vmatpush1.msra.mxu0 0.0
    %3538 = vmatprep.subr.mxu0 0.0
    %3539 = vmatpush1.msra.mxu0 0.0
    %3540 = vmatprep.subr.mxu0 0.0
    %3541 = vmatpush1.msra.mxu0 0.0
    %3542 = vmatprep.subr.mxu0 0.0
    %3543 = vmatpush1.msra.mxu0 0.0
    %3544 = vmatprep.subr.mxu0 0.0
    %3545 = vmatpush1.msra.mxu0 0.0
    %3546 = vmatprep.subr.mxu0 0.0
    %3547 = vmatpush1.msra.mxu0 0.0
    %3548 = vmatprep.subr.mxu0 0.0
    %3549 = vmatpush1.msra.mxu0 0.0
    %3550 = vmatprep.subr.mxu0 0.0
    %3551 = vmatpush1.msra.mxu0 0.0
    %3552 = vmatprep.subr.mxu0 0.0
    %3553 = vmatpush1.msra.mxu0 0.0
    %3554 = vmatprep.subr.mxu0 0.0
    %3555 = vmatpush1.msra.mxu0 0.0
    %3556 = vmatprep.subr.mxu0 0.0
    %3557 = vmatpush1.msra.mxu0 0.0
    %3558 = vmatprep.subr.mxu0 0.0
    %3559 = vmatpush1.msra.mxu0 0.0
    %3560 = vmatprep.subr.mxu0 0.0
    %3561 = vmatpush1.msra.mxu0 0.0
    %3562 = vmatprep.mubr.f32.mxu0 0.0
    %3563 = vmatmul.mubr.f32.gmra.mrb[0].mxu0 %v3496
    %v3564 = vpop.f32.mrb[0].mxu0
    %v3565 = vadd.f32 %v3492, %v3564
    %v3566 = vpop.f32.mrb[0].mxu0
    %3567 = vdwg.mxu0
    %v3568 = vmax.f32 %v3565, 0.0
    %v3569 = vld [vmem:[%s7] sm:$0xff]
    %v3570 = vld [vmem:[%s7 + $0x8] sm:$0xff]
    %v3571 = vld [vmem:[%s7 + $0x10] sm:$0xff]
    %v3572 = vld [vmem:[%s7 + $0x18] sm:$0xff]
    %v3573 = vld [vmem:[%s7 + $0x20] sm:$0xff]
    %v3574 = vld [vmem:[%s7 + $0x28] sm:$0xff]
    %v3575 = vld [vmem:[%s7 + $0x30] sm:$0xff]
    %v3576 = vld [vmem:[%s7 + $0x38] sm:$0xff]
    %v3577 = vld [vmem:[%s7 + $0x40] sm:$0xff]
    %v3578 = vld [vmem:[%s7 + $0x48] sm:$0xff]
    %v3579 = vld [vmem:[%s7 + $0x50] sm:$0xf]
    %v3580 = vld [vmem:[%s8] sm:$0x1]
    %v3582 = vlaneseq
    %v3583 = vshrl.u32 %v3582, 7
    %v3584 = vsub.s32 0, %v3583
    %v3585 = vrot.slane %v3580, %v3584
    %vm3587 = vcmask 687104
    %v3589 = vsel %vm3587, %v3568, 0
    %vm3591 = vcmask 1043456
    %v3593 = vsel %vm3591, %v3579, 0
    %3595 = vmatprep.subr.mxu0 0.0
    %3596 = vmatpush1.msra.mxu0 %v3569
    %3597 = vmatprep.subr.mxu0 0.0
    %3598 = vmatpush1.msra.mxu0 %v3570
    %3599 = vmatprep.subr.mxu0 0.0
    %3600 = vmatpush1.msra.mxu0 %v3571
    %3601 = vmatprep.subr.mxu0 0.0
    %3602 = vmatpush1.msra.mxu0 %v3572
    %3603 = vmatprep.subr.mxu0 0.0
    %3604 = vmatpush1.msra.mxu0 %v3573
    %3605 = vmatprep.subr.mxu0 0.0
    %3606 = vmatpush1.msra.mxu0 %v3574
    %3607 = vmatprep.subr.mxu0 0.0
    %3608 = vmatpush1.msra.mxu0 %v3575
    %3609 = vmatprep.subr.mxu0 0.0
    %3610 = vmatpush1.msra.mxu0 %v3576
    %3611 = vmatprep.subr.mxu0 0.0
    %3612 = vmatpush1.msra.mxu0 %v3577
    %3613 = vmatprep.subr.mxu0 0.0
    %3614 = vmatpush1.msra.mxu0 %v3578
    %3615 = vmatprep.subr.mxu0 0.0
    %3616 = vmatpush1.msra.mxu0 %v3593
    %3617 = vmatprep.subr.mxu0 0.0
    %3618 = vmatpush1.msra.mxu0 0.0
    %3619 = vmatprep.subr.mxu0 0.0
    %3620 = vmatpush1.msra.mxu0 0.0
    %3621 = vmatprep.subr.mxu0 0.0
    %3622 = vmatpush1.msra.mxu0 0.0
    %3623 = vmatprep.subr.mxu0 0.0
    %3624 = vmatpush1.msra.mxu0 0.0
    %3625 = vmatprep.subr.mxu0 0.0
    %3626 = vmatpush1.msra.mxu0 0.0
    %3627 = vmatprep.subr.mxu0 0.0
    %3628 = vmatpush1.msra.mxu0 0.0
    %3629 = vmatprep.subr.mxu0 0.0
    %3630 = vmatpush1.msra.mxu0 0.0
    %3631 = vmatprep.subr.mxu0 0.0
    %3632 = vmatpush1.msra.mxu0 0.0
    %3633 = vmatprep.subr.mxu0 0.0
    %3634 = vmatpush1.msra.mxu0 0.0
    %3635 = vmatprep.subr.mxu0 0.0
    %3636 = vmatpush1.msra.mxu0 0.0
    %3637 = vmatprep.subr.mxu0 0.0
    %3638 = vmatpush1.msra.mxu0 0.0
    %3639 = vmatprep.subr.mxu0 0.0
    %3640 = vmatpush1.msra.mxu0 0.0
    %3641 = vmatprep.subr.mxu0 0.0
    %3642 = vmatpush1.msra.mxu0 0.0
    %3643 = vmatprep.subr.mxu0 0.0
    %3644 = vmatpush1.msra.mxu0 0.0
    %3645 = vmatprep.subr.mxu0 0.0
    %3646 = vmatpush1.msra.mxu0 0.0
    %3647 = vmatprep.subr.mxu0 0.0
    %3648 = vmatpush1.msra.mxu0 0.0
    %3649 = vmatprep.subr.mxu0 0.0
    %3650 = vmatpush1.msra.mxu0 0.0
    %3651 = vmatprep.subr.mxu0 0.0
    %3652 = vmatpush1.msra.mxu0 0.0
    %3653 = vmatprep.subr.mxu0 0.0
    %3654 = vmatpush1.msra.mxu0 0.0
    %3655 = vmatprep.subr.mxu0 0.0
    %3656 = vmatpush1.msra.mxu0 0.0
    %3657 = vmatprep.subr.mxu0 0.0
    %3658 = vmatpush1.msra.mxu0 0.0
    %3659 = vmatprep.mubr.f32.mxu0 0.0
    %3660 = vmatmul.mubr.f32.gmra.mrb[0].mxu0 %v3589
    %v3661 = vpop.f32.mrb[0].mxu0
    %v3662 = vadd.f32 %v3585, %v3661
    %v3663 = vpop.f32.mrb[0].mxu0
    %3664 = vdwg.mxu0
    %vm3665 = vcmask 74752
    %v3666 = vsel %vm3665, %v3662, -inf
    %3667 = vmax.xlane.f32.xlu0 %v3666
    %v3668 = vpop.xlane.xlu0 %3667
    %v3669 = vsub.f32 %v3662, %v3668
    %v3670 = vmul.f32 %v3669, 1.442695
    %v3671 = vpow.pop %v3670
    %v3672 = vsel %vm3665, %v3671, 0.0
    %3673 = vadd.xlane.f32.xlu0 %v3672
    %v3674 = vpop.xlane.xlu0 %3673
    %v3675 = vlog2.pop %v3674
    %v3676 = vmul.f32 %v3675, 0.6931472
    %v3677 = vsub.f32 %v3669, %v3676
    %3678 = vst.msk [vmem:[#allocation2] sm:$0x3] %vm3665, %v3677
    // Predicated region
    $region38: #{letnet5_forward.1} parent=1 // pred_check
      _
    $region39: #{letnet5_forward.1} parent=1 // pred_check_branch
      %3680 = sbr.rel (0) target = $region41
    $region40: #{letnet5_forward.1} parent=1 // pred_region
      %s3682 = ssub.s32 32, 32
      %3683 = vsyncadd [#allocation3], %s3682
      %s3685 = sshll.u32 [#allocation2], 4
      %s3686 = int_to_ptr.vmem [resolvable:$true] %s3685
      %3688 = dma.vmem_to_hbm [thread:$0]  %s3686, 32, %s9, [#allocation3]
    $region41: #{letnet5_forward.1} parent=1 // pred_fallthru
      _
    // Predicated region
    $region42: #{letnet5_forward.1} parent=1 // pred_check
      _
    $region43: #{letnet5_forward.1} parent=1 // pred_check_branch
      %3690 = sbr.rel (0) target = $region45
    $region44: #{letnet5_forward.1} parent=1 // pred_region
      %3691 = dma.done [#allocation3], 32
    $region45: #{letnet5_forward.1} parent=1 // pred_fallthru
      _
    %3692 = vsyncpa [#allocation3], 1

</llo_original>
